<compile_context>
chip_gen: v5e
topology: v5e:2x2
jax: 0.10.0
libtpu: 0.0.40
codegen_flags: <defaults>
</compile_context>

<pallas_src>
import jax
import jax.numpy as jnp
from jax.experimental import pallas as pl
from jax.experimental.pallas import tpu as pltpu

D = 768  # hidden / feature size fixed by the module


def mlp_kernel(x_ref, w1_ref, b1_ref, w2_ref, b2_ref, o_ref):
    # x_ref: (tm, D) f32; w*_ref: (D, D) bf16; b*_ref: (1, D) f32; o_ref: (tm, D).
    x = x_ref[...].astype(jnp.bfloat16)           # in-kernel cast: single HBM pass on x
    # First matmul: bf16 x bf16 on the MXU, f32 accumulation; f32 bias + ReLU epilogue.
    h = jnp.dot(x, w1_ref[...], preferred_element_type=jnp.float32) + b1_ref[...]
    h = jnp.maximum(h, 0.0)                       # ReLU in f32
    # Second matmul: cast activations back to bf16 for the MXU, accumulate in f32.
    y = jnp.dot(h.astype(jnp.bfloat16), w2_ref[...],
                preferred_element_type=jnp.float32) + b2_ref[...]
    o_ref[...] = y.astype(o_ref.dtype)


def _pick_tm(B):
    if B < 256:
        # Round up to the bf16 sublane packing (16 rows) so the output tile is fully
        # packed and stores are unmasked.
        return max(16, ((B + 15) // 16) * 16)
    # Largest multiple of 128 that still leaves >= 2 grid steps (keeps both v7x
    # TensorCores fed via the "parallel" axis), capped at 1024 to amortize the
    # ~0.35 us per-grid-step overhead while staying well inside VMEM.
    tm = ((B // 2) // 128) * 128
    return max(128, min(tm, 1024))


def mlp_forward(x, w1, b1, w2, b2, *, tm=None, out_dtype=jnp.bfloat16):
    """x: (B, ...) flattened to (B, 768).  w1/w2: (768, 768) in (in, out) layout.

    Computes relu(x @ w1 + b1) @ w2 + b2 with bf16 MXU matmuls and f32 accumulation.
    Returns (B, 768) in `out_dtype` (default bf16 to halve the output HBM stream)."""
    B = x.shape[0]
    x2d = x.reshape(B, -1)
    assert x2d.shape[1] == D, f"expected flattened feature dim {D}, got {x2d.shape[1]}"

    # Resident weights in bf16 (half the HBM/VMEM bytes, full-rate MXU); f32 biases
    # (added post-accumulation, matching torch's f32 bias semantics).
    w1b = w1.astype(jnp.bfloat16)
    w2b = w2.astype(jnp.bfloat16)
    b1_2d = b1.reshape(1, D).astype(jnp.float32)
    b2_2d = b2.reshape(1, D).astype(jnp.float32)

    if tm is None:
        tm = _pick_tm(B)
    n_steps = pl.cdiv(B, tm)

    out_bytes = jnp.dtype(out_dtype).itemsize
    flops = 4 * B * D * D                          # two (B, D) x (D, D) matmuls
    bytes_accessed = (
        B * D * x2d.dtype.itemsize                 # x read once by the kernel
        + B * D * out_bytes                        # output stream
        + 2 * D * D * 2                            # W1 + W2 (bf16), resident: read once
        + 2 * D * 4                                # b1 + b2 (f32)
    )

    return pl.pallas_call(
        mlp_kernel,
        out_shape=jax.ShapeDtypeStruct((B, D), out_dtype),
        grid_spec=pltpu.PrefetchScalarGridSpec(
            num_scalar_prefetch=0,
            grid=(n_steps,),
            in_specs=[
                pl.BlockSpec((tm, D), lambda i: (i, 0)),              # x tile (f32)
                pl.BlockSpec((D, D), lambda i: (0, 0),
                             pipeline_mode=pl.Buffered(1)),           # W1 (bf16, resident)
                pl.BlockSpec((1, D), lambda i: (0, 0),
                             pipeline_mode=pl.Buffered(1)),           # b1 (f32)
                pl.BlockSpec((D, D), lambda i: (0, 0),
                             pipeline_mode=pl.Buffered(1)),           # W2 (bf16, resident)
                pl.BlockSpec((1, D), lambda i: (0, 0),
                             pipeline_mode=pl.Buffered(1)),           # b2 (f32)
            ],
            out_specs=pl.BlockSpec((tm, D), lambda i: (i, 0)),
        ),
        compiler_params=pltpu.CompilerParams(
            dimension_semantics=("parallel",),     # batch tiles independent -> v7x 2-TC
            vmem_limit_bytes=48 << 20,             # headroom under v7x's 64 MiB VMEM
        ),
        cost_estimate=pl.CostEstimate(
            flops=flops, transcendentals=0, bytes_accessed=bytes_accessed),
    )(x2d, w1b, b1_2d, w2b, b2_2d)


def init_params(key):
    """Deterministic init mimicking torch.nn.Linear default (U[-1/sqrt(in), 1/sqrt(in)]).
    Weights are stored already transposed to (in, out)."""
    k1, k2, k3, k4 = jax.random.split(key, 4)
    bound = 1.0 / jnp.sqrt(jnp.float32(D))
    w1 = jax.random.uniform(k1, (D, D), jnp.float32, -bound, bound)  # (in, out)
    b1 = jax.random.uniform(k2, (D,), jnp.float32, -bound, bound)
    w2 = jax.random.uniform(k3, (D, D), jnp.float32, -bound, bound)  # (in, out)
    b2 = jax.random.uniform(k4, (D,), jnp.float32, -bound, bound)
    return w1, b1, w2, b2


if __name__ == "__main__":
    key = jax.random.PRNGKey(0)
    kx, kp = jax.random.split(key)

    # x.view(x.size(0), -1) must flatten to 768 features: 3*16*16 == 768.
    B = 16
    x = jax.random.normal(kx, (B, 3, 16, 16), jnp.float32)
    w1, b1, w2, b2 = init_params(kp)

    out = mlp_forward(x, w1, b1, w2, b2)
    out = jax.block_until_ready(out)
    assert out.shape == (B, D)
    assert out.dtype == jnp.bfloat16

    # Pure-JAX reference mirroring the bf16 quantization of x / W / h and the f32
    # accumulation + f32 bias (documents the tolerance vs a pure-f32 torch MLP).
    x2d = x.reshape(B, -1)
    xq = x2d.astype(jnp.bfloat16).astype(jnp.float32)
    w1q = w1.astype(jnp.bfloat16).astype(jnp.float32)
    w2q = w2.astype(jnp.bfloat16).astype(jnp.float32)
    h = jnp.maximum(xq @ w1q + b1, 0.0)
    h = h.astype(jnp.bfloat16).astype(jnp.float32)
    ref = (h @ w2q + b2).astype(jnp.bfloat16).astype(jnp.float32)

    assert jnp.allclose(out.astype(jnp.float32), ref, atol=2e-2, rtol=2e-2), \
        "mismatch vs reference"

    print("KERNEL_OK")
</pallas_src>

<mosaic_0001>
module attributes {stable_mosaic.version = 11 : i64} {
  func.func @mlp_kernel(%arg0: i32, %arg1: memref<16x768xf32, #tpu.memory_space<vmem>>, %arg2: memref<768x768xbf16, #tpu.memory_space<vmem>>, %arg3: memref<1x768xf32, #tpu.memory_space<vmem>>, %arg4: memref<768x768xbf16, #tpu.memory_space<vmem>>, %arg5: memref<1x768xf32, #tpu.memory_space<vmem>>, %arg6: memref<16x768xbf16, #tpu.memory_space<vmem>>) attributes {dimension_semantics = [#tpu.dimension_semantics<parallel>], iteration_bounds = array<i64: 1>, scalar_prefetch = 0 : i64, scratch_operands = 0 : i64, tpu.core_type = #tpu.core_type<tc>, window_params = [{transform_indices = @transform_0, window_bounds = array<i64: 16, 768>}, {pipeline_mode = #tpu.pipeline_mode<synchronous>, transform_indices = @transform_1, window_bounds = array<i64: 768, 768>}, {pipeline_mode = #tpu.pipeline_mode<synchronous>, transform_indices = @transform_2, window_bounds = array<i64: 1, 768>}, {pipeline_mode = #tpu.pipeline_mode<synchronous>, transform_indices = @transform_3, window_bounds = array<i64: 768, 768>}, {pipeline_mode = #tpu.pipeline_mode<synchronous>, transform_indices = @transform_4, window_bounds = array<i64: 1, 768>}, {transform_indices = @transform_5, window_bounds = array<i64: 16, 768>}]} {
    %c0 = arith.constant 0 : index
    %c0_0 = arith.constant 0 : index
    %0 = vector.load %arg1[%c0, %c0_0] : memref<16x768xf32, #tpu.memory_space<vmem>>, vector<16x768xf32>
    %1 = arith.truncf %0 : vector<16x768xf32> to vector<16x768xbf16>
    %c0_1 = arith.constant 0 : index
    %c0_2 = arith.constant 0 : index
    %2 = vector.load %arg2[%c0_1, %c0_2] : memref<768x768xbf16, #tpu.memory_space<vmem>>, vector<768x768xbf16>
    %cst = arith.constant dense<0.000000e+00> : vector<16x768xf32>
    %3 = tpu.matmul %1, %2, %cst {dimension_numbers = #tpu.dot_dimension_numbers<[1], [0], [0], [1], [0, 0, 1, 1], [], []>} : vector<16x768xbf16>, vector<768x768xbf16>, vector<16x768xf32> -> vector<16x768xf32>
    %c0_3 = arith.constant 0 : index
    %c0_4 = arith.constant 0 : index
    %4 = vector.load %arg3[%c0_3, %c0_4] : memref<1x768xf32, #tpu.memory_space<vmem>>, vector<1x768xf32>
    %5 = vector.broadcast %4 : vector<1x768xf32> to vector<16x768xf32>
    %6 = arith.addf %3, %5 : vector<16x768xf32>
    %cst_5 = arith.constant 0.000000e+00 : f32
    %7 = vector.broadcast %cst_5 : f32 to vector<16x768xf32>
    %8 = arith.maximumf %6, %7 : vector<16x768xf32>
    %9 = arith.truncf %8 : vector<16x768xf32> to vector<16x768xbf16>
    %c0_6 = arith.constant 0 : index
    %c0_7 = arith.constant 0 : index
    %10 = vector.load %arg4[%c0_6, %c0_7] : memref<768x768xbf16, #tpu.memory_space<vmem>>, vector<768x768xbf16>
    %cst_8 = arith.constant dense<0.000000e+00> : vector<16x768xf32>
    %11 = tpu.matmul %9, %10, %cst_8 {dimension_numbers = #tpu.dot_dimension_numbers<[1], [0], [0], [1], [0, 0, 1, 1], [], []>} : vector<16x768xbf16>, vector<768x768xbf16>, vector<16x768xf32> -> vector<16x768xf32>
    %c0_9 = arith.constant 0 : index
    %c0_10 = arith.constant 0 : index
    %12 = vector.load %arg5[%c0_9, %c0_10] : memref<1x768xf32, #tpu.memory_space<vmem>>, vector<1x768xf32>
    %13 = vector.broadcast %12 : vector<1x768xf32> to vector<16x768xf32>
    %14 = arith.addf %11, %13 : vector<16x768xf32>
    %15 = arith.truncf %14 : vector<16x768xf32> to vector<16x768xbf16>
    %c0_11 = arith.constant 0 : index
    %c0_12 = arith.constant 0 : index
    %16 = vector.load %arg6[%c0_11, %c0_12] : memref<16x768xbf16, #tpu.memory_space<vmem>>, vector<16x768xbf16>
    tpu.vector_store %arg6[%c0_11, %c0_12], %15 {strides = array<i32>} : memref<16x768xbf16, #tpu.memory_space<vmem>>, vector<16x768xbf16>,
    return
  }
  func.func @transform_0(%arg0: i32) -> (i32, i32) {
    %c0_i32 = arith.constant 0 : i32
    %c0_i32_0 = arith.constant 0 : i32
    return %arg0, %c0_i32 : i32, i32
  }
  func.func @transform_1(%arg0: i32) -> (i32, i32) {
    %c0_i32 = arith.constant 0 : i32
    %c0_i32_0 = arith.constant 0 : i32
    %c0_i32_1 = arith.constant 0 : i32
    return %c0_i32, %c0_i32_0 : i32, i32
  }
  func.func @transform_2(%arg0: i32) -> (i32, i32) {
    %c0_i32 = arith.constant 0 : i32
    %c0_i32_0 = arith.constant 0 : i32
    %c0_i32_1 = arith.constant 0 : i32
    return %c0_i32, %c0_i32_0 : i32, i32
  }
  func.func @transform_3(%arg0: i32) -> (i32, i32) {
    %c0_i32 = arith.constant 0 : i32
    %c0_i32_0 = arith.constant 0 : i32
    %c0_i32_1 = arith.constant 0 : i32
    return %c0_i32, %c0_i32_0 : i32, i32
  }
  func.func @transform_4(%arg0: i32) -> (i32, i32) {
    %c0_i32 = arith.constant 0 : i32
    %c0_i32_0 = arith.constant 0 : i32
    %c0_i32_1 = arith.constant 0 : i32
    return %c0_i32, %c0_i32_0 : i32, i32
  }
  func.func @transform_5(%arg0: i32) -> (i32, i32) {
    %c0_i32 = arith.constant 0 : i32
    %c0_i32_0 = arith.constant 0 : i32
    return %arg0, %c0_i32 : i32, i32
  }
}

</mosaic_0001>

<llo_original>
// kernel: tpu_custom_call.1
$region0: #{tpu_custom_call.1}
  #allocation0 [shape = 'u32[]', space=smem, size = 0x4, offset = 0x4, fixed_abs, tag = 'smem constant byte address 0x4 - core index']
  #allocation1 [shape = 'u32[72,128]{1,0:T(1,128)}', space=vmem, size = 0x9000, scoped, tag = 'internal scratch']
  %s0 = inlined_call_operand.hbm [shape: f32[16,768], index: 0, kind: input, shape index: {}]
  %s1 = inlined_call_operand.hbm [shape: bf16[768,768], index: 1, kind: input, shape index: {}]
  %s2 = inlined_call_operand.hbm [shape: f32[1,768], index: 2, kind: input, shape index: {}]
  %s3 = inlined_call_operand.hbm [shape: bf16[768,768], index: 3, kind: input, shape index: {}]
  %s4 = inlined_call_operand.hbm [shape: f32[1,768], index: 4, kind: input, shape index: {}]
  %s5 = inlined_call_operand.hbm [shape: bf16[16,768], index: 5, kind: output, shape index: {}]
  %s6 = sld [smem:[#allocation0]]
  $region50: #{tpu_custom_call.1} parent=0
    _
  %s8 = ssub.s32 1, %s6
  %s9 = scalar_select 0, %s8, %s6
  $region1: #{tpu_custom_call.1} parent=0
    #allocation2 [shape = 'u8[49152]{0}', space=vmem, size = 0xc000, scoped, tag = 'input window, operand 0, single buffered']
    #allocation3 [shape = 's32[1]{0}', space=sflag, size = 0x4, scoped, tag = 'scoped memory for tpu_custom_call.1']
    #allocation4 [shape = 's32[1]{0}', space=sflag, size = 0x4, scoped, tag = 'scoped memory for tpu_custom_call.1']
    #allocation5 [shape = 'u8[1179648]{0}', space=vmem, size = 0x120000, scoped, tag = 'input window, operand 1, single buffered']
    #allocation6 [shape = 's32[1]{0}', space=sflag, size = 0x4, scoped, tag = 'scoped memory for tpu_custom_call.1']
    #allocation7 [shape = 'u8[3072]{0}', space=vmem, size = 0xc00, scoped, tag = 'input window, operand 2, single buffered']
    #allocation8 [shape = 'u8[1179648]{0}', space=vmem, size = 0x120000, scoped, tag = 'input window, operand 3, single buffered']
    #allocation9 [shape = 's32[1]{0}', space=sflag, size = 0x4, scoped, tag = 'scoped memory for tpu_custom_call.1']
    #allocation10 [shape = 'u8[3072]{0}', space=vmem, size = 0xc00, scoped, tag = 'input window, operand 4, single buffered']
    #allocation11 [shape = 'u8[24576]{0}', space=vmem, size = 0x6000, scoped, tag = 'output window, operand 0, single buffered']
    %10 = vsyncpa [#allocation3], 0
    %11 = vsyncpa [#allocation6], 0
    %12 = vsyncpa [#allocation9], 0
    %13 = vsyncpa [#allocation4], 0
    // Predicated region
    $region2: #{tpu_custom_call.1} parent=1 // pred_check
      _
    $region3: #{tpu_custom_call.1} parent=1 // pred_check_branch
      %15 = sbr.rel (0) target = $region5
    $region4: #{tpu_custom_call.1} parent=1 // pred_region
      %17 = vsyncadd [#allocation3], 0
      %s18 = sshll.u32 %s0, 4
      %s19 = int_to_ptr.hbm [resolvable:$true] %s18
      %s20 = sshll.u32 [#allocation2], 4
      %s21 = int_to_ptr.vmem [resolvable:$true] %s20
      %26 = dma.hbm_to_vmem [thread:$0]  %s19, 1536, %s21, [#allocation3], 768, 768, 48
    $region5: #{tpu_custom_call.1} parent=1 // pred_fallthru
      _
    // Predicated region
    $region6: #{tpu_custom_call.1} parent=1 // pred_check
      _
    $region7: #{tpu_custom_call.1} parent=1 // pred_check_branch
      %28 = sbr.rel (0) target = $region9
    $region8: #{tpu_custom_call.1} parent=1 // pred_region
      %30 = vsyncadd [#allocation6], 0
      %s31 = sshll.u32 %s1, 4
      %s32 = int_to_ptr.hbm [resolvable:$true] %s31
      %s33 = sshll.u32 [#allocation5], 4
      %s34 = int_to_ptr.vmem [resolvable:$true] %s33
      %39 = dma.hbm_to_vmem [thread:$0]  %s32, 36864, %s34, [#allocation6], 384, 384, 24
    $region9: #{tpu_custom_call.1} parent=1 // pred_fallthru
      _
    // Predicated region
    $region10: #{tpu_custom_call.1} parent=1 // pred_check
      _
    $region11: #{tpu_custom_call.1} parent=1 // pred_check_branch
      %41 = sbr.rel (0) target = $region13
    $region12: #{tpu_custom_call.1} parent=1 // pred_region
      %43 = vsyncadd [#allocation6], 0
      %s45 = sshll.u32 %s2, 4
      %s46 = int_to_ptr.hbm [resolvable:$true] %s45
      %s47 = sshll.u32 [#allocation7], 4
      %s48 = int_to_ptr.vmem [resolvable:$true] %s47
      %50 = dma.hbm_to_vmem [thread:$0]  %s46, 96, %s48, [#allocation6]
    $region13: #{tpu_custom_call.1} parent=1 // pred_fallthru
      _
    // Predicated region
    $region14: #{tpu_custom_call.1} parent=1 // pred_check
      _
    $region15: #{tpu_custom_call.1} parent=1 // pred_check_branch
      %52 = sbr.rel (0) target = $region17
    $region16: #{tpu_custom_call.1} parent=1 // pred_region
      %54 = vsyncadd [#allocation9], 0
      %s55 = sshll.u32 %s3, 4
      %s56 = int_to_ptr.hbm [resolvable:$true] %s55
      %s57 = sshll.u32 [#allocation8], 4
      %s58 = int_to_ptr.vmem [resolvable:$true] %s57
      %63 = dma.hbm_to_vmem [thread:$0]  %s56, 36864, %s58, [#allocation9], 384, 384, 24
    $region17: #{tpu_custom_call.1} parent=1 // pred_fallthru
      _
    // Predicated region
    $region18: #{tpu_custom_call.1} parent=1 // pred_check
      _
    $region19: #{tpu_custom_call.1} parent=1 // pred_check_branch
      %65 = sbr.rel (0) target = $region21
    $region20: #{tpu_custom_call.1} parent=1 // pred_region
      %67 = vsyncadd [#allocation9], 0
      %s69 = sshll.u32 %s4, 4
      %s70 = int_to_ptr.hbm [resolvable:$true] %s69
      %s71 = sshll.u32 [#allocation10], 4
      %s72 = int_to_ptr.vmem [resolvable:$true] %s71
      %74 = dma.hbm_to_vmem [thread:$0]  %s70, 96, %s72, [#allocation9]
    $region21: #{tpu_custom_call.1} parent=1 // pred_fallthru
      _
    // Predicated region
    $region22: #{tpu_custom_call.1} parent=1 // pred_check
      _
    $region23: #{tpu_custom_call.1} parent=1 // pred_check_branch
      %76 = sbr.rel (0) target = $region25
    $region24: #{tpu_custom_call.1} parent=1 // pred_region
      %78 = dma.done [#allocation3], 1536
    $region25: #{tpu_custom_call.1} parent=1 // pred_fallthru
      _
    // Predicated region
    $region26: #{tpu_custom_call.1} parent=1 // pred_check
      _
    $region27: #{tpu_custom_call.1} parent=1 // pred_check_branch
      %80 = sbr.rel (0) target = $region29
    $region28: #{tpu_custom_call.1} parent=1 // pred_region
      %82 = dma.done [#allocation6], 36864
    $region29: #{tpu_custom_call.1} parent=1 // pred_fallthru
      _
    // Predicated region
    $region30: #{tpu_custom_call.1} parent=1 // pred_check
      _
    $region31: #{tpu_custom_call.1} parent=1 // pred_check_branch
      %84 = sbr.rel (0) target = $region33
    $region32: #{tpu_custom_call.1} parent=1 // pred_region
      %86 = dma.done [#allocation6], 96
    $region33: #{tpu_custom_call.1} parent=1 // pred_fallthru
      _
    // Predicated region
    $region34: #{tpu_custom_call.1} parent=1 // pred_check
      _
    $region35: #{tpu_custom_call.1} parent=1 // pred_check_branch
      %88 = sbr.rel (0) target = $region37
    $region36: #{tpu_custom_call.1} parent=1 // pred_region
      %90 = dma.done [#allocation9], 36864
    $region37: #{tpu_custom_call.1} parent=1 // pred_fallthru
      _
    // Predicated region
    $region38: #{tpu_custom_call.1} parent=1 // pred_check
      _
    $region39: #{tpu_custom_call.1} parent=1 // pred_check_branch
      %92 = sbr.rel (0) target = $region41
    $region40: #{tpu_custom_call.1} parent=1 // pred_region
      %94 = dma.done [#allocation9], 96
    $region41: #{tpu_custom_call.1} parent=1 // pred_fallthru
      _
    %v95 = vld [vmem:[#allocation2] sm:$0xff]
    %v96 = vld [vmem:[#allocation2 + $0x8] sm:$0xff]
    %v97 = vld [vmem:[#allocation2 + $0x10] sm:$0xff]
    %v98 = vld [vmem:[#allocation2 + $0x18] sm:$0xff]
    %v99 = vld [vmem:[#allocation2 + $0x20] sm:$0xff]
    %v100 = vld [vmem:[#allocation2 + $0x28] sm:$0xff]
    %v101 = vld [vmem:[#allocation2 + $0x30] sm:$0xff]
    %v102 = vld [vmem:[#allocation2 + $0x38] sm:$0xff]
    %v103 = vld [vmem:[#allocation2 + $0x40] sm:$0xff]
    %v104 = vld [vmem:[#allocation2 + $0x48] sm:$0xff]
    %v105 = vld [vmem:[#allocation2 + $0x50] sm:$0xff]
    %v106 = vld [vmem:[#allocation2 + $0x58] sm:$0xff]
    %v107 = vpack.c.bf16 %v101, %v95
    %v108 = vpack.c.bf16 %v102, %v96
    %v109 = vpack.c.bf16 %v103, %v97
    %v110 = vpack.c.bf16 %v104, %v98
    %v111 = vpack.c.bf16 %v105, %v99
    %v112 = vpack.c.bf16 %v106, %v100
    %v113 = vld [vmem:[#allocation5] sm:$0xff]
    %v114 = vld [vmem:[#allocation5 + $0x8] sm:$0xff]
    %v115 = vld [vmem:[#allocation5 + $0x10] sm:$0xff]
    %v116 = vld [vmem:[#allocation5 + $0x18] sm:$0xff]
    %v117 = vld [vmem:[#allocation5 + $0x20] sm:$0xff]
    %v118 = vld [vmem:[#allocation5 + $0x28] sm:$0xff]
    %v119 = vld [vmem:[#allocation5 + $0x30] sm:$0xff]
    %v120 = vld [vmem:[#allocation5 + $0x38] sm:$0xff]
    %v121 = vld [vmem:[#allocation5 + $0x40] sm:$0xff]
    %v122 = vld [vmem:[#allocation5 + $0x48] sm:$0xff]
    %v123 = vld [vmem:[#allocation5 + $0x50] sm:$0xff]
    %v124 = vld [vmem:[#allocation5 + $0x58] sm:$0xff]
    %v125 = vld [vmem:[#allocation5 + $0x60] sm:$0xff]
    %v126 = vld [vmem:[#allocation5 + $0x68] sm:$0xff]
    %v127 = vld [vmem:[#allocation5 + $0x70] sm:$0xff]
    %v128 = vld [vmem:[#allocation5 + $0x78] sm:$0xff]
    %v129 = vld [vmem:[#allocation5 + $0x80] sm:$0xff]
    %v130 = vld [vmem:[#allocation5 + $0x88] sm:$0xff]
    %v131 = vld [vmem:[#allocation5 + $0x90] sm:$0xff]
    %v132 = vld [vmem:[#allocation5 + $0x98] sm:$0xff]
    %v133 = vld [vmem:[#allocation5 + $0xa0] sm:$0xff]
    %v134 = vld [vmem:[#allocation5 + $0xa8] sm:$0xff]
    %v135 = vld [vmem:[#allocation5 + $0xb0] sm:$0xff]
    %v136 = vld [vmem:[#allocation5 + $0xb8] sm:$0xff]
    %v137 = vld [vmem:[#allocation5 + $0xc0] sm:$0xff]
    %v138 = vld [vmem:[#allocation5 + $0xc8] sm:$0xff]
    %v139 = vld [vmem:[#allocation5 + $0xd0] sm:$0xff]
    %v140 = vld [vmem:[#allocation5 + $0xd8] sm:$0xff]
    %v141 = vld [vmem:[#allocation5 + $0xe0] sm:$0xff]
    %v142 = vld [vmem:[#allocation5 + $0xe8] sm:$0xff]
    %v143 = vld [vmem:[#allocation5 + $0xf0] sm:$0xff]
    %v144 = vld [vmem:[#allocation5 + $0xf8] sm:$0xff]
    %v145 = vld [vmem:[#allocation5 + $0x100] sm:$0xff]
    %v146 = vld [vmem:[#allocation5 + $0x108] sm:$0xff]
    %v147 = vld [vmem:[#allocation5 + $0x110] sm:$0xff]
    %v148 = vld [vmem:[#allocation5 + $0x118] sm:$0xff]
    %v149 = vld [vmem:[#allocation5 + $0x120] sm:$0xff]
    %v150 = vld [vmem:[#allocation5 + $0x128] sm:$0xff]
    %v151 = vld [vmem:[#allocation5 + $0x130] sm:$0xff]
    %v152 = vld [vmem:[#allocation5 + $0x138] sm:$0xff]
    %v153 = vld [vmem:[#allocation5 + $0x140] sm:$0xff]
    %v154 = vld [vmem:[#allocation5 + $0x148] sm:$0xff]
    %v155 = vld [vmem:[#allocation5 + $0x150] sm:$0xff]
    %v156 = vld [vmem:[#allocation5 + $0x158] sm:$0xff]
    %v157 = vld [vmem:[#allocation5 + $0x160] sm:$0xff]
    %v158 = vld [vmem:[#allocation5 + $0x168] sm:$0xff]
    %v159 = vld [vmem:[#allocation5 + $0x170] sm:$0xff]
    %v160 = vld [vmem:[#allocation5 + $0x178] sm:$0xff]
    %v161 = vld [vmem:[#allocation5 + $0x180] sm:$0xff]
    %v162 = vld [vmem:[#allocation5 + $0x188] sm:$0xff]
    %v163 = vld [vmem:[#allocation5 + $0x190] sm:$0xff]
    %v164 = vld [vmem:[#allocation5 + $0x198] sm:$0xff]
    %v165 = vld [vmem:[#allocation5 + $0x1a0] sm:$0xff]
    %v166 = vld [vmem:[#allocation5 + $0x1a8] sm:$0xff]
    %v167 = vld [vmem:[#allocation5 + $0x1b0] sm:$0xff]
    %v168 = vld [vmem:[#allocation5 + $0x1b8] sm:$0xff]
    %v169 = vld [vmem:[#allocation5 + $0x1c0] sm:$0xff]
    %v170 = vld [vmem:[#allocation5 + $0x1c8] sm:$0xff]
    %v171 = vld [vmem:[#allocation5 + $0x1d0] sm:$0xff]
    %v172 = vld [vmem:[#allocation5 + $0x1d8] sm:$0xff]
    %v173 = vld [vmem:[#allocation5 + $0x1e0] sm:$0xff]
    %v174 = vld [vmem:[#allocation5 + $0x1e8] sm:$0xff]
    %v175 = vld [vmem:[#allocation5 + $0x1f0] sm:$0xff]
    %v176 = vld [vmem:[#allocation5 + $0x1f8] sm:$0xff]
    %v177 = vld [vmem:[#allocation5 + $0x200] sm:$0xff]
    %v178 = vld [vmem:[#allocation5 + $0x208] sm:$0xff]
    %v179 = vld [vmem:[#allocation5 + $0x210] sm:$0xff]
    %v180 = vld [vmem:[#allocation5 + $0x218] sm:$0xff]
    %v181 = vld [vmem:[#allocation5 + $0x220] sm:$0xff]
    %v182 = vld [vmem:[#allocation5 + $0x228] sm:$0xff]
    %v183 = vld [vmem:[#allocation5 + $0x230] sm:$0xff]
    %v184 = vld [vmem:[#allocation5 + $0x238] sm:$0xff]
    %v185 = vld [vmem:[#allocation5 + $0x240] sm:$0xff]
    %v186 = vld [vmem:[#allocation5 + $0x248] sm:$0xff]
    %v187 = vld [vmem:[#allocation5 + $0x250] sm:$0xff]
    %v188 = vld [vmem:[#allocation5 + $0x258] sm:$0xff]
    %v189 = vld [vmem:[#allocation5 + $0x260] sm:$0xff]
    %v190 = vld [vmem:[#allocation5 + $0x268] sm:$0xff]
    %v191 = vld [vmem:[#allocation5 + $0x270] sm:$0xff]
    %v192 = vld [vmem:[#allocation5 + $0x278] sm:$0xff]
    %v193 = vld [vmem:[#allocation5 + $0x280] sm:$0xff]
    %v194 = vld [vmem:[#allocation5 + $0x288] sm:$0xff]
    %v195 = vld [vmem:[#allocation5 + $0x290] sm:$0xff]
    %v196 = vld [vmem:[#allocation5 + $0x298] sm:$0xff]
    %v197 = vld [vmem:[#allocation5 + $0x2a0] sm:$0xff]
    %v198 = vld [vmem:[#allocation5 + $0x2a8] sm:$0xff]
    %v199 = vld [vmem:[#allocation5 + $0x2b0] sm:$0xff]
    %v200 = vld [vmem:[#allocation5 + $0x2b8] sm:$0xff]
    %v201 = vld [vmem:[#allocation5 + $0x2c0] sm:$0xff]
    %v202 = vld [vmem:[#allocation5 + $0x2c8] sm:$0xff]
    %v203 = vld [vmem:[#allocation5 + $0x2d0] sm:$0xff]
    %v204 = vld [vmem:[#allocation5 + $0x2d8] sm:$0xff]
    %v205 = vld [vmem:[#allocation5 + $0x2e0] sm:$0xff]
    %v206 = vld [vmem:[#allocation5 + $0x2e8] sm:$0xff]
    %v207 = vld [vmem:[#allocation5 + $0x2f0] sm:$0xff]
    %v208 = vld [vmem:[#allocation5 + $0x2f8] sm:$0xff]
    %v209 = vld [vmem:[#allocation5 + $0x300] sm:$0xff]
    %v210 = vld [vmem:[#allocation5 + $0x308] sm:$0xff]
    %v211 = vld [vmem:[#allocation5 + $0x310] sm:$0xff]
    %v212 = vld [vmem:[#allocation5 + $0x318] sm:$0xff]
    %v213 = vld [vmem:[#allocation5 + $0x320] sm:$0xff]
    %v214 = vld [vmem:[#allocation5 + $0x328] sm:$0xff]
    %v215 = vld [vmem:[#allocation5 + $0x330] sm:$0xff]
    %v216 = vld [vmem:[#allocation5 + $0x338] sm:$0xff]
    %v217 = vld [vmem:[#allocation5 + $0x340] sm:$0xff]
    %v218 = vld [vmem:[#allocation5 + $0x348] sm:$0xff]
    %v219 = vld [vmem:[#allocation5 + $0x350] sm:$0xff]
    %v220 = vld [vmem:[#allocation5 + $0x358] sm:$0xff]
    %v221 = vld [vmem:[#allocation5 + $0x360] sm:$0xff]
    %v222 = vld [vmem:[#allocation5 + $0x368] sm:$0xff]
    %v223 = vld [vmem:[#allocation5 + $0x370] sm:$0xff]
    %v224 = vld [vmem:[#allocation5 + $0x378] sm:$0xff]
    %v225 = vld [vmem:[#allocation5 + $0x380] sm:$0xff]
    %v226 = vld [vmem:[#allocation5 + $0x388] sm:$0xff]
    %v227 = vld [vmem:[#allocation5 + $0x390] sm:$0xff]
    %v228 = vld [vmem:[#allocation5 + $0x398] sm:$0xff]
    %v229 = vld [vmem:[#allocation5 + $0x3a0] sm:$0xff]
    %v230 = vld [vmem:[#allocation5 + $0x3a8] sm:$0xff]
    %v231 = vld [vmem:[#allocation5 + $0x3b0] sm:$0xff]
    %v232 = vld [vmem:[#allocation5 + $0x3b8] sm:$0xff]
    %v233 = vld [vmem:[#allocation5 + $0x3c0] sm:$0xff]
    %v234 = vld [vmem:[#allocation5 + $0x3c8] sm:$0xff]
    %v235 = vld [vmem:[#allocation5 + $0x3d0] sm:$0xff]
    %v236 = vld [vmem:[#allocation5 + $0x3d8] sm:$0xff]
    %v237 = vld [vmem:[#allocation5 + $0x3e0] sm:$0xff]
    %v238 = vld [vmem:[#allocation5 + $0x3e8] sm:$0xff]
    %v239 = vld [vmem:[#allocation5 + $0x3f0] sm:$0xff]
    %v240 = vld [vmem:[#allocation5 + $0x3f8] sm:$0xff]
    %v241 = vld [vmem:[#allocation5 + $0x400] sm:$0xff]
    %v242 = vld [vmem:[#allocation5 + $0x408] sm:$0xff]
    %v243 = vld [vmem:[#allocation5 + $0x410] sm:$0xff]
    %v244 = vld [vmem:[#allocation5 + $0x418] sm:$0xff]
    %v245 = vld [vmem:[#allocation5 + $0x420] sm:$0xff]
    %v246 = vld [vmem:[#allocation5 + $0x428] sm:$0xff]
    %v247 = vld [vmem:[#allocation5 + $0x430] sm:$0xff]
    %v248 = vld [vmem:[#allocation5 + $0x438] sm:$0xff]
    %v249 = vld [vmem:[#allocation5 + $0x440] sm:$0xff]
    %v250 = vld [vmem:[#allocation5 + $0x448] sm:$0xff]
    %v251 = vld [vmem:[#allocation5 + $0x450] sm:$0xff]
    %v252 = vld [vmem:[#allocation5 + $0x458] sm:$0xff]
    %v253 = vld [vmem:[#allocation5 + $0x460] sm:$0xff]
    %v254 = vld [vmem:[#allocation5 + $0x468] sm:$0xff]
    %v255 = vld [vmem:[#allocation5 + $0x470] sm:$0xff]
    %v256 = vld [vmem:[#allocation5 + $0x478] sm:$0xff]
    %v257 = vld [vmem:[#allocation5 + $0x480] sm:$0xff]
    %v258 = vld [vmem:[#allocation5 + $0x488] sm:$0xff]
    %v259 = vld [vmem:[#allocation5 + $0x490] sm:$0xff]
    %v260 = vld [vmem:[#allocation5 + $0x498] sm:$0xff]
    %v261 = vld [vmem:[#allocation5 + $0x4a0] sm:$0xff]
    %v262 = vld [vmem:[#allocation5 + $0x4a8] sm:$0xff]
    %v263 = vld [vmem:[#allocation5 + $0x4b0] sm:$0xff]
    %v264 = vld [vmem:[#allocation5 + $0x4b8] sm:$0xff]
    %v265 = vld [vmem:[#allocation5 + $0x4c0] sm:$0xff]
    %v266 = vld [vmem:[#allocation5 + $0x4c8] sm:$0xff]
    %v267 = vld [vmem:[#allocation5 + $0x4d0] sm:$0xff]
    %v268 = vld [vmem:[#allocation5 + $0x4d8] sm:$0xff]
    %v269 = vld [vmem:[#allocation5 + $0x4e0] sm:$0xff]
    %v270 = vld [vmem:[#allocation5 + $0x4e8] sm:$0xff]
    %v271 = vld [vmem:[#allocation5 + $0x4f0] sm:$0xff]
    %v272 = vld [vmem:[#allocation5 + $0x4f8] sm:$0xff]
    %v273 = vld [vmem:[#allocation5 + $0x500] sm:$0xff]
    %v274 = vld [vmem:[#allocation5 + $0x508] sm:$0xff]
    %v275 = vld [vmem:[#allocation5 + $0x510] sm:$0xff]
    %v276 = vld [vmem:[#allocation5 + $0x518] sm:$0xff]
    %v277 = vld [vmem:[#allocation5 + $0x520] sm:$0xff]
    %v278 = vld [vmem:[#allocation5 + $0x528] sm:$0xff]
    %v279 = vld [vmem:[#allocation5 + $0x530] sm:$0xff]
    %v280 = vld [vmem:[#allocation5 + $0x538] sm:$0xff]
    %v281 = vld [vmem:[#allocation5 + $0x540] sm:$0xff]
    %v282 = vld [vmem:[#allocation5 + $0x548] sm:$0xff]
    %v283 = vld [vmem:[#allocation5 + $0x550] sm:$0xff]
    %v284 = vld [vmem:[#allocation5 + $0x558] sm:$0xff]
    %v285 = vld [vmem:[#allocation5 + $0x560] sm:$0xff]
    %v286 = vld [vmem:[#allocation5 + $0x568] sm:$0xff]
    %v287 = vld [vmem:[#allocation5 + $0x570] sm:$0xff]
    %v288 = vld [vmem:[#allocation5 + $0x578] sm:$0xff]
    %v289 = vld [vmem:[#allocation5 + $0x580] sm:$0xff]
    %v290 = vld [vmem:[#allocation5 + $0x588] sm:$0xff]
    %v291 = vld [vmem:[#allocation5 + $0x590] sm:$0xff]
    %v292 = vld [vmem:[#allocation5 + $0x598] sm:$0xff]
    %v293 = vld [vmem:[#allocation5 + $0x5a0] sm:$0xff]
    %v294 = vld [vmem:[#allocation5 + $0x5a8] sm:$0xff]
    %v295 = vld [vmem:[#allocation5 + $0x5b0] sm:$0xff]
    %v296 = vld [vmem:[#allocation5 + $0x5b8] sm:$0xff]
    %v297 = vld [vmem:[#allocation5 + $0x5c0] sm:$0xff]
    %v298 = vld [vmem:[#allocation5 + $0x5c8] sm:$0xff]
    %v299 = vld [vmem:[#allocation5 + $0x5d0] sm:$0xff]
    %v300 = vld [vmem:[#allocation5 + $0x5d8] sm:$0xff]
    %v301 = vld [vmem:[#allocation5 + $0x5e0] sm:$0xff]
    %v302 = vld [vmem:[#allocation5 + $0x5e8] sm:$0xff]
    %v303 = vld [vmem:[#allocation5 + $0x5f0] sm:$0xff]
    %v304 = vld [vmem:[#allocation5 + $0x5f8] sm:$0xff]
    %v305 = vld [vmem:[#allocation5 + $0x600] sm:$0xff]
    %v306 = vld [vmem:[#allocation5 + $0x608] sm:$0xff]
    %v307 = vld [vmem:[#allocation5 + $0x610] sm:$0xff]
    %v308 = vld [vmem:[#allocation5 + $0x618] sm:$0xff]
    %v309 = vld [vmem:[#allocation5 + $0x620] sm:$0xff]
    %v310 = vld [vmem:[#allocation5 + $0x628] sm:$0xff]
    %v311 = vld [vmem:[#allocation5 + $0x630] sm:$0xff]
    %v312 = vld [vmem:[#allocation5 + $0x638] sm:$0xff]
    %v313 = vld [vmem:[#allocation5 + $0x640] sm:$0xff]
    %v314 = vld [vmem:[#allocation5 + $0x648] sm:$0xff]
    %v315 = vld [vmem:[#allocation5 + $0x650] sm:$0xff]
    %v316 = vld [vmem:[#allocation5 + $0x658] sm:$0xff]
    %v317 = vld [vmem:[#allocation5 + $0x660] sm:$0xff]
    %v318 = vld [vmem:[#allocation5 + $0x668] sm:$0xff]
    %v319 = vld [vmem:[#allocation5 + $0x670] sm:$0xff]
    %v320 = vld [vmem:[#allocation5 + $0x678] sm:$0xff]
    %v321 = vld [vmem:[#allocation5 + $0x680] sm:$0xff]
    %v322 = vld [vmem:[#allocation5 + $0x688] sm:$0xff]
    %v323 = vld [vmem:[#allocation5 + $0x690] sm:$0xff]
    %v324 = vld [vmem:[#allocation5 + $0x698] sm:$0xff]
    %v325 = vld [vmem:[#allocation5 + $0x6a0] sm:$0xff]
    %v326 = vld [vmem:[#allocation5 + $0x6a8] sm:$0xff]
    %v327 = vld [vmem:[#allocation5 + $0x6b0] sm:$0xff]
    %v328 = vld [vmem:[#allocation5 + $0x6b8] sm:$0xff]
    %v329 = vld [vmem:[#allocation5 + $0x6c0] sm:$0xff]
    %v330 = vld [vmem:[#allocation5 + $0x6c8] sm:$0xff]
    %v331 = vld [vmem:[#allocation5 + $0x6d0] sm:$0xff]
    %v332 = vld [vmem:[#allocation5 + $0x6d8] sm:$0xff]
    %v333 = vld [vmem:[#allocation5 + $0x6e0] sm:$0xff]
    %v334 = vld [vmem:[#allocation5 + $0x6e8] sm:$0xff]
    %v335 = vld [vmem:[#allocation5 + $0x6f0] sm:$0xff]
    %v336 = vld [vmem:[#allocation5 + $0x6f8] sm:$0xff]
    %v337 = vld [vmem:[#allocation5 + $0x700] sm:$0xff]
    %v338 = vld [vmem:[#allocation5 + $0x708] sm:$0xff]
    %v339 = vld [vmem:[#allocation5 + $0x710] sm:$0xff]
    %v340 = vld [vmem:[#allocation5 + $0x718] sm:$0xff]
    %v341 = vld [vmem:[#allocation5 + $0x720] sm:$0xff]
    %v342 = vld [vmem:[#allocation5 + $0x728] sm:$0xff]
    %v343 = vld [vmem:[#allocation5 + $0x730] sm:$0xff]
    %v344 = vld [vmem:[#allocation5 + $0x738] sm:$0xff]
    %v345 = vld [vmem:[#allocation5 + $0x740] sm:$0xff]
    %v346 = vld [vmem:[#allocation5 + $0x748] sm:$0xff]
    %v347 = vld [vmem:[#allocation5 + $0x750] sm:$0xff]
    %v348 = vld [vmem:[#allocation5 + $0x758] sm:$0xff]
    %v349 = vld [vmem:[#allocation5 + $0x760] sm:$0xff]
    %v350 = vld [vmem:[#allocation5 + $0x768] sm:$0xff]
    %v351 = vld [vmem:[#allocation5 + $0x770] sm:$0xff]
    %v352 = vld [vmem:[#allocation5 + $0x778] sm:$0xff]
    %v353 = vld [vmem:[#allocation5 + $0x780] sm:$0xff]
    %v354 = vld [vmem:[#allocation5 + $0x788] sm:$0xff]
    %v355 = vld [vmem:[#allocation5 + $0x790] sm:$0xff]
    %v356 = vld [vmem:[#allocation5 + $0x798] sm:$0xff]
    %v357 = vld [vmem:[#allocation5 + $0x7a0] sm:$0xff]
    %v358 = vld [vmem:[#allocation5 + $0x7a8] sm:$0xff]
    %v359 = vld [vmem:[#allocation5 + $0x7b0] sm:$0xff]
    %v360 = vld [vmem:[#allocation5 + $0x7b8] sm:$0xff]
    %v361 = vld [vmem:[#allocation5 + $0x7c0] sm:$0xff]
    %v362 = vld [vmem:[#allocation5 + $0x7c8] sm:$0xff]
    %v363 = vld [vmem:[#allocation5 + $0x7d0] sm:$0xff]
    %v364 = vld [vmem:[#allocation5 + $0x7d8] sm:$0xff]
    %v365 = vld [vmem:[#allocation5 + $0x7e0] sm:$0xff]
    %v366 = vld [vmem:[#allocation5 + $0x7e8] sm:$0xff]
    %v367 = vld [vmem:[#allocation5 + $0x7f0] sm:$0xff]
    %v368 = vld [vmem:[#allocation5 + $0x7f8] sm:$0xff]
    %v369 = vld [vmem:[#allocation5 + $0x800] sm:$0xff]
    %v370 = vld [vmem:[#allocation5 + $0x808] sm:$0xff]
    %v371 = vld [vmem:[#allocation5 + $0x810] sm:$0xff]
    %v372 = vld [vmem:[#allocation5 + $0x818] sm:$0xff]
    %v373 = vld [vmem:[#allocation5 + $0x820] sm:$0xff]
    %v374 = vld [vmem:[#allocation5 + $0x828] sm:$0xff]
    %v375 = vld [vmem:[#allocation5 + $0x830] sm:$0xff]
    %v376 = vld [vmem:[#allocation5 + $0x838] sm:$0xff]
    %v377 = vld [vmem:[#allocation5 + $0x840] sm:$0xff]
    %v378 = vld [vmem:[#allocation5 + $0x848] sm:$0xff]
    %v379 = vld [vmem:[#allocation5 + $0x850] sm:$0xff]
    %v380 = vld [vmem:[#allocation5 + $0x858] sm:$0xff]
    %v381 = vld [vmem:[#allocation5 + $0x860] sm:$0xff]
    %v382 = vld [vmem:[#allocation5 + $0x868] sm:$0xff]
    %v383 = vld [vmem:[#allocation5 + $0x870] sm:$0xff]
    %v384 = vld [vmem:[#allocation5 + $0x878] sm:$0xff]
    %v385 = vld [vmem:[#allocation5 + $0x880] sm:$0xff]
    %v386 = vld [vmem:[#allocation5 + $0x888] sm:$0xff]
    %v387 = vld [vmem:[#allocation5 + $0x890] sm:$0xff]
    %v388 = vld [vmem:[#allocation5 + $0x898] sm:$0xff]
    %v389 = vld [vmem:[#allocation5 + $0x8a0] sm:$0xff]
    %v390 = vld [vmem:[#allocation5 + $0x8a8] sm:$0xff]
    %v391 = vld [vmem:[#allocation5 + $0x8b0] sm:$0xff]
    %v392 = vld [vmem:[#allocation5 + $0x8b8] sm:$0xff]
    %v393 = vld [vmem:[#allocation5 + $0x8c0] sm:$0xff]
    %v394 = vld [vmem:[#allocation5 + $0x8c8] sm:$0xff]
    %v395 = vld [vmem:[#allocation5 + $0x8d0] sm:$0xff]
    %v396 = vld [vmem:[#allocation5 + $0x8d8] sm:$0xff]
    %v397 = vld [vmem:[#allocation5 + $0x8e0] sm:$0xff]
    %v398 = vld [vmem:[#allocation5 + $0x8e8] sm:$0xff]
    %v399 = vld [vmem:[#allocation5 + $0x8f0] sm:$0xff]
    %v400 = vld [vmem:[#allocation5 + $0x8f8] sm:$0xff]
    %v401 = vld [vmem:[#allocation7] sm:$0x3f]
    %v403 = vperm.slane %v401, 0
    %v404 = vperm.slane %v401, 1
    %v405 = vperm.slane %v401, 2
    %v406 = vperm.slane %v401, 3
    %v407 = vperm.slane %v401, 4
    %v408 = vperm.slane %v401, 5
    %v703 = vunpack.c.l.b16 %v113
    %v704 = vunpack.c.h.b16 %v113
    %v705 = vunpack.c.l.b16 %v114
    %v706 = vunpack.c.h.b16 %v114
    %v707 = vunpack.c.l.b16 %v115
    %v708 = vunpack.c.h.b16 %v115
    %v709 = vunpack.c.l.b16 %v116
    %v710 = vunpack.c.h.b16 %v116
    %v711 = vunpack.c.l.b16 %v117
    %v712 = vunpack.c.h.b16 %v117
    %v713 = vunpack.c.l.b16 %v118
    %v714 = vunpack.c.h.b16 %v118
    %v715 = vunpack.c.l.b16 %v119
    %v716 = vunpack.c.h.b16 %v119
    %v717 = vunpack.c.l.b16 %v120
    %v718 = vunpack.c.h.b16 %v120
    %v719 = vunpack.c.l.b16 %v121
    %v720 = vunpack.c.h.b16 %v121
    %v721 = vunpack.c.l.b16 %v122
    %v722 = vunpack.c.h.b16 %v122
    %v723 = vunpack.c.l.b16 %v123
    %v724 = vunpack.c.h.b16 %v123
    %v725 = vunpack.c.l.b16 %v124
    %v726 = vunpack.c.h.b16 %v124
    %v727 = vunpack.c.l.b16 %v125
    %v728 = vunpack.c.h.b16 %v125
    %v729 = vunpack.c.l.b16 %v126
    %v730 = vunpack.c.h.b16 %v126
    %v731 = vunpack.c.l.b16 %v127
    %v732 = vunpack.c.h.b16 %v127
    %v733 = vunpack.c.l.b16 %v128
    %v734 = vunpack.c.h.b16 %v128
    %v735 = vunpack.c.l.b16 %v129
    %v736 = vunpack.c.h.b16 %v129
    %v737 = vunpack.c.l.b16 %v130
    %v738 = vunpack.c.h.b16 %v130
    %v739 = vunpack.c.l.b16 %v131
    %v740 = vunpack.c.h.b16 %v131
    %v741 = vunpack.c.l.b16 %v132
    %v742 = vunpack.c.h.b16 %v132
    %v743 = vunpack.c.l.b16 %v133
    %v744 = vunpack.c.h.b16 %v133
    %v745 = vunpack.c.l.b16 %v134
    %v746 = vunpack.c.h.b16 %v134
    %v747 = vunpack.c.l.b16 %v135
    %v748 = vunpack.c.h.b16 %v135
    %v749 = vunpack.c.l.b16 %v136
    %v750 = vunpack.c.h.b16 %v136
    %v751 = vunpack.c.l.b16 %v137
    %v752 = vunpack.c.h.b16 %v137
    %v753 = vunpack.c.l.b16 %v138
    %v754 = vunpack.c.h.b16 %v138
    %v755 = vunpack.c.l.b16 %v139
    %v756 = vunpack.c.h.b16 %v139
    %v757 = vunpack.c.l.b16 %v140
    %v758 = vunpack.c.h.b16 %v140
    %v759 = vunpack.c.l.b16 %v141
    %v760 = vunpack.c.h.b16 %v141
    %v761 = vunpack.c.l.b16 %v142
    %v762 = vunpack.c.h.b16 %v142
    %v763 = vunpack.c.l.b16 %v143
    %v764 = vunpack.c.h.b16 %v143
    %v765 = vunpack.c.l.b16 %v144
    %v766 = vunpack.c.h.b16 %v144
    %v767 = vunpack.c.l.b16 %v145
    %v768 = vunpack.c.h.b16 %v145
    %v769 = vunpack.c.l.b16 %v146
    %v770 = vunpack.c.h.b16 %v146
    %v771 = vunpack.c.l.b16 %v147
    %v772 = vunpack.c.h.b16 %v147
    %v773 = vunpack.c.l.b16 %v148
    %v774 = vunpack.c.h.b16 %v148
    %v775 = vunpack.c.l.b16 %v149
    %v776 = vunpack.c.h.b16 %v149
    %v777 = vunpack.c.l.b16 %v150
    %v778 = vunpack.c.h.b16 %v150
    %v779 = vunpack.c.l.b16 %v151
    %v780 = vunpack.c.h.b16 %v151
    %v781 = vunpack.c.l.b16 %v152
    %v782 = vunpack.c.h.b16 %v152
    %v783 = vunpack.c.l.b16 %v153
    %v784 = vunpack.c.h.b16 %v153
    %v785 = vunpack.c.l.b16 %v154
    %v786 = vunpack.c.h.b16 %v154
    %v787 = vunpack.c.l.b16 %v155
    %v788 = vunpack.c.h.b16 %v155
    %v789 = vunpack.c.l.b16 %v156
    %v790 = vunpack.c.h.b16 %v156
    %v791 = vunpack.c.l.b16 %v157
    %v792 = vunpack.c.h.b16 %v157
    %v793 = vunpack.c.l.b16 %v158
    %v794 = vunpack.c.h.b16 %v158
    %v795 = vunpack.c.l.b16 %v159
    %v796 = vunpack.c.h.b16 %v159
    %v797 = vunpack.c.l.b16 %v160
    %v798 = vunpack.c.h.b16 %v160
    %v799 = vunpack.c.l.b16 %v161
    %v800 = vunpack.c.h.b16 %v161
    %v801 = vunpack.c.l.b16 %v162
    %v802 = vunpack.c.h.b16 %v162
    %v803 = vunpack.c.l.b16 %v163
    %v804 = vunpack.c.h.b16 %v163
    %v805 = vunpack.c.l.b16 %v164
    %v806 = vunpack.c.h.b16 %v164
    %v807 = vunpack.c.l.b16 %v165
    %v808 = vunpack.c.h.b16 %v165
    %v809 = vunpack.c.l.b16 %v166
    %v810 = vunpack.c.h.b16 %v166
    %v811 = vunpack.c.l.b16 %v167
    %v812 = vunpack.c.h.b16 %v167
    %v813 = vunpack.c.l.b16 %v168
    %v814 = vunpack.c.h.b16 %v168
    %v815 = vunpack.c.l.b16 %v169
    %v816 = vunpack.c.h.b16 %v169
    %v817 = vunpack.c.l.b16 %v170
    %v818 = vunpack.c.h.b16 %v170
    %v819 = vunpack.c.l.b16 %v171
    %v820 = vunpack.c.h.b16 %v171
    %v821 = vunpack.c.l.b16 %v172
    %v822 = vunpack.c.h.b16 %v172
    %v823 = vunpack.c.l.b16 %v173
    %v824 = vunpack.c.h.b16 %v173
    %v825 = vunpack.c.l.b16 %v174
    %v826 = vunpack.c.h.b16 %v174
    %v827 = vunpack.c.l.b16 %v175
    %v828 = vunpack.c.h.b16 %v175
    %v829 = vunpack.c.l.b16 %v176
    %v830 = vunpack.c.h.b16 %v176
    %v831 = vunpack.c.l.b16 %v177
    %v832 = vunpack.c.h.b16 %v177
    %v833 = vunpack.c.l.b16 %v178
    %v834 = vunpack.c.h.b16 %v178
    %v835 = vunpack.c.l.b16 %v179
    %v836 = vunpack.c.h.b16 %v179
    %v837 = vunpack.c.l.b16 %v180
    %v838 = vunpack.c.h.b16 %v180
    %v839 = vunpack.c.l.b16 %v181
    %v840 = vunpack.c.h.b16 %v181
    %v841 = vunpack.c.l.b16 %v182
    %v842 = vunpack.c.h.b16 %v182
    %v843 = vunpack.c.l.b16 %v183
    %v844 = vunpack.c.h.b16 %v183
    %v845 = vunpack.c.l.b16 %v184
    %v846 = vunpack.c.h.b16 %v184
    %v847 = vunpack.c.l.b16 %v185
    %v848 = vunpack.c.h.b16 %v185
    %v849 = vunpack.c.l.b16 %v186
    %v850 = vunpack.c.h.b16 %v186
    %v851 = vunpack.c.l.b16 %v187
    %v852 = vunpack.c.h.b16 %v187
    %v853 = vunpack.c.l.b16 %v188
    %v854 = vunpack.c.h.b16 %v188
    %v855 = vunpack.c.l.b16 %v189
    %v856 = vunpack.c.h.b16 %v189
    %v857 = vunpack.c.l.b16 %v190
    %v858 = vunpack.c.h.b16 %v190
    %v859 = vunpack.c.l.b16 %v191
    %v860 = vunpack.c.h.b16 %v191
    %v861 = vunpack.c.l.b16 %v192
    %v862 = vunpack.c.h.b16 %v192
    %v863 = vunpack.c.l.b16 %v193
    %v864 = vunpack.c.h.b16 %v193
    %v865 = vunpack.c.l.b16 %v194
    %v866 = vunpack.c.h.b16 %v194
    %v867 = vunpack.c.l.b16 %v195
    %v868 = vunpack.c.h.b16 %v195
    %v869 = vunpack.c.l.b16 %v196
    %v870 = vunpack.c.h.b16 %v196
    %v871 = vunpack.c.l.b16 %v197
    %v872 = vunpack.c.h.b16 %v197
    %v873 = vunpack.c.l.b16 %v198
    %v874 = vunpack.c.h.b16 %v198
    %v875 = vunpack.c.l.b16 %v199
    %v876 = vunpack.c.h.b16 %v199
    %v877 = vunpack.c.l.b16 %v200
    %v878 = vunpack.c.h.b16 %v200
    %v879 = vunpack.c.l.b16 %v201
    %v880 = vunpack.c.h.b16 %v201
    %v881 = vunpack.c.l.b16 %v202
    %v882 = vunpack.c.h.b16 %v202
    %v883 = vunpack.c.l.b16 %v203
    %v884 = vunpack.c.h.b16 %v203
    %v885 = vunpack.c.l.b16 %v204
    %v886 = vunpack.c.h.b16 %v204
    %v887 = vunpack.c.l.b16 %v205
    %v888 = vunpack.c.h.b16 %v205
    %v889 = vunpack.c.l.b16 %v206
    %v890 = vunpack.c.h.b16 %v206
    %v891 = vunpack.c.l.b16 %v207
    %v892 = vunpack.c.h.b16 %v207
    %v893 = vunpack.c.l.b16 %v208
    %v894 = vunpack.c.h.b16 %v208
    %v895 = vunpack.c.l.b16 %v209
    %v896 = vunpack.c.h.b16 %v209
    %v897 = vunpack.c.l.b16 %v210
    %v898 = vunpack.c.h.b16 %v210
    %v899 = vunpack.c.l.b16 %v211
    %v900 = vunpack.c.h.b16 %v211
    %v901 = vunpack.c.l.b16 %v212
    %v902 = vunpack.c.h.b16 %v212
    %v903 = vunpack.c.l.b16 %v213
    %v904 = vunpack.c.h.b16 %v213
    %v905 = vunpack.c.l.b16 %v214
    %v906 = vunpack.c.h.b16 %v214
    %v907 = vunpack.c.l.b16 %v215
    %v908 = vunpack.c.h.b16 %v215
    %v909 = vunpack.c.l.b16 %v216
    %v910 = vunpack.c.h.b16 %v216
    %v911 = vunpack.c.l.b16 %v217
    %v912 = vunpack.c.h.b16 %v217
    %v913 = vunpack.c.l.b16 %v218
    %v914 = vunpack.c.h.b16 %v218
    %v915 = vunpack.c.l.b16 %v219
    %v916 = vunpack.c.h.b16 %v219
    %v917 = vunpack.c.l.b16 %v220
    %v918 = vunpack.c.h.b16 %v220
    %v919 = vunpack.c.l.b16 %v221
    %v920 = vunpack.c.h.b16 %v221
    %v921 = vunpack.c.l.b16 %v222
    %v922 = vunpack.c.h.b16 %v222
    %v923 = vunpack.c.l.b16 %v223
    %v924 = vunpack.c.h.b16 %v223
    %v925 = vunpack.c.l.b16 %v224
    %v926 = vunpack.c.h.b16 %v224
    %v927 = vunpack.c.l.b16 %v225
    %v928 = vunpack.c.h.b16 %v225
    %v929 = vunpack.c.l.b16 %v226
    %v930 = vunpack.c.h.b16 %v226
    %v931 = vunpack.c.l.b16 %v227
    %v932 = vunpack.c.h.b16 %v227
    %v933 = vunpack.c.l.b16 %v228
    %v934 = vunpack.c.h.b16 %v228
    %v935 = vunpack.c.l.b16 %v229
    %v936 = vunpack.c.h.b16 %v229
    %v937 = vunpack.c.l.b16 %v230
    %v938 = vunpack.c.h.b16 %v230
    %v939 = vunpack.c.l.b16 %v231
    %v940 = vunpack.c.h.b16 %v231
    %v941 = vunpack.c.l.b16 %v232
    %v942 = vunpack.c.h.b16 %v232
    %v943 = vunpack.c.l.b16 %v233
    %v944 = vunpack.c.h.b16 %v233
    %v945 = vunpack.c.l.b16 %v234
    %v946 = vunpack.c.h.b16 %v234
    %v947 = vunpack.c.l.b16 %v235
    %v948 = vunpack.c.h.b16 %v235
    %v949 = vunpack.c.l.b16 %v236
    %v950 = vunpack.c.h.b16 %v236
    %v951 = vunpack.c.l.b16 %v237
    %v952 = vunpack.c.h.b16 %v237
    %v953 = vunpack.c.l.b16 %v238
    %v954 = vunpack.c.h.b16 %v238
    %v955 = vunpack.c.l.b16 %v239
    %v956 = vunpack.c.h.b16 %v239
    %v957 = vunpack.c.l.b16 %v240
    %v958 = vunpack.c.h.b16 %v240
    %v959 = vunpack.c.l.b16 %v241
    %v960 = vunpack.c.h.b16 %v241
    %v961 = vunpack.c.l.b16 %v242
    %v962 = vunpack.c.h.b16 %v242
    %v963 = vunpack.c.l.b16 %v243
    %v964 = vunpack.c.h.b16 %v243
    %v965 = vunpack.c.l.b16 %v244
    %v966 = vunpack.c.h.b16 %v244
    %v967 = vunpack.c.l.b16 %v245
    %v968 = vunpack.c.h.b16 %v245
    %v969 = vunpack.c.l.b16 %v246
    %v970 = vunpack.c.h.b16 %v246
    %v971 = vunpack.c.l.b16 %v247
    %v972 = vunpack.c.h.b16 %v247
    %v973 = vunpack.c.l.b16 %v248
    %v974 = vunpack.c.h.b16 %v248
    %v975 = vunpack.c.l.b16 %v249
    %v976 = vunpack.c.h.b16 %v249
    %v977 = vunpack.c.l.b16 %v250
    %v978 = vunpack.c.h.b16 %v250
    %v979 = vunpack.c.l.b16 %v251
    %v980 = vunpack.c.h.b16 %v251
    %v981 = vunpack.c.l.b16 %v252
    %v982 = vunpack.c.h.b16 %v252
    %v983 = vunpack.c.l.b16 %v253
    %v984 = vunpack.c.h.b16 %v253
    %v985 = vunpack.c.l.b16 %v254
    %v986 = vunpack.c.h.b16 %v254
    %v987 = vunpack.c.l.b16 %v255
    %v988 = vunpack.c.h.b16 %v255
    %v989 = vunpack.c.l.b16 %v256
    %v990 = vunpack.c.h.b16 %v256
    %v991 = vunpack.c.l.b16 %v257
    %v992 = vunpack.c.h.b16 %v257
    %v993 = vunpack.c.l.b16 %v258
    %v994 = vunpack.c.h.b16 %v258
    %v995 = vunpack.c.l.b16 %v259
    %v996 = vunpack.c.h.b16 %v259
    %v997 = vunpack.c.l.b16 %v260
    %v998 = vunpack.c.h.b16 %v260
    %v999 = vunpack.c.l.b16 %v261
    %v1000 = vunpack.c.h.b16 %v261
    %v1001 = vunpack.c.l.b16 %v262
    %v1002 = vunpack.c.h.b16 %v262
    %v1003 = vunpack.c.l.b16 %v263
    %v1004 = vunpack.c.h.b16 %v263
    %v1005 = vunpack.c.l.b16 %v264
    %v1006 = vunpack.c.h.b16 %v264
    %v1007 = vunpack.c.l.b16 %v265
    %v1008 = vunpack.c.h.b16 %v265
    %v1009 = vunpack.c.l.b16 %v266
    %v1010 = vunpack.c.h.b16 %v266
    %v1011 = vunpack.c.l.b16 %v267
    %v1012 = vunpack.c.h.b16 %v267
    %v1013 = vunpack.c.l.b16 %v268
    %v1014 = vunpack.c.h.b16 %v268
    %v1015 = vunpack.c.l.b16 %v269
    %v1016 = vunpack.c.h.b16 %v269
    %v1017 = vunpack.c.l.b16 %v270
    %v1018 = vunpack.c.h.b16 %v270
    %v1019 = vunpack.c.l.b16 %v271
    %v1020 = vunpack.c.h.b16 %v271
    %v1021 = vunpack.c.l.b16 %v272
    %v1022 = vunpack.c.h.b16 %v272
    %v1023 = vunpack.c.l.b16 %v273
    %v1024 = vunpack.c.h.b16 %v273
    %v1025 = vunpack.c.l.b16 %v274
    %v1026 = vunpack.c.h.b16 %v274
    %v1027 = vunpack.c.l.b16 %v275
    %v1028 = vunpack.c.h.b16 %v275
    %v1029 = vunpack.c.l.b16 %v276
    %v1030 = vunpack.c.h.b16 %v276
    %v1031 = vunpack.c.l.b16 %v277
    %v1032 = vunpack.c.h.b16 %v277
    %v1033 = vunpack.c.l.b16 %v278
    %v1034 = vunpack.c.h.b16 %v278
    %v1035 = vunpack.c.l.b16 %v279
    %v1036 = vunpack.c.h.b16 %v279
    %v1037 = vunpack.c.l.b16 %v280
    %v1038 = vunpack.c.h.b16 %v280
    %v1039 = vunpack.c.l.b16 %v281
    %v1040 = vunpack.c.h.b16 %v281
    %v1041 = vunpack.c.l.b16 %v282
    %v1042 = vunpack.c.h.b16 %v282
    %v1043 = vunpack.c.l.b16 %v283
    %v1044 = vunpack.c.h.b16 %v283
    %v1045 = vunpack.c.l.b16 %v284
    %v1046 = vunpack.c.h.b16 %v284
    %v1047 = vunpack.c.l.b16 %v285
    %v1048 = vunpack.c.h.b16 %v285
    %v1049 = vunpack.c.l.b16 %v286
    %v1050 = vunpack.c.h.b16 %v286
    %v1051 = vunpack.c.l.b16 %v287
    %v1052 = vunpack.c.h.b16 %v287
    %v1053 = vunpack.c.l.b16 %v288
    %v1054 = vunpack.c.h.b16 %v288
    %v1055 = vunpack.c.l.b16 %v289
    %v1056 = vunpack.c.h.b16 %v289
    %v1057 = vunpack.c.l.b16 %v290
    %v1058 = vunpack.c.h.b16 %v290
    %v1059 = vunpack.c.l.b16 %v291
    %v1060 = vunpack.c.h.b16 %v291
    %v1061 = vunpack.c.l.b16 %v292
    %v1062 = vunpack.c.h.b16 %v292
    %v1063 = vunpack.c.l.b16 %v293
    %v1064 = vunpack.c.h.b16 %v293
    %v1065 = vunpack.c.l.b16 %v294
    %v1066 = vunpack.c.h.b16 %v294
    %v1067 = vunpack.c.l.b16 %v295
    %v1068 = vunpack.c.h.b16 %v295
    %v1069 = vunpack.c.l.b16 %v296
    %v1070 = vunpack.c.h.b16 %v296
    %v1071 = vunpack.c.l.b16 %v297
    %v1072 = vunpack.c.h.b16 %v297
    %v1073 = vunpack.c.l.b16 %v298
    %v1074 = vunpack.c.h.b16 %v298
    %v1075 = vunpack.c.l.b16 %v299
    %v1076 = vunpack.c.h.b16 %v299
    %v1077 = vunpack.c.l.b16 %v300
    %v1078 = vunpack.c.h.b16 %v300
    %v1079 = vunpack.c.l.b16 %v301
    %v1080 = vunpack.c.h.b16 %v301
    %v1081 = vunpack.c.l.b16 %v302
    %v1082 = vunpack.c.h.b16 %v302
    %v1083 = vunpack.c.l.b16 %v303
    %v1084 = vunpack.c.h.b16 %v303
    %v1085 = vunpack.c.l.b16 %v304
    %v1086 = vunpack.c.h.b16 %v304
    %v1087 = vunpack.c.l.b16 %v305
    %v1088 = vunpack.c.h.b16 %v305
    %v1089 = vunpack.c.l.b16 %v306
    %v1090 = vunpack.c.h.b16 %v306
    %v1091 = vunpack.c.l.b16 %v307
    %v1092 = vunpack.c.h.b16 %v307
    %v1093 = vunpack.c.l.b16 %v308
    %v1094 = vunpack.c.h.b16 %v308
    %v1095 = vunpack.c.l.b16 %v309
    %v1096 = vunpack.c.h.b16 %v309
    %v1097 = vunpack.c.l.b16 %v310
    %v1098 = vunpack.c.h.b16 %v310
    %v1099 = vunpack.c.l.b16 %v311
    %v1100 = vunpack.c.h.b16 %v311
    %v1101 = vunpack.c.l.b16 %v312
    %v1102 = vunpack.c.h.b16 %v312
    %v1103 = vunpack.c.l.b16 %v313
    %v1104 = vunpack.c.h.b16 %v313
    %v1105 = vunpack.c.l.b16 %v314
    %v1106 = vunpack.c.h.b16 %v314
    %v1107 = vunpack.c.l.b16 %v315
    %v1108 = vunpack.c.h.b16 %v315
    %v1109 = vunpack.c.l.b16 %v316
    %v1110 = vunpack.c.h.b16 %v316
    %v1111 = vunpack.c.l.b16 %v317
    %v1112 = vunpack.c.h.b16 %v317
    %v1113 = vunpack.c.l.b16 %v318
    %v1114 = vunpack.c.h.b16 %v318
    %v1115 = vunpack.c.l.b16 %v319
    %v1116 = vunpack.c.h.b16 %v319
    %v1117 = vunpack.c.l.b16 %v320
    %v1118 = vunpack.c.h.b16 %v320
    %v1119 = vunpack.c.l.b16 %v321
    %v1120 = vunpack.c.h.b16 %v321
    %v1121 = vunpack.c.l.b16 %v322
    %v1122 = vunpack.c.h.b16 %v322
    %v1123 = vunpack.c.l.b16 %v323
    %v1124 = vunpack.c.h.b16 %v323
    %v1125 = vunpack.c.l.b16 %v324
    %v1126 = vunpack.c.h.b16 %v324
    %v1127 = vunpack.c.l.b16 %v325
    %v1128 = vunpack.c.h.b16 %v325
    %v1129 = vunpack.c.l.b16 %v326
    %v1130 = vunpack.c.h.b16 %v326
    %v1131 = vunpack.c.l.b16 %v327
    %v1132 = vunpack.c.h.b16 %v327
    %v1133 = vunpack.c.l.b16 %v328
    %v1134 = vunpack.c.h.b16 %v328
    %v1135 = vunpack.c.l.b16 %v329
    %v1136 = vunpack.c.h.b16 %v329
    %v1137 = vunpack.c.l.b16 %v330
    %v1138 = vunpack.c.h.b16 %v330
    %v1139 = vunpack.c.l.b16 %v331
    %v1140 = vunpack.c.h.b16 %v331
    %v1141 = vunpack.c.l.b16 %v332
    %v1142 = vunpack.c.h.b16 %v332
    %v1143 = vunpack.c.l.b16 %v333
    %v1144 = vunpack.c.h.b16 %v333
    %v1145 = vunpack.c.l.b16 %v334
    %v1146 = vunpack.c.h.b16 %v334
    %v1147 = vunpack.c.l.b16 %v335
    %v1148 = vunpack.c.h.b16 %v335
    %v1149 = vunpack.c.l.b16 %v336
    %v1150 = vunpack.c.h.b16 %v336
    %v1151 = vunpack.c.l.b16 %v337
    %v1152 = vunpack.c.h.b16 %v337
    %v1153 = vunpack.c.l.b16 %v338
    %v1154 = vunpack.c.h.b16 %v338
    %v1155 = vunpack.c.l.b16 %v339
    %v1156 = vunpack.c.h.b16 %v339
    %v1157 = vunpack.c.l.b16 %v340
    %v1158 = vunpack.c.h.b16 %v340
    %v1159 = vunpack.c.l.b16 %v341
    %v1160 = vunpack.c.h.b16 %v341
    %v1161 = vunpack.c.l.b16 %v342
    %v1162 = vunpack.c.h.b16 %v342
    %v1163 = vunpack.c.l.b16 %v343
    %v1164 = vunpack.c.h.b16 %v343
    %v1165 = vunpack.c.l.b16 %v344
    %v1166 = vunpack.c.h.b16 %v344
    %v1167 = vunpack.c.l.b16 %v345
    %v1168 = vunpack.c.h.b16 %v345
    %v1169 = vunpack.c.l.b16 %v346
    %v1170 = vunpack.c.h.b16 %v346
    %v1171 = vunpack.c.l.b16 %v347
    %v1172 = vunpack.c.h.b16 %v347
    %v1173 = vunpack.c.l.b16 %v348
    %v1174 = vunpack.c.h.b16 %v348
    %v1175 = vunpack.c.l.b16 %v349
    %v1176 = vunpack.c.h.b16 %v349
    %v1177 = vunpack.c.l.b16 %v350
    %v1178 = vunpack.c.h.b16 %v350
    %v1179 = vunpack.c.l.b16 %v351
    %v1180 = vunpack.c.h.b16 %v351
    %v1181 = vunpack.c.l.b16 %v352
    %v1182 = vunpack.c.h.b16 %v352
    %v1183 = vunpack.c.l.b16 %v353
    %v1184 = vunpack.c.h.b16 %v353
    %v1185 = vunpack.c.l.b16 %v354
    %v1186 = vunpack.c.h.b16 %v354
    %v1187 = vunpack.c.l.b16 %v355
    %v1188 = vunpack.c.h.b16 %v355
    %v1189 = vunpack.c.l.b16 %v356
    %v1190 = vunpack.c.h.b16 %v356
    %v1191 = vunpack.c.l.b16 %v357
    %v1192 = vunpack.c.h.b16 %v357
    %v1193 = vunpack.c.l.b16 %v358
    %v1194 = vunpack.c.h.b16 %v358
    %v1195 = vunpack.c.l.b16 %v359
    %v1196 = vunpack.c.h.b16 %v359
    %v1197 = vunpack.c.l.b16 %v360
    %v1198 = vunpack.c.h.b16 %v360
    %v1199 = vunpack.c.l.b16 %v361
    %v1200 = vunpack.c.h.b16 %v361
    %v1201 = vunpack.c.l.b16 %v362
    %v1202 = vunpack.c.h.b16 %v362
    %v1203 = vunpack.c.l.b16 %v363
    %v1204 = vunpack.c.h.b16 %v363
    %v1205 = vunpack.c.l.b16 %v364
    %v1206 = vunpack.c.h.b16 %v364
    %v1207 = vunpack.c.l.b16 %v365
    %v1208 = vunpack.c.h.b16 %v365
    %v1209 = vunpack.c.l.b16 %v366
    %v1210 = vunpack.c.h.b16 %v366
    %v1211 = vunpack.c.l.b16 %v367
    %v1212 = vunpack.c.h.b16 %v367
    %v1213 = vunpack.c.l.b16 %v368
    %v1214 = vunpack.c.h.b16 %v368
    %v1215 = vunpack.c.l.b16 %v369
    %v1216 = vunpack.c.h.b16 %v369
    %v1217 = vunpack.c.l.b16 %v370
    %v1218 = vunpack.c.h.b16 %v370
    %v1219 = vunpack.c.l.b16 %v371
    %v1220 = vunpack.c.h.b16 %v371
    %v1221 = vunpack.c.l.b16 %v372
    %v1222 = vunpack.c.h.b16 %v372
    %v1223 = vunpack.c.l.b16 %v373
    %v1224 = vunpack.c.h.b16 %v373
    %v1225 = vunpack.c.l.b16 %v374
    %v1226 = vunpack.c.h.b16 %v374
    %v1227 = vunpack.c.l.b16 %v375
    %v1228 = vunpack.c.h.b16 %v375
    %v1229 = vunpack.c.l.b16 %v376
    %v1230 = vunpack.c.h.b16 %v376
    %v1231 = vunpack.c.l.b16 %v377
    %v1232 = vunpack.c.h.b16 %v377
    %v1233 = vunpack.c.l.b16 %v378
    %v1234 = vunpack.c.h.b16 %v378
    %v1235 = vunpack.c.l.b16 %v379
    %v1236 = vunpack.c.h.b16 %v379
    %v1237 = vunpack.c.l.b16 %v380
    %v1238 = vunpack.c.h.b16 %v380
    %v1239 = vunpack.c.l.b16 %v381
    %v1240 = vunpack.c.h.b16 %v381
    %v1241 = vunpack.c.l.b16 %v382
    %v1242 = vunpack.c.h.b16 %v382
    %v1243 = vunpack.c.l.b16 %v383
    %v1244 = vunpack.c.h.b16 %v383
    %v1245 = vunpack.c.l.b16 %v384
    %v1246 = vunpack.c.h.b16 %v384
    %v1247 = vunpack.c.l.b16 %v385
    %v1248 = vunpack.c.h.b16 %v385
    %v1249 = vunpack.c.l.b16 %v386
    %v1250 = vunpack.c.h.b16 %v386
    %v1251 = vunpack.c.l.b16 %v387
    %v1252 = vunpack.c.h.b16 %v387
    %v1253 = vunpack.c.l.b16 %v388
    %v1254 = vunpack.c.h.b16 %v388
    %v1255 = vunpack.c.l.b16 %v389
    %v1256 = vunpack.c.h.b16 %v389
    %v1257 = vunpack.c.l.b16 %v390
    %v1258 = vunpack.c.h.b16 %v390
    %v1259 = vunpack.c.l.b16 %v391
    %v1260 = vunpack.c.h.b16 %v391
    %v1261 = vunpack.c.l.b16 %v392
    %v1262 = vunpack.c.h.b16 %v392
    %v1263 = vunpack.c.l.b16 %v393
    %v1264 = vunpack.c.h.b16 %v393
    %v1265 = vunpack.c.l.b16 %v394
    %v1266 = vunpack.c.h.b16 %v394
    %v1267 = vunpack.c.l.b16 %v395
    %v1268 = vunpack.c.h.b16 %v395
    %v1269 = vunpack.c.l.b16 %v396
    %v1270 = vunpack.c.h.b16 %v396
    %v1271 = vunpack.c.l.b16 %v397
    %v1272 = vunpack.c.h.b16 %v397
    %v1273 = vunpack.c.l.b16 %v398
    %v1274 = vunpack.c.h.b16 %v398
    %v1275 = vunpack.c.l.b16 %v399
    %v1276 = vunpack.c.h.b16 %v399
    %v1277 = vunpack.c.l.b16 %v400
    %v1278 = vunpack.c.h.b16 %v400
    %v1279 = vpack.c.b16 %v709, %v703
    %v1280 = vpack.c.b16 %v710, %v704
    %v1281 = vpack.c.b16 %v711, %v705
    %v1282 = vpack.c.b16 %v712, %v706
    %v1283 = vpack.c.b16 %v713, %v707
    %v1284 = vpack.c.b16 %v714, %v708
    %v1285 = vpack.c.b16 %v721, %v715
    %v1286 = vpack.c.b16 %v722, %v716
    %v1287 = vpack.c.b16 %v723, %v717
    %v1288 = vpack.c.b16 %v724, %v718
    %v1289 = vpack.c.b16 %v725, %v719
    %v1290 = vpack.c.b16 %v726, %v720
    %v1291 = vpack.c.b16 %v733, %v727
    %v1292 = vpack.c.b16 %v734, %v728
    %v1293 = vpack.c.b16 %v735, %v729
    %v1294 = vpack.c.b16 %v736, %v730
    %v1295 = vpack.c.b16 %v737, %v731
    %v1296 = vpack.c.b16 %v738, %v732
    %v1297 = vpack.c.b16 %v745, %v739
    %v1298 = vpack.c.b16 %v746, %v740
    %v1299 = vpack.c.b16 %v747, %v741
    %v1300 = vpack.c.b16 %v748, %v742
    %v1301 = vpack.c.b16 %v749, %v743
    %v1302 = vpack.c.b16 %v750, %v744
    %v1303 = vpack.c.b16 %v757, %v751
    %v1304 = vpack.c.b16 %v758, %v752
    %v1305 = vpack.c.b16 %v759, %v753
    %v1306 = vpack.c.b16 %v760, %v754
    %v1307 = vpack.c.b16 %v761, %v755
    %v1308 = vpack.c.b16 %v762, %v756
    %v1309 = vpack.c.b16 %v769, %v763
    %v1310 = vpack.c.b16 %v770, %v764
    %v1311 = vpack.c.b16 %v771, %v765
    %v1312 = vpack.c.b16 %v772, %v766
    %v1313 = vpack.c.b16 %v773, %v767
    %v1314 = vpack.c.b16 %v774, %v768
    %v1315 = vpack.c.b16 %v781, %v775
    %v1316 = vpack.c.b16 %v782, %v776
    %v1317 = vpack.c.b16 %v783, %v777
    %v1318 = vpack.c.b16 %v784, %v778
    %v1319 = vpack.c.b16 %v785, %v779
    %v1320 = vpack.c.b16 %v786, %v780
    %v1321 = vpack.c.b16 %v793, %v787
    %v1322 = vpack.c.b16 %v794, %v788
    %v1323 = vpack.c.b16 %v795, %v789
    %v1324 = vpack.c.b16 %v796, %v790
    %v1325 = vpack.c.b16 %v797, %v791
    %v1326 = vpack.c.b16 %v798, %v792
    %v1327 = vpack.c.b16 %v805, %v799
    %v1328 = vpack.c.b16 %v806, %v800
    %v1329 = vpack.c.b16 %v807, %v801
    %v1330 = vpack.c.b16 %v808, %v802
    %v1331 = vpack.c.b16 %v809, %v803
    %v1332 = vpack.c.b16 %v810, %v804
    %v1333 = vpack.c.b16 %v817, %v811
    %v1334 = vpack.c.b16 %v818, %v812
    %v1335 = vpack.c.b16 %v819, %v813
    %v1336 = vpack.c.b16 %v820, %v814
    %v1337 = vpack.c.b16 %v821, %v815
    %v1338 = vpack.c.b16 %v822, %v816
    %v1339 = vpack.c.b16 %v829, %v823
    %v1340 = vpack.c.b16 %v830, %v824
    %v1341 = vpack.c.b16 %v831, %v825
    %v1342 = vpack.c.b16 %v832, %v826
    %v1343 = vpack.c.b16 %v833, %v827
    %v1344 = vpack.c.b16 %v834, %v828
    %v1345 = vpack.c.b16 %v841, %v835
    %v1346 = vpack.c.b16 %v842, %v836
    %v1347 = vpack.c.b16 %v843, %v837
    %v1348 = vpack.c.b16 %v844, %v838
    %v1349 = vpack.c.b16 %v845, %v839
    %v1350 = vpack.c.b16 %v846, %v840
    %v1351 = vpack.c.b16 %v853, %v847
    %v1352 = vpack.c.b16 %v854, %v848
    %v1353 = vpack.c.b16 %v855, %v849
    %v1354 = vpack.c.b16 %v856, %v850
    %v1355 = vpack.c.b16 %v857, %v851
    %v1356 = vpack.c.b16 %v858, %v852
    %v1357 = vpack.c.b16 %v865, %v859
    %v1358 = vpack.c.b16 %v866, %v860
    %v1359 = vpack.c.b16 %v867, %v861
    %v1360 = vpack.c.b16 %v868, %v862
    %v1361 = vpack.c.b16 %v869, %v863
    %v1362 = vpack.c.b16 %v870, %v864
    %v1363 = vpack.c.b16 %v877, %v871
    %v1364 = vpack.c.b16 %v878, %v872
    %v1365 = vpack.c.b16 %v879, %v873
    %v1366 = vpack.c.b16 %v880, %v874
    %v1367 = vpack.c.b16 %v881, %v875
    %v1368 = vpack.c.b16 %v882, %v876
    %v1369 = vpack.c.b16 %v889, %v883
    %v1370 = vpack.c.b16 %v890, %v884
    %v1371 = vpack.c.b16 %v891, %v885
    %v1372 = vpack.c.b16 %v892, %v886
    %v1373 = vpack.c.b16 %v893, %v887
    %v1374 = vpack.c.b16 %v894, %v888
    %v1375 = vpack.c.b16 %v901, %v895
    %v1376 = vpack.c.b16 %v902, %v896
    %v1377 = vpack.c.b16 %v903, %v897
    %v1378 = vpack.c.b16 %v904, %v898
    %v1379 = vpack.c.b16 %v905, %v899
    %v1380 = vpack.c.b16 %v906, %v900
    %v1381 = vpack.c.b16 %v913, %v907
    %v1382 = vpack.c.b16 %v914, %v908
    %v1383 = vpack.c.b16 %v915, %v909
    %v1384 = vpack.c.b16 %v916, %v910
    %v1385 = vpack.c.b16 %v917, %v911
    %v1386 = vpack.c.b16 %v918, %v912
    %v1387 = vpack.c.b16 %v925, %v919
    %v1388 = vpack.c.b16 %v926, %v920
    %v1389 = vpack.c.b16 %v927, %v921
    %v1390 = vpack.c.b16 %v928, %v922
    %v1391 = vpack.c.b16 %v929, %v923
    %v1392 = vpack.c.b16 %v930, %v924
    %v1393 = vpack.c.b16 %v937, %v931
    %v1394 = vpack.c.b16 %v938, %v932
    %v1395 = vpack.c.b16 %v939, %v933
    %v1396 = vpack.c.b16 %v940, %v934
    %v1397 = vpack.c.b16 %v941, %v935
    %v1398 = vpack.c.b16 %v942, %v936
    %v1399 = vpack.c.b16 %v949, %v943
    %v1400 = vpack.c.b16 %v950, %v944
    %v1401 = vpack.c.b16 %v951, %v945
    %v1402 = vpack.c.b16 %v952, %v946
    %v1403 = vpack.c.b16 %v953, %v947
    %v1404 = vpack.c.b16 %v954, %v948
    %v1405 = vpack.c.b16 %v961, %v955
    %v1406 = vpack.c.b16 %v962, %v956
    %v1407 = vpack.c.b16 %v963, %v957
    %v1408 = vpack.c.b16 %v964, %v958
    %v1409 = vpack.c.b16 %v965, %v959
    %v1410 = vpack.c.b16 %v966, %v960
    %v1411 = vpack.c.b16 %v973, %v967
    %v1412 = vpack.c.b16 %v974, %v968
    %v1413 = vpack.c.b16 %v975, %v969
    %v1414 = vpack.c.b16 %v976, %v970
    %v1415 = vpack.c.b16 %v977, %v971
    %v1416 = vpack.c.b16 %v978, %v972
    %v1417 = vpack.c.b16 %v985, %v979
    %v1418 = vpack.c.b16 %v986, %v980
    %v1419 = vpack.c.b16 %v987, %v981
    %v1420 = vpack.c.b16 %v988, %v982
    %v1421 = vpack.c.b16 %v989, %v983
    %v1422 = vpack.c.b16 %v990, %v984
    %v1423 = vpack.c.b16 %v997, %v991
    %v1424 = vpack.c.b16 %v998, %v992
    %v1425 = vpack.c.b16 %v999, %v993
    %v1426 = vpack.c.b16 %v1000, %v994
    %v1427 = vpack.c.b16 %v1001, %v995
    %v1428 = vpack.c.b16 %v1002, %v996
    %v1429 = vpack.c.b16 %v1009, %v1003
    %v1430 = vpack.c.b16 %v1010, %v1004
    %v1431 = vpack.c.b16 %v1011, %v1005
    %v1432 = vpack.c.b16 %v1012, %v1006
    %v1433 = vpack.c.b16 %v1013, %v1007
    %v1434 = vpack.c.b16 %v1014, %v1008
    %v1435 = vpack.c.b16 %v1021, %v1015
    %v1436 = vpack.c.b16 %v1022, %v1016
    %v1437 = vpack.c.b16 %v1023, %v1017
    %v1438 = vpack.c.b16 %v1024, %v1018
    %v1439 = vpack.c.b16 %v1025, %v1019
    %v1440 = vpack.c.b16 %v1026, %v1020
    %v1441 = vpack.c.b16 %v1033, %v1027
    %v1442 = vpack.c.b16 %v1034, %v1028
    %v1443 = vpack.c.b16 %v1035, %v1029
    %v1444 = vpack.c.b16 %v1036, %v1030
    %v1445 = vpack.c.b16 %v1037, %v1031
    %v1446 = vpack.c.b16 %v1038, %v1032
    %v1447 = vpack.c.b16 %v1045, %v1039
    %v1448 = vpack.c.b16 %v1046, %v1040
    %v1449 = vpack.c.b16 %v1047, %v1041
    %v1450 = vpack.c.b16 %v1048, %v1042
    %v1451 = vpack.c.b16 %v1049, %v1043
    %v1452 = vpack.c.b16 %v1050, %v1044
    %v1453 = vpack.c.b16 %v1057, %v1051
    %v1454 = vpack.c.b16 %v1058, %v1052
    %v1455 = vpack.c.b16 %v1059, %v1053
    %v1456 = vpack.c.b16 %v1060, %v1054
    %v1457 = vpack.c.b16 %v1061, %v1055
    %v1458 = vpack.c.b16 %v1062, %v1056
    %v1459 = vpack.c.b16 %v1069, %v1063
    %v1460 = vpack.c.b16 %v1070, %v1064
    %v1461 = vpack.c.b16 %v1071, %v1065
    %v1462 = vpack.c.b16 %v1072, %v1066
    %v1463 = vpack.c.b16 %v1073, %v1067
    %v1464 = vpack.c.b16 %v1074, %v1068
    %v1465 = vpack.c.b16 %v1081, %v1075
    %v1466 = vpack.c.b16 %v1082, %v1076
    %v1467 = vpack.c.b16 %v1083, %v1077
    %v1468 = vpack.c.b16 %v1084, %v1078
    %v1469 = vpack.c.b16 %v1085, %v1079
    %v1470 = vpack.c.b16 %v1086, %v1080
    %v1471 = vpack.c.b16 %v1093, %v1087
    %v1472 = vpack.c.b16 %v1094, %v1088
    %v1473 = vpack.c.b16 %v1095, %v1089
    %v1474 = vpack.c.b16 %v1096, %v1090
    %v1475 = vpack.c.b16 %v1097, %v1091
    %v1476 = vpack.c.b16 %v1098, %v1092
    %v1477 = vpack.c.b16 %v1105, %v1099
    %v1478 = vpack.c.b16 %v1106, %v1100
    %v1479 = vpack.c.b16 %v1107, %v1101
    %v1480 = vpack.c.b16 %v1108, %v1102
    %v1481 = vpack.c.b16 %v1109, %v1103
    %v1482 = vpack.c.b16 %v1110, %v1104
    %v1483 = vpack.c.b16 %v1117, %v1111
    %v1484 = vpack.c.b16 %v1118, %v1112
    %v1485 = vpack.c.b16 %v1119, %v1113
    %v1486 = vpack.c.b16 %v1120, %v1114
    %v1487 = vpack.c.b16 %v1121, %v1115
    %v1488 = vpack.c.b16 %v1122, %v1116
    %v1489 = vpack.c.b16 %v1129, %v1123
    %v1490 = vpack.c.b16 %v1130, %v1124
    %v1491 = vpack.c.b16 %v1131, %v1125
    %v1492 = vpack.c.b16 %v1132, %v1126
    %v1493 = vpack.c.b16 %v1133, %v1127
    %v1494 = vpack.c.b16 %v1134, %v1128
    %v1495 = vpack.c.b16 %v1141, %v1135
    %v1496 = vpack.c.b16 %v1142, %v1136
    %v1497 = vpack.c.b16 %v1143, %v1137
    %v1498 = vpack.c.b16 %v1144, %v1138
    %v1499 = vpack.c.b16 %v1145, %v1139
    %v1500 = vpack.c.b16 %v1146, %v1140
    %v1501 = vpack.c.b16 %v1153, %v1147
    %v1502 = vpack.c.b16 %v1154, %v1148
    %v1503 = vpack.c.b16 %v1155, %v1149
    %v1504 = vpack.c.b16 %v1156, %v1150
    %v1505 = vpack.c.b16 %v1157, %v1151
    %v1506 = vpack.c.b16 %v1158, %v1152
    %v1507 = vpack.c.b16 %v1165, %v1159
    %v1508 = vpack.c.b16 %v1166, %v1160
    %v1509 = vpack.c.b16 %v1167, %v1161
    %v1510 = vpack.c.b16 %v1168, %v1162
    %v1511 = vpack.c.b16 %v1169, %v1163
    %v1512 = vpack.c.b16 %v1170, %v1164
    %v1513 = vpack.c.b16 %v1177, %v1171
    %v1514 = vpack.c.b16 %v1178, %v1172
    %v1515 = vpack.c.b16 %v1179, %v1173
    %v1516 = vpack.c.b16 %v1180, %v1174
    %v1517 = vpack.c.b16 %v1181, %v1175
    %v1518 = vpack.c.b16 %v1182, %v1176
    %v1519 = vpack.c.b16 %v1189, %v1183
    %v1520 = vpack.c.b16 %v1190, %v1184
    %v1521 = vpack.c.b16 %v1191, %v1185
    %v1522 = vpack.c.b16 %v1192, %v1186
    %v1523 = vpack.c.b16 %v1193, %v1187
    %v1524 = vpack.c.b16 %v1194, %v1188
    %v1525 = vpack.c.b16 %v1201, %v1195
    %v1526 = vpack.c.b16 %v1202, %v1196
    %v1527 = vpack.c.b16 %v1203, %v1197
    %v1528 = vpack.c.b16 %v1204, %v1198
    %v1529 = vpack.c.b16 %v1205, %v1199
    %v1530 = vpack.c.b16 %v1206, %v1200
    %v1531 = vpack.c.b16 %v1213, %v1207
    %v1532 = vpack.c.b16 %v1214, %v1208
    %v1533 = vpack.c.b16 %v1215, %v1209
    %v1534 = vpack.c.b16 %v1216, %v1210
    %v1535 = vpack.c.b16 %v1217, %v1211
    %v1536 = vpack.c.b16 %v1218, %v1212
    %v1537 = vpack.c.b16 %v1225, %v1219
    %v1538 = vpack.c.b16 %v1226, %v1220
    %v1539 = vpack.c.b16 %v1227, %v1221
    %v1540 = vpack.c.b16 %v1228, %v1222
    %v1541 = vpack.c.b16 %v1229, %v1223
    %v1542 = vpack.c.b16 %v1230, %v1224
    %v1543 = vpack.c.b16 %v1237, %v1231
    %v1544 = vpack.c.b16 %v1238, %v1232
    %v1545 = vpack.c.b16 %v1239, %v1233
    %v1546 = vpack.c.b16 %v1240, %v1234
    %v1547 = vpack.c.b16 %v1241, %v1235
    %v1548 = vpack.c.b16 %v1242, %v1236
    %v1549 = vpack.c.b16 %v1249, %v1243
    %v1550 = vpack.c.b16 %v1250, %v1244
    %v1551 = vpack.c.b16 %v1251, %v1245
    %v1552 = vpack.c.b16 %v1252, %v1246
    %v1553 = vpack.c.b16 %v1253, %v1247
    %v1554 = vpack.c.b16 %v1254, %v1248
    %v1555 = vpack.c.b16 %v1261, %v1255
    %v1556 = vpack.c.b16 %v1262, %v1256
    %v1557 = vpack.c.b16 %v1263, %v1257
    %v1558 = vpack.c.b16 %v1264, %v1258
    %v1559 = vpack.c.b16 %v1265, %v1259
    %v1560 = vpack.c.b16 %v1266, %v1260
    %v1561 = vpack.c.b16 %v1273, %v1267
    %v1562 = vpack.c.b16 %v1274, %v1268
    %v1563 = vpack.c.b16 %v1275, %v1269
    %v1564 = vpack.c.b16 %v1276, %v1270
    %v1565 = vpack.c.b16 %v1277, %v1271
    %v1566 = vpack.c.b16 %v1278, %v1272
    %1855 = vmatpush.bf16.msra.mxu0 %v1321
    %1856 = vmatpush.bf16.msra.mxu0 %v1315
    %1857 = vmatpush.bf16.msra.mxu0 %v1309
    %1858 = vmatpush.bf16.msra.mxu0 %v1303
    %1859 = vmatpush.bf16.msra.mxu0 %v1297
    %1860 = vmatpush.bf16.msra.mxu0 %v1291
    %1861 = vmatpush.bf16.msra.mxu0 %v1285
    %1862 = vmatpush.bf16.msra.mxu0 %v1279
    %1863 = vmatmul.bf16.gmra.mxu0 %v107
    %v1864 = vpop.f32.mrf.mxu0
    %v1865 = vadd.f32 %v403, %v1864
    %v1866 = vpop.f32.mrf.mxu0
    %v1867 = vadd.f32 %v403, %v1866
    %1868 = vdwg.mxu0
    %1869 = vmatpush.bf16.msra.mxu0 %v1369
    %1870 = vmatpush.bf16.msra.mxu0 %v1363
    %1871 = vmatpush.bf16.msra.mxu0 %v1357
    %1872 = vmatpush.bf16.msra.mxu0 %v1351
    %1873 = vmatpush.bf16.msra.mxu0 %v1345
    %1874 = vmatpush.bf16.msra.mxu0 %v1339
    %1875 = vmatpush.bf16.msra.mxu0 %v1333
    %1876 = vmatpush.bf16.msra.mxu0 %v1327
    %1877 = vmatmul.bf16.gmra.mxu0 %v108
    %v1878 = vpop.f32.mrf.mxu0
    %v1879 = vadd.f32 %v1865, %v1878
    %v1880 = vpop.f32.mrf.mxu0
    %v1881 = vadd.f32 %v1867, %v1880
    %1882 = vdwg.mxu0
    %1883 = vmatpush.bf16.msra.mxu0 %v1417
    %1884 = vmatpush.bf16.msra.mxu0 %v1411
    %1885 = vmatpush.bf16.msra.mxu0 %v1405
    %1886 = vmatpush.bf16.msra.mxu0 %v1399
    %1887 = vmatpush.bf16.msra.mxu0 %v1393
    %1888 = vmatpush.bf16.msra.mxu0 %v1387
    %1889 = vmatpush.bf16.msra.mxu0 %v1381
    %1890 = vmatpush.bf16.msra.mxu0 %v1375
    %1891 = vmatmul.bf16.gmra.mxu0 %v109
    %v1892 = vpop.f32.mrf.mxu0
    %v1893 = vadd.f32 %v1879, %v1892
    %v1894 = vpop.f32.mrf.mxu0
    %v1895 = vadd.f32 %v1881, %v1894
    %1896 = vdwg.mxu0
    %1897 = vmatpush.bf16.msra.mxu0 %v1465
    %1898 = vmatpush.bf16.msra.mxu0 %v1459
    %1899 = vmatpush.bf16.msra.mxu0 %v1453
    %1900 = vmatpush.bf16.msra.mxu0 %v1447
    %1901 = vmatpush.bf16.msra.mxu0 %v1441
    %1902 = vmatpush.bf16.msra.mxu0 %v1435
    %1903 = vmatpush.bf16.msra.mxu0 %v1429
    %1904 = vmatpush.bf16.msra.mxu0 %v1423
    %1905 = vmatmul.bf16.gmra.mxu0 %v110
    %v1906 = vpop.f32.mrf.mxu0
    %v1907 = vadd.f32 %v1893, %v1906
    %v1908 = vpop.f32.mrf.mxu0
    %v1909 = vadd.f32 %v1895, %v1908
    %1910 = vdwg.mxu0
    %1911 = vmatpush.bf16.msra.mxu0 %v1513
    %1912 = vmatpush.bf16.msra.mxu0 %v1507
    %1913 = vmatpush.bf16.msra.mxu0 %v1501
    %1914 = vmatpush.bf16.msra.mxu0 %v1495
    %1915 = vmatpush.bf16.msra.mxu0 %v1489
    %1916 = vmatpush.bf16.msra.mxu0 %v1483
    %1917 = vmatpush.bf16.msra.mxu0 %v1477
    %1918 = vmatpush.bf16.msra.mxu0 %v1471
    %1919 = vmatmul.bf16.gmra.mxu0 %v111
    %v1920 = vpop.f32.mrf.mxu0
    %v1921 = vadd.f32 %v1907, %v1920
    %v1922 = vpop.f32.mrf.mxu0
    %v1923 = vadd.f32 %v1909, %v1922
    %1924 = vdwg.mxu0
    %1925 = vmatpush.bf16.msra.mxu0 %v1561
    %1926 = vmatpush.bf16.msra.mxu0 %v1555
    %1927 = vmatpush.bf16.msra.mxu0 %v1549
    %1928 = vmatpush.bf16.msra.mxu0 %v1543
    %1929 = vmatpush.bf16.msra.mxu0 %v1537
    %1930 = vmatpush.bf16.msra.mxu0 %v1531
    %1931 = vmatpush.bf16.msra.mxu0 %v1525
    %1932 = vmatpush.bf16.msra.mxu0 %v1519
    %1933 = vmatmul.bf16.gmra.mxu0 %v112
    %v1934 = vpop.f32.mrf.mxu0
    %v1935 = vadd.f32 %v1921, %v1934
    %v1936 = vpop.f32.mrf.mxu0
    %v1937 = vadd.f32 %v1923, %v1936
    %1938 = vdwg.mxu0
    %1939 = vmatpush.bf16.msra.mxu0 %v1322
    %1940 = vmatpush.bf16.msra.mxu0 %v1316
    %1941 = vmatpush.bf16.msra.mxu0 %v1310
    %1942 = vmatpush.bf16.msra.mxu0 %v1304
    %1943 = vmatpush.bf16.msra.mxu0 %v1298
    %1944 = vmatpush.bf16.msra.mxu0 %v1292
    %1945 = vmatpush.bf16.msra.mxu0 %v1286
    %1946 = vmatpush.bf16.msra.mxu0 %v1280
    %1947 = vmatmul.bf16.gmra.mxu0 %v107
    %v1948 = vpop.f32.mrf.mxu0
    %v1949 = vadd.f32 %v404, %v1948
    %v1950 = vpop.f32.mrf.mxu0
    %v1951 = vadd.f32 %v404, %v1950
    %1952 = vdwg.mxu0
    %1953 = vmatpush.bf16.msra.mxu0 %v1370
    %1954 = vmatpush.bf16.msra.mxu0 %v1364
    %1955 = vmatpush.bf16.msra.mxu0 %v1358
    %1956 = vmatpush.bf16.msra.mxu0 %v1352
    %1957 = vmatpush.bf16.msra.mxu0 %v1346
    %1958 = vmatpush.bf16.msra.mxu0 %v1340
    %1959 = vmatpush.bf16.msra.mxu0 %v1334
    %1960 = vmatpush.bf16.msra.mxu0 %v1328
    %1961 = vmatmul.bf16.gmra.mxu0 %v108
    %v1962 = vpop.f32.mrf.mxu0
    %v1963 = vadd.f32 %v1949, %v1962
    %v1964 = vpop.f32.mrf.mxu0
    %v1965 = vadd.f32 %v1951, %v1964
    %1966 = vdwg.mxu0
    %1967 = vmatpush.bf16.msra.mxu0 %v1418
    %1968 = vmatpush.bf16.msra.mxu0 %v1412
    %1969 = vmatpush.bf16.msra.mxu0 %v1406
    %1970 = vmatpush.bf16.msra.mxu0 %v1400
    %1971 = vmatpush.bf16.msra.mxu0 %v1394
    %1972 = vmatpush.bf16.msra.mxu0 %v1388
    %1973 = vmatpush.bf16.msra.mxu0 %v1382
    %1974 = vmatpush.bf16.msra.mxu0 %v1376
    %1975 = vmatmul.bf16.gmra.mxu0 %v109
    %v1976 = vpop.f32.mrf.mxu0
    %v1977 = vadd.f32 %v1963, %v1976
    %v1978 = vpop.f32.mrf.mxu0
    %v1979 = vadd.f32 %v1965, %v1978
    %1980 = vdwg.mxu0
    %1981 = vmatpush.bf16.msra.mxu0 %v1466
    %1982 = vmatpush.bf16.msra.mxu0 %v1460
    %1983 = vmatpush.bf16.msra.mxu0 %v1454
    %1984 = vmatpush.bf16.msra.mxu0 %v1448
    %1985 = vmatpush.bf16.msra.mxu0 %v1442
    %1986 = vmatpush.bf16.msra.mxu0 %v1436
    %1987 = vmatpush.bf16.msra.mxu0 %v1430
    %1988 = vmatpush.bf16.msra.mxu0 %v1424
    %1989 = vmatmul.bf16.gmra.mxu0 %v110
    %v1990 = vpop.f32.mrf.mxu0
    %v1991 = vadd.f32 %v1977, %v1990
    %v1992 = vpop.f32.mrf.mxu0
    %v1993 = vadd.f32 %v1979, %v1992
    %1994 = vdwg.mxu0
    %1995 = vmatpush.bf16.msra.mxu0 %v1514
    %1996 = vmatpush.bf16.msra.mxu0 %v1508
    %1997 = vmatpush.bf16.msra.mxu0 %v1502
    %1998 = vmatpush.bf16.msra.mxu0 %v1496
    %1999 = vmatpush.bf16.msra.mxu0 %v1490
    %2000 = vmatpush.bf16.msra.mxu0 %v1484
    %2001 = vmatpush.bf16.msra.mxu0 %v1478
    %2002 = vmatpush.bf16.msra.mxu0 %v1472
    %2003 = vmatmul.bf16.gmra.mxu0 %v111
    %v2004 = vpop.f32.mrf.mxu0
    %v2005 = vadd.f32 %v1991, %v2004
    %v2006 = vpop.f32.mrf.mxu0
    %v2007 = vadd.f32 %v1993, %v2006
    %2008 = vdwg.mxu0
    %2009 = vmatpush.bf16.msra.mxu0 %v1562
    %2010 = vmatpush.bf16.msra.mxu0 %v1556
    %2011 = vmatpush.bf16.msra.mxu0 %v1550
    %2012 = vmatpush.bf16.msra.mxu0 %v1544
    %2013 = vmatpush.bf16.msra.mxu0 %v1538
    %2014 = vmatpush.bf16.msra.mxu0 %v1532
    %2015 = vmatpush.bf16.msra.mxu0 %v1526
    %2016 = vmatpush.bf16.msra.mxu0 %v1520
    %2017 = vmatmul.bf16.gmra.mxu0 %v112
    %v2018 = vpop.f32.mrf.mxu0
    %v2019 = vadd.f32 %v2005, %v2018
    %v2020 = vpop.f32.mrf.mxu0
    %v2021 = vadd.f32 %v2007, %v2020
    %2022 = vdwg.mxu0
    %2023 = vmatpush.bf16.msra.mxu0 %v1323
    %2024 = vmatpush.bf16.msra.mxu0 %v1317
    %2025 = vmatpush.bf16.msra.mxu0 %v1311
    %2026 = vmatpush.bf16.msra.mxu0 %v1305
    %2027 = vmatpush.bf16.msra.mxu0 %v1299
    %2028 = vmatpush.bf16.msra.mxu0 %v1293
    %2029 = vmatpush.bf16.msra.mxu0 %v1287
    %2030 = vmatpush.bf16.msra.mxu0 %v1281
    %2031 = vmatmul.bf16.gmra.mxu0 %v107
    %v2032 = vpop.f32.mrf.mxu0
    %v2033 = vadd.f32 %v405, %v2032
    %v2034 = vpop.f32.mrf.mxu0
    %v2035 = vadd.f32 %v405, %v2034
    %2036 = vdwg.mxu0
    %2037 = vmatpush.bf16.msra.mxu0 %v1371
    %2038 = vmatpush.bf16.msra.mxu0 %v1365
    %2039 = vmatpush.bf16.msra.mxu0 %v1359
    %2040 = vmatpush.bf16.msra.mxu0 %v1353
    %2041 = vmatpush.bf16.msra.mxu0 %v1347
    %2042 = vmatpush.bf16.msra.mxu0 %v1341
    %2043 = vmatpush.bf16.msra.mxu0 %v1335
    %2044 = vmatpush.bf16.msra.mxu0 %v1329
    %2045 = vmatmul.bf16.gmra.mxu0 %v108
    %v2046 = vpop.f32.mrf.mxu0
    %v2047 = vadd.f32 %v2033, %v2046
    %v2048 = vpop.f32.mrf.mxu0
    %v2049 = vadd.f32 %v2035, %v2048
    %2050 = vdwg.mxu0
    %2051 = vmatpush.bf16.msra.mxu0 %v1419
    %2052 = vmatpush.bf16.msra.mxu0 %v1413
    %2053 = vmatpush.bf16.msra.mxu0 %v1407
    %2054 = vmatpush.bf16.msra.mxu0 %v1401
    %2055 = vmatpush.bf16.msra.mxu0 %v1395
    %2056 = vmatpush.bf16.msra.mxu0 %v1389
    %2057 = vmatpush.bf16.msra.mxu0 %v1383
    %2058 = vmatpush.bf16.msra.mxu0 %v1377
    %2059 = vmatmul.bf16.gmra.mxu0 %v109
    %v2060 = vpop.f32.mrf.mxu0
    %v2061 = vadd.f32 %v2047, %v2060
    %v2062 = vpop.f32.mrf.mxu0
    %v2063 = vadd.f32 %v2049, %v2062
    %2064 = vdwg.mxu0
    %2065 = vmatpush.bf16.msra.mxu0 %v1467
    %2066 = vmatpush.bf16.msra.mxu0 %v1461
    %2067 = vmatpush.bf16.msra.mxu0 %v1455
    %2068 = vmatpush.bf16.msra.mxu0 %v1449
    %2069 = vmatpush.bf16.msra.mxu0 %v1443
    %2070 = vmatpush.bf16.msra.mxu0 %v1437
    %2071 = vmatpush.bf16.msra.mxu0 %v1431
    %2072 = vmatpush.bf16.msra.mxu0 %v1425
    %2073 = vmatmul.bf16.gmra.mxu0 %v110
    %v2074 = vpop.f32.mrf.mxu0
    %v2075 = vadd.f32 %v2061, %v2074
    %v2076 = vpop.f32.mrf.mxu0
    %v2077 = vadd.f32 %v2063, %v2076
    %2078 = vdwg.mxu0
    %2079 = vmatpush.bf16.msra.mxu0 %v1515
    %2080 = vmatpush.bf16.msra.mxu0 %v1509
    %2081 = vmatpush.bf16.msra.mxu0 %v1503
    %2082 = vmatpush.bf16.msra.mxu0 %v1497
    %2083 = vmatpush.bf16.msra.mxu0 %v1491
    %2084 = vmatpush.bf16.msra.mxu0 %v1485
    %2085 = vmatpush.bf16.msra.mxu0 %v1479
    %2086 = vmatpush.bf16.msra.mxu0 %v1473
    %2087 = vmatmul.bf16.gmra.mxu0 %v111
    %v2088 = vpop.f32.mrf.mxu0
    %v2089 = vadd.f32 %v2075, %v2088
    %v2090 = vpop.f32.mrf.mxu0
    %v2091 = vadd.f32 %v2077, %v2090
    %2092 = vdwg.mxu0
    %2093 = vmatpush.bf16.msra.mxu0 %v1563
    %2094 = vmatpush.bf16.msra.mxu0 %v1557
    %2095 = vmatpush.bf16.msra.mxu0 %v1551
    %2096 = vmatpush.bf16.msra.mxu0 %v1545
    %2097 = vmatpush.bf16.msra.mxu0 %v1539
    %2098 = vmatpush.bf16.msra.mxu0 %v1533
    %2099 = vmatpush.bf16.msra.mxu0 %v1527
    %2100 = vmatpush.bf16.msra.mxu0 %v1521
    %2101 = vmatmul.bf16.gmra.mxu0 %v112
    %v2102 = vpop.f32.mrf.mxu0
    %v2103 = vadd.f32 %v2089, %v2102
    %v2104 = vpop.f32.mrf.mxu0
    %v2105 = vadd.f32 %v2091, %v2104
    %2106 = vdwg.mxu0
    %2107 = vmatpush.bf16.msra.mxu0 %v1324
    %2108 = vmatpush.bf16.msra.mxu0 %v1318
    %2109 = vmatpush.bf16.msra.mxu0 %v1312
    %2110 = vmatpush.bf16.msra.mxu0 %v1306
    %2111 = vmatpush.bf16.msra.mxu0 %v1300
    %2112 = vmatpush.bf16.msra.mxu0 %v1294
    %2113 = vmatpush.bf16.msra.mxu0 %v1288
    %2114 = vmatpush.bf16.msra.mxu0 %v1282
    %2115 = vmatmul.bf16.gmra.mxu0 %v107
    %v2116 = vpop.f32.mrf.mxu0
    %v2117 = vadd.f32 %v406, %v2116
    %v2118 = vpop.f32.mrf.mxu0
    %v2119 = vadd.f32 %v406, %v2118
    %2120 = vdwg.mxu0
    %2121 = vmatpush.bf16.msra.mxu0 %v1372
    %2122 = vmatpush.bf16.msra.mxu0 %v1366
    %2123 = vmatpush.bf16.msra.mxu0 %v1360
    %2124 = vmatpush.bf16.msra.mxu0 %v1354
    %2125 = vmatpush.bf16.msra.mxu0 %v1348
    %2126 = vmatpush.bf16.msra.mxu0 %v1342
    %2127 = vmatpush.bf16.msra.mxu0 %v1336
    %2128 = vmatpush.bf16.msra.mxu0 %v1330
    %2129 = vmatmul.bf16.gmra.mxu0 %v108
    %v2130 = vpop.f32.mrf.mxu0
    %v2131 = vadd.f32 %v2117, %v2130
    %v2132 = vpop.f32.mrf.mxu0
    %v2133 = vadd.f32 %v2119, %v2132
    %2134 = vdwg.mxu0
    %2135 = vmatpush.bf16.msra.mxu0 %v1420
    %2136 = vmatpush.bf16.msra.mxu0 %v1414
    %2137 = vmatpush.bf16.msra.mxu0 %v1408
    %2138 = vmatpush.bf16.msra.mxu0 %v1402
    %2139 = vmatpush.bf16.msra.mxu0 %v1396
    %2140 = vmatpush.bf16.msra.mxu0 %v1390
    %2141 = vmatpush.bf16.msra.mxu0 %v1384
    %2142 = vmatpush.bf16.msra.mxu0 %v1378
    %2143 = vmatmul.bf16.gmra.mxu0 %v109
    %v2144 = vpop.f32.mrf.mxu0
    %v2145 = vadd.f32 %v2131, %v2144
    %v2146 = vpop.f32.mrf.mxu0
    %v2147 = vadd.f32 %v2133, %v2146
    %2148 = vdwg.mxu0
    %2149 = vmatpush.bf16.msra.mxu0 %v1468
    %2150 = vmatpush.bf16.msra.mxu0 %v1462
    %2151 = vmatpush.bf16.msra.mxu0 %v1456
    %2152 = vmatpush.bf16.msra.mxu0 %v1450
    %2153 = vmatpush.bf16.msra.mxu0 %v1444
    %2154 = vmatpush.bf16.msra.mxu0 %v1438
    %2155 = vmatpush.bf16.msra.mxu0 %v1432
    %2156 = vmatpush.bf16.msra.mxu0 %v1426
    %2157 = vmatmul.bf16.gmra.mxu0 %v110
    %v2158 = vpop.f32.mrf.mxu0
    %v2159 = vadd.f32 %v2145, %v2158
    %v2160 = vpop.f32.mrf.mxu0
    %v2161 = vadd.f32 %v2147, %v2160
    %2162 = vdwg.mxu0
    %2163 = vmatpush.bf16.msra.mxu0 %v1516
    %2164 = vmatpush.bf16.msra.mxu0 %v1510
    %2165 = vmatpush.bf16.msra.mxu0 %v1504
    %2166 = vmatpush.bf16.msra.mxu0 %v1498
    %2167 = vmatpush.bf16.msra.mxu0 %v1492
    %2168 = vmatpush.bf16.msra.mxu0 %v1486
    %2169 = vmatpush.bf16.msra.mxu0 %v1480
    %2170 = vmatpush.bf16.msra.mxu0 %v1474
    %2171 = vmatmul.bf16.gmra.mxu0 %v111
    %v2172 = vpop.f32.mrf.mxu0
    %v2173 = vadd.f32 %v2159, %v2172
    %v2174 = vpop.f32.mrf.mxu0
    %v2175 = vadd.f32 %v2161, %v2174
    %2176 = vdwg.mxu0
    %2177 = vmatpush.bf16.msra.mxu0 %v1564
    %2178 = vmatpush.bf16.msra.mxu0 %v1558
    %2179 = vmatpush.bf16.msra.mxu0 %v1552
    %2180 = vmatpush.bf16.msra.mxu0 %v1546
    %2181 = vmatpush.bf16.msra.mxu0 %v1540
    %2182 = vmatpush.bf16.msra.mxu0 %v1534
    %2183 = vmatpush.bf16.msra.mxu0 %v1528
    %2184 = vmatpush.bf16.msra.mxu0 %v1522
    %2185 = vmatmul.bf16.gmra.mxu0 %v112
    %v2186 = vpop.f32.mrf.mxu0
    %v2187 = vadd.f32 %v2173, %v2186
    %v2188 = vpop.f32.mrf.mxu0
    %v2189 = vadd.f32 %v2175, %v2188
    %2190 = vdwg.mxu0
    %2191 = vmatpush.bf16.msra.mxu0 %v1325
    %2192 = vmatpush.bf16.msra.mxu0 %v1319
    %2193 = vmatpush.bf16.msra.mxu0 %v1313
    %2194 = vmatpush.bf16.msra.mxu0 %v1307
    %2195 = vmatpush.bf16.msra.mxu0 %v1301
    %2196 = vmatpush.bf16.msra.mxu0 %v1295
    %2197 = vmatpush.bf16.msra.mxu0 %v1289
    %2198 = vmatpush.bf16.msra.mxu0 %v1283
    %2199 = vmatmul.bf16.gmra.mxu0 %v107
    %v2200 = vpop.f32.mrf.mxu0
    %v2201 = vadd.f32 %v407, %v2200
    %v2202 = vpop.f32.mrf.mxu0
    %v2203 = vadd.f32 %v407, %v2202
    %2204 = vdwg.mxu0
    %2205 = vmatpush.bf16.msra.mxu0 %v1373
    %2206 = vmatpush.bf16.msra.mxu0 %v1367
    %2207 = vmatpush.bf16.msra.mxu0 %v1361
    %2208 = vmatpush.bf16.msra.mxu0 %v1355
    %2209 = vmatpush.bf16.msra.mxu0 %v1349
    %2210 = vmatpush.bf16.msra.mxu0 %v1343
    %2211 = vmatpush.bf16.msra.mxu0 %v1337
    %2212 = vmatpush.bf16.msra.mxu0 %v1331
    %2213 = vmatmul.bf16.gmra.mxu0 %v108
    %v2214 = vpop.f32.mrf.mxu0
    %v2215 = vadd.f32 %v2201, %v2214
    %v2216 = vpop.f32.mrf.mxu0
    %v2217 = vadd.f32 %v2203, %v2216
    %2218 = vdwg.mxu0
    %2219 = vmatpush.bf16.msra.mxu0 %v1421
    %2220 = vmatpush.bf16.msra.mxu0 %v1415
    %2221 = vmatpush.bf16.msra.mxu0 %v1409
    %2222 = vmatpush.bf16.msra.mxu0 %v1403
    %2223 = vmatpush.bf16.msra.mxu0 %v1397
    %2224 = vmatpush.bf16.msra.mxu0 %v1391
    %2225 = vmatpush.bf16.msra.mxu0 %v1385
    %2226 = vmatpush.bf16.msra.mxu0 %v1379
    %2227 = vmatmul.bf16.gmra.mxu0 %v109
    %v2228 = vpop.f32.mrf.mxu0
    %v2229 = vadd.f32 %v2215, %v2228
    %v2230 = vpop.f32.mrf.mxu0
    %v2231 = vadd.f32 %v2217, %v2230
    %2232 = vdwg.mxu0
    %2233 = vmatpush.bf16.msra.mxu0 %v1469
    %2234 = vmatpush.bf16.msra.mxu0 %v1463
    %2235 = vmatpush.bf16.msra.mxu0 %v1457
    %2236 = vmatpush.bf16.msra.mxu0 %v1451
    %2237 = vmatpush.bf16.msra.mxu0 %v1445
    %2238 = vmatpush.bf16.msra.mxu0 %v1439
    %2239 = vmatpush.bf16.msra.mxu0 %v1433
    %2240 = vmatpush.bf16.msra.mxu0 %v1427
    %2241 = vmatmul.bf16.gmra.mxu0 %v110
    %v2242 = vpop.f32.mrf.mxu0
    %v2243 = vadd.f32 %v2229, %v2242
    %v2244 = vpop.f32.mrf.mxu0
    %v2245 = vadd.f32 %v2231, %v2244
    %2246 = vdwg.mxu0
    %2247 = vmatpush.bf16.msra.mxu0 %v1517
    %2248 = vmatpush.bf16.msra.mxu0 %v1511
    %2249 = vmatpush.bf16.msra.mxu0 %v1505
    %2250 = vmatpush.bf16.msra.mxu0 %v1499
    %2251 = vmatpush.bf16.msra.mxu0 %v1493
    %2252 = vmatpush.bf16.msra.mxu0 %v1487
    %2253 = vmatpush.bf16.msra.mxu0 %v1481
    %2254 = vmatpush.bf16.msra.mxu0 %v1475
    %2255 = vmatmul.bf16.gmra.mxu0 %v111
    %v2256 = vpop.f32.mrf.mxu0
    %v2257 = vadd.f32 %v2243, %v2256
    %v2258 = vpop.f32.mrf.mxu0
    %v2259 = vadd.f32 %v2245, %v2258
    %2260 = vdwg.mxu0
    %2261 = vmatpush.bf16.msra.mxu0 %v1565
    %2262 = vmatpush.bf16.msra.mxu0 %v1559
    %2263 = vmatpush.bf16.msra.mxu0 %v1553
    %2264 = vmatpush.bf16.msra.mxu0 %v1547
    %2265 = vmatpush.bf16.msra.mxu0 %v1541
    %2266 = vmatpush.bf16.msra.mxu0 %v1535
    %2267 = vmatpush.bf16.msra.mxu0 %v1529
    %2268 = vmatpush.bf16.msra.mxu0 %v1523
    %2269 = vmatmul.bf16.gmra.mxu0 %v112
    %v2270 = vpop.f32.mrf.mxu0
    %v2271 = vadd.f32 %v2257, %v2270
    %v2272 = vpop.f32.mrf.mxu0
    %v2273 = vadd.f32 %v2259, %v2272
    %2274 = vdwg.mxu0
    %2275 = vmatpush.bf16.msra.mxu0 %v1326
    %2276 = vmatpush.bf16.msra.mxu0 %v1320
    %2277 = vmatpush.bf16.msra.mxu0 %v1314
    %2278 = vmatpush.bf16.msra.mxu0 %v1308
    %2279 = vmatpush.bf16.msra.mxu0 %v1302
    %2280 = vmatpush.bf16.msra.mxu0 %v1296
    %2281 = vmatpush.bf16.msra.mxu0 %v1290
    %2282 = vmatpush.bf16.msra.mxu0 %v1284
    %2283 = vmatmul.bf16.gmra.mxu0 %v107
    %v2284 = vpop.f32.mrf.mxu0
    %v2285 = vadd.f32 %v408, %v2284
    %v2286 = vpop.f32.mrf.mxu0
    %v2287 = vadd.f32 %v408, %v2286
    %2288 = vdwg.mxu0
    %2289 = vmatpush.bf16.msra.mxu0 %v1374
    %2290 = vmatpush.bf16.msra.mxu0 %v1368
    %2291 = vmatpush.bf16.msra.mxu0 %v1362
    %2292 = vmatpush.bf16.msra.mxu0 %v1356
    %2293 = vmatpush.bf16.msra.mxu0 %v1350
    %2294 = vmatpush.bf16.msra.mxu0 %v1344
    %2295 = vmatpush.bf16.msra.mxu0 %v1338
    %2296 = vmatpush.bf16.msra.mxu0 %v1332
    %2297 = vmatmul.bf16.gmra.mxu0 %v108
    %v2298 = vpop.f32.mrf.mxu0
    %v2299 = vadd.f32 %v2285, %v2298
    %v2300 = vpop.f32.mrf.mxu0
    %v2301 = vadd.f32 %v2287, %v2300
    %2302 = vdwg.mxu0
    %2303 = vmatpush.bf16.msra.mxu0 %v1422
    %2304 = vmatpush.bf16.msra.mxu0 %v1416
    %2305 = vmatpush.bf16.msra.mxu0 %v1410
    %2306 = vmatpush.bf16.msra.mxu0 %v1404
    %2307 = vmatpush.bf16.msra.mxu0 %v1398
    %2308 = vmatpush.bf16.msra.mxu0 %v1392
    %2309 = vmatpush.bf16.msra.mxu0 %v1386
    %2310 = vmatpush.bf16.msra.mxu0 %v1380
    %2311 = vmatmul.bf16.gmra.mxu0 %v109
    %v2312 = vpop.f32.mrf.mxu0
    %v2313 = vadd.f32 %v2299, %v2312
    %v2314 = vpop.f32.mrf.mxu0
    %v2315 = vadd.f32 %v2301, %v2314
    %2316 = vdwg.mxu0
    %2317 = vmatpush.bf16.msra.mxu0 %v1470
    %2318 = vmatpush.bf16.msra.mxu0 %v1464
    %2319 = vmatpush.bf16.msra.mxu0 %v1458
    %2320 = vmatpush.bf16.msra.mxu0 %v1452
    %2321 = vmatpush.bf16.msra.mxu0 %v1446
    %2322 = vmatpush.bf16.msra.mxu0 %v1440
    %2323 = vmatpush.bf16.msra.mxu0 %v1434
    %2324 = vmatpush.bf16.msra.mxu0 %v1428
    %2325 = vmatmul.bf16.gmra.mxu0 %v110
    %v2326 = vpop.f32.mrf.mxu0
    %v2327 = vadd.f32 %v2313, %v2326
    %v2328 = vpop.f32.mrf.mxu0
    %v2329 = vadd.f32 %v2315, %v2328
    %2330 = vdwg.mxu0
    %2331 = vmatpush.bf16.msra.mxu0 %v1518
    %2332 = vmatpush.bf16.msra.mxu0 %v1512
    %2333 = vmatpush.bf16.msra.mxu0 %v1506
    %2334 = vmatpush.bf16.msra.mxu0 %v1500
    %2335 = vmatpush.bf16.msra.mxu0 %v1494
    %2336 = vmatpush.bf16.msra.mxu0 %v1488
    %2337 = vmatpush.bf16.msra.mxu0 %v1482
    %2338 = vmatpush.bf16.msra.mxu0 %v1476
    %2339 = vmatmul.bf16.gmra.mxu0 %v111
    %v2340 = vpop.f32.mrf.mxu0
    %v2341 = vadd.f32 %v2327, %v2340
    %v2342 = vpop.f32.mrf.mxu0
    %v2343 = vadd.f32 %v2329, %v2342
    %2344 = vdwg.mxu0
    %2345 = vmatpush.bf16.msra.mxu0 %v1566
    %2346 = vmatpush.bf16.msra.mxu0 %v1560
    %2347 = vmatpush.bf16.msra.mxu0 %v1554
    %2348 = vmatpush.bf16.msra.mxu0 %v1548
    %2349 = vmatpush.bf16.msra.mxu0 %v1542
    %2350 = vmatpush.bf16.msra.mxu0 %v1536
    %2351 = vmatpush.bf16.msra.mxu0 %v1530
    %2352 = vmatpush.bf16.msra.mxu0 %v1524
    %2353 = vmatmul.bf16.gmra.mxu0 %v112
    %v2354 = vpop.f32.mrf.mxu0
    %v2355 = vadd.f32 %v2341, %v2354
    %v2356 = vpop.f32.mrf.mxu0
    %v2357 = vadd.f32 %v2343, %v2356
    %2358 = vdwg.mxu0
    %v2359 = vmax.f32 %v1935, 0.0
    %v2360 = vmax.f32 %v2019, 0.0
    %v2361 = vmax.f32 %v2103, 0.0
    %v2362 = vmax.f32 %v2187, 0.0
    %v2363 = vmax.f32 %v2271, 0.0
    %v2364 = vmax.f32 %v2355, 0.0
    %v2365 = vmax.f32 %v1937, 0.0
    %v2366 = vmax.f32 %v2021, 0.0
    %v2367 = vmax.f32 %v2105, 0.0
    %v2368 = vmax.f32 %v2189, 0.0
    %v2369 = vmax.f32 %v2273, 0.0
    %v2370 = vmax.f32 %v2357, 0.0
    %v2371 = vpack.c.bf16 %v2365, %v2359
    %v2372 = vpack.c.bf16 %v2366, %v2360
    %v2373 = vpack.c.bf16 %v2367, %v2361
    %v2374 = vpack.c.bf16 %v2368, %v2362
    %v2375 = vpack.c.bf16 %v2369, %v2363
    %v2376 = vpack.c.bf16 %v2370, %v2364
    %v2377 = vld [vmem:[#allocation8] sm:$0xff]
    %v2378 = vld [vmem:[#allocation8 + $0x8] sm:$0xff]
    %v2379 = vld [vmem:[#allocation8 + $0x10] sm:$0xff]
    %v2380 = vld [vmem:[#allocation8 + $0x18] sm:$0xff]
    %v2381 = vld [vmem:[#allocation8 + $0x20] sm:$0xff]
    %v2382 = vld [vmem:[#allocation8 + $0x28] sm:$0xff]
    %v2383 = vld [vmem:[#allocation8 + $0x30] sm:$0xff]
    %v2384 = vld [vmem:[#allocation8 + $0x38] sm:$0xff]
    %v2385 = vld [vmem:[#allocation8 + $0x40] sm:$0xff]
    %v2386 = vld [vmem:[#allocation8 + $0x48] sm:$0xff]
    %v2387 = vld [vmem:[#allocation8 + $0x50] sm:$0xff]
    %v2388 = vld [vmem:[#allocation8 + $0x58] sm:$0xff]
    %v2389 = vld [vmem:[#allocation8 + $0x60] sm:$0xff]
    %v2390 = vld [vmem:[#allocation8 + $0x68] sm:$0xff]
    %v2391 = vld [vmem:[#allocation8 + $0x70] sm:$0xff]
    %v2392 = vld [vmem:[#allocation8 + $0x78] sm:$0xff]
    %v2393 = vld [vmem:[#allocation8 + $0x80] sm:$0xff]
    %v2394 = vld [vmem:[#allocation8 + $0x88] sm:$0xff]
    %v2395 = vld [vmem:[#allocation8 + $0x90] sm:$0xff]
    %v2396 = vld [vmem:[#allocation8 + $0x98] sm:$0xff]
    %v2397 = vld [vmem:[#allocation8 + $0xa0] sm:$0xff]
    %v2398 = vld [vmem:[#allocation8 + $0xa8] sm:$0xff]
    %v2399 = vld [vmem:[#allocation8 + $0xb0] sm:$0xff]
    %v2400 = vld [vmem:[#allocation8 + $0xb8] sm:$0xff]
    %v2401 = vld [vmem:[#allocation8 + $0xc0] sm:$0xff]
    %v2402 = vld [vmem:[#allocation8 + $0xc8] sm:$0xff]
    %v2403 = vld [vmem:[#allocation8 + $0xd0] sm:$0xff]
    %v2404 = vld [vmem:[#allocation8 + $0xd8] sm:$0xff]
    %v2405 = vld [vmem:[#allocation8 + $0xe0] sm:$0xff]
    %v2406 = vld [vmem:[#allocation8 + $0xe8] sm:$0xff]
    %v2407 = vld [vmem:[#allocation8 + $0xf0] sm:$0xff]
    %v2408 = vld [vmem:[#allocation8 + $0xf8] sm:$0xff]
    %v2409 = vld [vmem:[#allocation8 + $0x100] sm:$0xff]
    %v2410 = vld [vmem:[#allocation8 + $0x108] sm:$0xff]
    %v2411 = vld [vmem:[#allocation8 + $0x110] sm:$0xff]
    %v2412 = vld [vmem:[#allocation8 + $0x118] sm:$0xff]
    %v2413 = vld [vmem:[#allocation8 + $0x120] sm:$0xff]
    %v2414 = vld [vmem:[#allocation8 + $0x128] sm:$0xff]
    %v2415 = vld [vmem:[#allocation8 + $0x130] sm:$0xff]
    %v2416 = vld [vmem:[#allocation8 + $0x138] sm:$0xff]
    %v2417 = vld [vmem:[#allocation8 + $0x140] sm:$0xff]
    %v2418 = vld [vmem:[#allocation8 + $0x148] sm:$0xff]
    %v2419 = vld [vmem:[#allocation8 + $0x150] sm:$0xff]
    %v2420 = vld [vmem:[#allocation8 + $0x158] sm:$0xff]
    %v2421 = vld [vmem:[#allocation8 + $0x160] sm:$0xff]
    %v2422 = vld [vmem:[#allocation8 + $0x168] sm:$0xff]
    %v2423 = vld [vmem:[#allocation8 + $0x170] sm:$0xff]
    %v2424 = vld [vmem:[#allocation8 + $0x178] sm:$0xff]
    %v2425 = vld [vmem:[#allocation8 + $0x180] sm:$0xff]
    %v2426 = vld [vmem:[#allocation8 + $0x188] sm:$0xff]
    %v2427 = vld [vmem:[#allocation8 + $0x190] sm:$0xff]
    %v2428 = vld [vmem:[#allocation8 + $0x198] sm:$0xff]
    %v2429 = vld [vmem:[#allocation8 + $0x1a0] sm:$0xff]
    %v2430 = vld [vmem:[#allocation8 + $0x1a8] sm:$0xff]
    %v2431 = vld [vmem:[#allocation8 + $0x1b0] sm:$0xff]
    %v2432 = vld [vmem:[#allocation8 + $0x1b8] sm:$0xff]
    %v2433 = vld [vmem:[#allocation8 + $0x1c0] sm:$0xff]
    %v2434 = vld [vmem:[#allocation8 + $0x1c8] sm:$0xff]
    %v2435 = vld [vmem:[#allocation8 + $0x1d0] sm:$0xff]
    %v2436 = vld [vmem:[#allocation8 + $0x1d8] sm:$0xff]
    %v2437 = vld [vmem:[#allocation8 + $0x1e0] sm:$0xff]
    %v2438 = vld [vmem:[#allocation8 + $0x1e8] sm:$0xff]
    %v2439 = vld [vmem:[#allocation8 + $0x1f0] sm:$0xff]
    %v2440 = vld [vmem:[#allocation8 + $0x1f8] sm:$0xff]
    %v2441 = vld [vmem:[#allocation8 + $0x200] sm:$0xff]
    %v2442 = vld [vmem:[#allocation8 + $0x208] sm:$0xff]
    %v2443 = vld [vmem:[#allocation8 + $0x210] sm:$0xff]
    %v2444 = vld [vmem:[#allocation8 + $0x218] sm:$0xff]
    %v2445 = vld [vmem:[#allocation8 + $0x220] sm:$0xff]
    %v2446 = vld [vmem:[#allocation8 + $0x228] sm:$0xff]
    %v2447 = vld [vmem:[#allocation8 + $0x230] sm:$0xff]
    %v2448 = vld [vmem:[#allocation8 + $0x238] sm:$0xff]
    %v2449 = vld [vmem:[#allocation8 + $0x240] sm:$0xff]
    %v2450 = vld [vmem:[#allocation8 + $0x248] sm:$0xff]
    %v2451 = vld [vmem:[#allocation8 + $0x250] sm:$0xff]
    %v2452 = vld [vmem:[#allocation8 + $0x258] sm:$0xff]
    %v2453 = vld [vmem:[#allocation8 + $0x260] sm:$0xff]
    %v2454 = vld [vmem:[#allocation8 + $0x268] sm:$0xff]
    %v2455 = vld [vmem:[#allocation8 + $0x270] sm:$0xff]
    %v2456 = vld [vmem:[#allocation8 + $0x278] sm:$0xff]
    %v2457 = vld [vmem:[#allocation8 + $0x280] sm:$0xff]
    %v2458 = vld [vmem:[#allocation8 + $0x288] sm:$0xff]
    %v2459 = vld [vmem:[#allocation8 + $0x290] sm:$0xff]
    %v2460 = vld [vmem:[#allocation8 + $0x298] sm:$0xff]
    %v2461 = vld [vmem:[#allocation8 + $0x2a0] sm:$0xff]
    %v2462 = vld [vmem:[#allocation8 + $0x2a8] sm:$0xff]
    %v2463 = vld [vmem:[#allocation8 + $0x2b0] sm:$0xff]
    %v2464 = vld [vmem:[#allocation8 + $0x2b8] sm:$0xff]
    %v2465 = vld [vmem:[#allocation8 + $0x2c0] sm:$0xff]
    %v2466 = vld [vmem:[#allocation8 + $0x2c8] sm:$0xff]
    %v2467 = vld [vmem:[#allocation8 + $0x2d0] sm:$0xff]
    %v2468 = vld [vmem:[#allocation8 + $0x2d8] sm:$0xff]
    %v2469 = vld [vmem:[#allocation8 + $0x2e0] sm:$0xff]
    %v2470 = vld [vmem:[#allocation8 + $0x2e8] sm:$0xff]
    %v2471 = vld [vmem:[#allocation8 + $0x2f0] sm:$0xff]
    %v2472 = vld [vmem:[#allocation8 + $0x2f8] sm:$0xff]
    %v2473 = vld [vmem:[#allocation8 + $0x300] sm:$0xff]
    %v2474 = vld [vmem:[#allocation8 + $0x308] sm:$0xff]
    %v2475 = vld [vmem:[#allocation8 + $0x310] sm:$0xff]
    %v2476 = vld [vmem:[#allocation8 + $0x318] sm:$0xff]
    %v2477 = vld [vmem:[#allocation8 + $0x320] sm:$0xff]
    %v2478 = vld [vmem:[#allocation8 + $0x328] sm:$0xff]
    %v2479 = vld [vmem:[#allocation8 + $0x330] sm:$0xff]
    %v2480 = vld [vmem:[#allocation8 + $0x338] sm:$0xff]
    %v2481 = vld [vmem:[#allocation8 + $0x340] sm:$0xff]
    %v2482 = vld [vmem:[#allocation8 + $0x348] sm:$0xff]
    %v2483 = vld [vmem:[#allocation8 + $0x350] sm:$0xff]
    %v2484 = vld [vmem:[#allocation8 + $0x358] sm:$0xff]
    %v2485 = vld [vmem:[#allocation8 + $0x360] sm:$0xff]
    %v2486 = vld [vmem:[#allocation8 + $0x368] sm:$0xff]
    %v2487 = vld [vmem:[#allocation8 + $0x370] sm:$0xff]
    %v2488 = vld [vmem:[#allocation8 + $0x378] sm:$0xff]
    %v2489 = vld [vmem:[#allocation8 + $0x380] sm:$0xff]
    %v2490 = vld [vmem:[#allocation8 + $0x388] sm:$0xff]
    %v2491 = vld [vmem:[#allocation8 + $0x390] sm:$0xff]
    %v2492 = vld [vmem:[#allocation8 + $0x398] sm:$0xff]
    %v2493 = vld [vmem:[#allocation8 + $0x3a0] sm:$0xff]
    %v2494 = vld [vmem:[#allocation8 + $0x3a8] sm:$0xff]
    %v2495 = vld [vmem:[#allocation8 + $0x3b0] sm:$0xff]
    %v2496 = vld [vmem:[#allocation8 + $0x3b8] sm:$0xff]
    %v2497 = vld [vmem:[#allocation8 + $0x3c0] sm:$0xff]
    %v2498 = vld [vmem:[#allocation8 + $0x3c8] sm:$0xff]
    %v2499 = vld [vmem:[#allocation8 + $0x3d0] sm:$0xff]
    %v2500 = vld [vmem:[#allocation8 + $0x3d8] sm:$0xff]
    %v2501 = vld [vmem:[#allocation8 + $0x3e0] sm:$0xff]
    %v2502 = vld [vmem:[#allocation8 + $0x3e8] sm:$0xff]
    %v2503 = vld [vmem:[#allocation8 + $0x3f0] sm:$0xff]
    %v2504 = vld [vmem:[#allocation8 + $0x3f8] sm:$0xff]
    %v2505 = vld [vmem:[#allocation8 + $0x400] sm:$0xff]
    %v2506 = vld [vmem:[#allocation8 + $0x408] sm:$0xff]
    %v2507 = vld [vmem:[#allocation8 + $0x410] sm:$0xff]
    %v2508 = vld [vmem:[#allocation8 + $0x418] sm:$0xff]
    %v2509 = vld [vmem:[#allocation8 + $0x420] sm:$0xff]
    %v2510 = vld [vmem:[#allocation8 + $0x428] sm:$0xff]
    %v2511 = vld [vmem:[#allocation8 + $0x430] sm:$0xff]
    %v2512 = vld [vmem:[#allocation8 + $0x438] sm:$0xff]
    %v2513 = vld [vmem:[#allocation8 + $0x440] sm:$0xff]
    %v2514 = vld [vmem:[#allocation8 + $0x448] sm:$0xff]
    %v2515 = vld [vmem:[#allocation8 + $0x450] sm:$0xff]
    %v2516 = vld [vmem:[#allocation8 + $0x458] sm:$0xff]
    %v2517 = vld [vmem:[#allocation8 + $0x460] sm:$0xff]
    %v2518 = vld [vmem:[#allocation8 + $0x468] sm:$0xff]
    %v2519 = vld [vmem:[#allocation8 + $0x470] sm:$0xff]
    %v2520 = vld [vmem:[#allocation8 + $0x478] sm:$0xff]
    %v2521 = vld [vmem:[#allocation8 + $0x480] sm:$0xff]
    %v2522 = vld [vmem:[#allocation8 + $0x488] sm:$0xff]
    %v2523 = vld [vmem:[#allocation8 + $0x490] sm:$0xff]
    %v2524 = vld [vmem:[#allocation8 + $0x498] sm:$0xff]
    %v2525 = vld [vmem:[#allocation8 + $0x4a0] sm:$0xff]
    %v2526 = vld [vmem:[#allocation8 + $0x4a8] sm:$0xff]
    %v2527 = vld [vmem:[#allocation8 + $0x4b0] sm:$0xff]
    %v2528 = vld [vmem:[#allocation8 + $0x4b8] sm:$0xff]
    %v2529 = vld [vmem:[#allocation8 + $0x4c0] sm:$0xff]
    %v2530 = vld [vmem:[#allocation8 + $0x4c8] sm:$0xff]
    %v2531 = vld [vmem:[#allocation8 + $0x4d0] sm:$0xff]
    %v2532 = vld [vmem:[#allocation8 + $0x4d8] sm:$0xff]
    %v2533 = vld [vmem:[#allocation8 + $0x4e0] sm:$0xff]
    %v2534 = vld [vmem:[#allocation8 + $0x4e8] sm:$0xff]
    %v2535 = vld [vmem:[#allocation8 + $0x4f0] sm:$0xff]
    %v2536 = vld [vmem:[#allocation8 + $0x4f8] sm:$0xff]
    %v2537 = vld [vmem:[#allocation8 + $0x500] sm:$0xff]
    %v2538 = vld [vmem:[#allocation8 + $0x508] sm:$0xff]
    %v2539 = vld [vmem:[#allocation8 + $0x510] sm:$0xff]
    %v2540 = vld [vmem:[#allocation8 + $0x518] sm:$0xff]
    %v2541 = vld [vmem:[#allocation8 + $0x520] sm:$0xff]
    %v2542 = vld [vmem:[#allocation8 + $0x528] sm:$0xff]
    %v2543 = vld [vmem:[#allocation8 + $0x530] sm:$0xff]
    %v2544 = vld [vmem:[#allocation8 + $0x538] sm:$0xff]
    %v2545 = vld [vmem:[#allocation8 + $0x540] sm:$0xff]
    %v2546 = vld [vmem:[#allocation8 + $0x548] sm:$0xff]
    %v2547 = vld [vmem:[#allocation8 + $0x550] sm:$0xff]
    %v2548 = vld [vmem:[#allocation8 + $0x558] sm:$0xff]
    %v2549 = vld [vmem:[#allocation8 + $0x560] sm:$0xff]
    %v2550 = vld [vmem:[#allocation8 + $0x568] sm:$0xff]
    %v2551 = vld [vmem:[#allocation8 + $0x570] sm:$0xff]
    %v2552 = vld [vmem:[#allocation8 + $0x578] sm:$0xff]
    %v2553 = vld [vmem:[#allocation8 + $0x580] sm:$0xff]
    %v2554 = vld [vmem:[#allocation8 + $0x588] sm:$0xff]
    %v2555 = vld [vmem:[#allocation8 + $0x590] sm:$0xff]
    %v2556 = vld [vmem:[#allocation8 + $0x598] sm:$0xff]
    %v2557 = vld [vmem:[#allocation8 + $0x5a0] sm:$0xff]
    %v2558 = vld [vmem:[#allocation8 + $0x5a8] sm:$0xff]
    %v2559 = vld [vmem:[#allocation8 + $0x5b0] sm:$0xff]
    %v2560 = vld [vmem:[#allocation8 + $0x5b8] sm:$0xff]
    %v2561 = vld [vmem:[#allocation8 + $0x5c0] sm:$0xff]
    %v2562 = vld [vmem:[#allocation8 + $0x5c8] sm:$0xff]
    %v2563 = vld [vmem:[#allocation8 + $0x5d0] sm:$0xff]
    %v2564 = vld [vmem:[#allocation8 + $0x5d8] sm:$0xff]
    %v2565 = vld [vmem:[#allocation8 + $0x5e0] sm:$0xff]
    %v2566 = vld [vmem:[#allocation8 + $0x5e8] sm:$0xff]
    %v2567 = vld [vmem:[#allocation8 + $0x5f0] sm:$0xff]
    %v2568 = vld [vmem:[#allocation8 + $0x5f8] sm:$0xff]
    %v2569 = vld [vmem:[#allocation8 + $0x600] sm:$0xff]
    %v2570 = vld [vmem:[#allocation8 + $0x608] sm:$0xff]
    %v2571 = vld [vmem:[#allocation8 + $0x610] sm:$0xff]
    %v2572 = vld [vmem:[#allocation8 + $0x618] sm:$0xff]
    %v2573 = vld [vmem:[#allocation8 + $0x620] sm:$0xff]
    %v2574 = vld [vmem:[#allocation8 + $0x628] sm:$0xff]
    %v2575 = vld [vmem:[#allocation8 + $0x630] sm:$0xff]
    %v2576 = vld [vmem:[#allocation8 + $0x638] sm:$0xff]
    %v2577 = vld [vmem:[#allocation8 + $0x640] sm:$0xff]
    %v2578 = vld [vmem:[#allocation8 + $0x648] sm:$0xff]
    %v2579 = vld [vmem:[#allocation8 + $0x650] sm:$0xff]
    %v2580 = vld [vmem:[#allocation8 + $0x658] sm:$0xff]
    %v2581 = vld [vmem:[#allocation8 + $0x660] sm:$0xff]
    %v2582 = vld [vmem:[#allocation8 + $0x668] sm:$0xff]
    %v2583 = vld [vmem:[#allocation8 + $0x670] sm:$0xff]
    %v2584 = vld [vmem:[#allocation8 + $0x678] sm:$0xff]
    %v2585 = vld [vmem:[#allocation8 + $0x680] sm:$0xff]
    %v2586 = vld [vmem:[#allocation8 + $0x688] sm:$0xff]
    %v2587 = vld [vmem:[#allocation8 + $0x690] sm:$0xff]
    %v2588 = vld [vmem:[#allocation8 + $0x698] sm:$0xff]
    %v2589 = vld [vmem:[#allocation8 + $0x6a0] sm:$0xff]
    %v2590 = vld [vmem:[#allocation8 + $0x6a8] sm:$0xff]
    %v2591 = vld [vmem:[#allocation8 + $0x6b0] sm:$0xff]
    %v2592 = vld [vmem:[#allocation8 + $0x6b8] sm:$0xff]
    %v2593 = vld [vmem:[#allocation8 + $0x6c0] sm:$0xff]
    %v2594 = vld [vmem:[#allocation8 + $0x6c8] sm:$0xff]
    %v2595 = vld [vmem:[#allocation8 + $0x6d0] sm:$0xff]
    %v2596 = vld [vmem:[#allocation8 + $0x6d8] sm:$0xff]
    %v2597 = vld [vmem:[#allocation8 + $0x6e0] sm:$0xff]
    %v2598 = vld [vmem:[#allocation8 + $0x6e8] sm:$0xff]
    %v2599 = vld [vmem:[#allocation8 + $0x6f0] sm:$0xff]
    %v2600 = vld [vmem:[#allocation8 + $0x6f8] sm:$0xff]
    %v2601 = vld [vmem:[#allocation8 + $0x700] sm:$0xff]
    %v2602 = vld [vmem:[#allocation8 + $0x708] sm:$0xff]
    %v2603 = vld [vmem:[#allocation8 + $0x710] sm:$0xff]
    %v2604 = vld [vmem:[#allocation8 + $0x718] sm:$0xff]
    %v2605 = vld [vmem:[#allocation8 + $0x720] sm:$0xff]
    %v2606 = vld [vmem:[#allocation8 + $0x728] sm:$0xff]
    %v2607 = vld [vmem:[#allocation8 + $0x730] sm:$0xff]
    %v2608 = vld [vmem:[#allocation8 + $0x738] sm:$0xff]
    %v2609 = vld [vmem:[#allocation8 + $0x740] sm:$0xff]
    %v2610 = vld [vmem:[#allocation8 + $0x748] sm:$0xff]
    %v2611 = vld [vmem:[#allocation8 + $0x750] sm:$0xff]
    %v2612 = vld [vmem:[#allocation8 + $0x758] sm:$0xff]
    %v2613 = vld [vmem:[#allocation8 + $0x760] sm:$0xff]
    %v2614 = vld [vmem:[#allocation8 + $0x768] sm:$0xff]
    %v2615 = vld [vmem:[#allocation8 + $0x770] sm:$0xff]
    %v2616 = vld [vmem:[#allocation8 + $0x778] sm:$0xff]
    %v2617 = vld [vmem:[#allocation8 + $0x780] sm:$0xff]
    %v2618 = vld [vmem:[#allocation8 + $0x788] sm:$0xff]
    %v2619 = vld [vmem:[#allocation8 + $0x790] sm:$0xff]
    %v2620 = vld [vmem:[#allocation8 + $0x798] sm:$0xff]
    %v2621 = vld [vmem:[#allocation8 + $0x7a0] sm:$0xff]
    %v2622 = vld [vmem:[#allocation8 + $0x7a8] sm:$0xff]
    %v2623 = vld [vmem:[#allocation8 + $0x7b0] sm:$0xff]
    %v2624 = vld [vmem:[#allocation8 + $0x7b8] sm:$0xff]
    %v2625 = vld [vmem:[#allocation8 + $0x7c0] sm:$0xff]
    %v2626 = vld [vmem:[#allocation8 + $0x7c8] sm:$0xff]
    %v2627 = vld [vmem:[#allocation8 + $0x7d0] sm:$0xff]
    %v2628 = vld [vmem:[#allocation8 + $0x7d8] sm:$0xff]
    %v2629 = vld [vmem:[#allocation8 + $0x7e0] sm:$0xff]
    %v2630 = vld [vmem:[#allocation8 + $0x7e8] sm:$0xff]
    %v2631 = vld [vmem:[#allocation8 + $0x7f0] sm:$0xff]
    %v2632 = vld [vmem:[#allocation8 + $0x7f8] sm:$0xff]
    %v2633 = vld [vmem:[#allocation8 + $0x800] sm:$0xff]
    %v2634 = vld [vmem:[#allocation8 + $0x808] sm:$0xff]
    %v2635 = vld [vmem:[#allocation8 + $0x810] sm:$0xff]
    %v2636 = vld [vmem:[#allocation8 + $0x818] sm:$0xff]
    %v2637 = vld [vmem:[#allocation8 + $0x820] sm:$0xff]
    %v2638 = vld [vmem:[#allocation8 + $0x828] sm:$0xff]
    %v2639 = vld [vmem:[#allocation8 + $0x830] sm:$0xff]
    %v2640 = vld [vmem:[#allocation8 + $0x838] sm:$0xff]
    %v2641 = vld [vmem:[#allocation8 + $0x840] sm:$0xff]
    %v2642 = vld [vmem:[#allocation8 + $0x848] sm:$0xff]
    %v2643 = vld [vmem:[#allocation8 + $0x850] sm:$0xff]
    %v2644 = vld [vmem:[#allocation8 + $0x858] sm:$0xff]
    %v2645 = vld [vmem:[#allocation8 + $0x860] sm:$0xff]
    %v2646 = vld [vmem:[#allocation8 + $0x868] sm:$0xff]
    %v2647 = vld [vmem:[#allocation8 + $0x870] sm:$0xff]
    %v2648 = vld [vmem:[#allocation8 + $0x878] sm:$0xff]
    %v2649 = vld [vmem:[#allocation8 + $0x880] sm:$0xff]
    %v2650 = vld [vmem:[#allocation8 + $0x888] sm:$0xff]
    %v2651 = vld [vmem:[#allocation8 + $0x890] sm:$0xff]
    %v2652 = vld [vmem:[#allocation8 + $0x898] sm:$0xff]
    %v2653 = vld [vmem:[#allocation8 + $0x8a0] sm:$0xff]
    %v2654 = vld [vmem:[#allocation8 + $0x8a8] sm:$0xff]
    %v2655 = vld [vmem:[#allocation8 + $0x8b0] sm:$0xff]
    %v2656 = vld [vmem:[#allocation8 + $0x8b8] sm:$0xff]
    %v2657 = vld [vmem:[#allocation8 + $0x8c0] sm:$0xff]
    %v2658 = vld [vmem:[#allocation8 + $0x8c8] sm:$0xff]
    %v2659 = vld [vmem:[#allocation8 + $0x8d0] sm:$0xff]
    %v2660 = vld [vmem:[#allocation8 + $0x8d8] sm:$0xff]
    %v2661 = vld [vmem:[#allocation8 + $0x8e0] sm:$0xff]
    %v2662 = vld [vmem:[#allocation8 + $0x8e8] sm:$0xff]
    %v2663 = vld [vmem:[#allocation8 + $0x8f0] sm:$0xff]
    %v2664 = vld [vmem:[#allocation8 + $0x8f8] sm:$0xff]
    %v2665 = vld [vmem:[#allocation10] sm:$0x3f]
    %v2667 = vperm.slane %v2665, 0
    %v2668 = vperm.slane %v2665, 1
    %v2669 = vperm.slane %v2665, 2
    %v2670 = vperm.slane %v2665, 3
    %v2671 = vperm.slane %v2665, 4
    %v2672 = vperm.slane %v2665, 5
    %v2967 = vunpack.c.l.b16 %v2377
    %v2968 = vunpack.c.h.b16 %v2377
    %v2969 = vunpack.c.l.b16 %v2378
    %v2970 = vunpack.c.h.b16 %v2378
    %v2971 = vunpack.c.l.b16 %v2379
    %v2972 = vunpack.c.h.b16 %v2379
    %v2973 = vunpack.c.l.b16 %v2380
    %v2974 = vunpack.c.h.b16 %v2380
    %v2975 = vunpack.c.l.b16 %v2381
    %v2976 = vunpack.c.h.b16 %v2381
    %v2977 = vunpack.c.l.b16 %v2382
    %v2978 = vunpack.c.h.b16 %v2382
    %v2979 = vunpack.c.l.b16 %v2383
    %v2980 = vunpack.c.h.b16 %v2383
    %v2981 = vunpack.c.l.b16 %v2384
    %v2982 = vunpack.c.h.b16 %v2384
    %v2983 = vunpack.c.l.b16 %v2385
    %v2984 = vunpack.c.h.b16 %v2385
    %v2985 = vunpack.c.l.b16 %v2386
    %v2986 = vunpack.c.h.b16 %v2386
    %v2987 = vunpack.c.l.b16 %v2387
    %v2988 = vunpack.c.h.b16 %v2387
    %v2989 = vunpack.c.l.b16 %v2388
    %v2990 = vunpack.c.h.b16 %v2388
    %v2991 = vunpack.c.l.b16 %v2389
    %v2992 = vunpack.c.h.b16 %v2389
    %v2993 = vunpack.c.l.b16 %v2390
    %v2994 = vunpack.c.h.b16 %v2390
    %v2995 = vunpack.c.l.b16 %v2391
    %v2996 = vunpack.c.h.b16 %v2391
    %v2997 = vunpack.c.l.b16 %v2392
    %v2998 = vunpack.c.h.b16 %v2392
    %v2999 = vunpack.c.l.b16 %v2393
    %v3000 = vunpack.c.h.b16 %v2393
    %v3001 = vunpack.c.l.b16 %v2394
    %v3002 = vunpack.c.h.b16 %v2394
    %v3003 = vunpack.c.l.b16 %v2395
    %v3004 = vunpack.c.h.b16 %v2395
    %v3005 = vunpack.c.l.b16 %v2396
    %v3006 = vunpack.c.h.b16 %v2396
    %v3007 = vunpack.c.l.b16 %v2397
    %v3008 = vunpack.c.h.b16 %v2397
    %v3009 = vunpack.c.l.b16 %v2398
    %v3010 = vunpack.c.h.b16 %v2398
    %v3011 = vunpack.c.l.b16 %v2399
    %v3012 = vunpack.c.h.b16 %v2399
    %v3013 = vunpack.c.l.b16 %v2400
    %v3014 = vunpack.c.h.b16 %v2400
    %v3015 = vunpack.c.l.b16 %v2401
    %v3016 = vunpack.c.h.b16 %v2401
    %v3017 = vunpack.c.l.b16 %v2402
    %v3018 = vunpack.c.h.b16 %v2402
    %v3019 = vunpack.c.l.b16 %v2403
    %v3020 = vunpack.c.h.b16 %v2403
    %v3021 = vunpack.c.l.b16 %v2404
    %v3022 = vunpack.c.h.b16 %v2404
    %v3023 = vunpack.c.l.b16 %v2405
    %v3024 = vunpack.c.h.b16 %v2405
    %v3025 = vunpack.c.l.b16 %v2406
    %v3026 = vunpack.c.h.b16 %v2406
    %v3027 = vunpack.c.l.b16 %v2407
    %v3028 = vunpack.c.h.b16 %v2407
    %v3029 = vunpack.c.l.b16 %v2408
    %v3030 = vunpack.c.h.b16 %v2408
    %v3031 = vunpack.c.l.b16 %v2409
    %v3032 = vunpack.c.h.b16 %v2409
    %v3033 = vunpack.c.l.b16 %v2410
    %v3034 = vunpack.c.h.b16 %v2410
    %v3035 = vunpack.c.l.b16 %v2411
    %v3036 = vunpack.c.h.b16 %v2411
    %v3037 = vunpack.c.l.b16 %v2412
    %v3038 = vunpack.c.h.b16 %v2412
    %v3039 = vunpack.c.l.b16 %v2413
    %v3040 = vunpack.c.h.b16 %v2413
    %v3041 = vunpack.c.l.b16 %v2414
    %v3042 = vunpack.c.h.b16 %v2414
    %v3043 = vunpack.c.l.b16 %v2415
    %v3044 = vunpack.c.h.b16 %v2415
    %v3045 = vunpack.c.l.b16 %v2416
    %v3046 = vunpack.c.h.b16 %v2416
    %v3047 = vunpack.c.l.b16 %v2417
    %v3048 = vunpack.c.h.b16 %v2417
    %v3049 = vunpack.c.l.b16 %v2418
    %v3050 = vunpack.c.h.b16 %v2418
    %v3051 = vunpack.c.l.b16 %v2419
    %v3052 = vunpack.c.h.b16 %v2419
    %v3053 = vunpack.c.l.b16 %v2420
    %v3054 = vunpack.c.h.b16 %v2420
    %v3055 = vunpack.c.l.b16 %v2421
    %v3056 = vunpack.c.h.b16 %v2421
    %v3057 = vunpack.c.l.b16 %v2422
    %v3058 = vunpack.c.h.b16 %v2422
    %v3059 = vunpack.c.l.b16 %v2423
    %v3060 = vunpack.c.h.b16 %v2423
    %v3061 = vunpack.c.l.b16 %v2424
    %v3062 = vunpack.c.h.b16 %v2424
    %v3063 = vunpack.c.l.b16 %v2425
    %v3064 = vunpack.c.h.b16 %v2425
    %v3065 = vunpack.c.l.b16 %v2426
    %v3066 = vunpack.c.h.b16 %v2426
    %v3067 = vunpack.c.l.b16 %v2427
    %v3068 = vunpack.c.h.b16 %v2427
    %v3069 = vunpack.c.l.b16 %v2428
    %v3070 = vunpack.c.h.b16 %v2428
    %v3071 = vunpack.c.l.b16 %v2429
    %v3072 = vunpack.c.h.b16 %v2429
    %v3073 = vunpack.c.l.b16 %v2430
    %v3074 = vunpack.c.h.b16 %v2430
    %v3075 = vunpack.c.l.b16 %v2431
    %v3076 = vunpack.c.h.b16 %v2431
    %v3077 = vunpack.c.l.b16 %v2432
    %v3078 = vunpack.c.h.b16 %v2432
    %v3079 = vunpack.c.l.b16 %v2433
    %v3080 = vunpack.c.h.b16 %v2433
    %v3081 = vunpack.c.l.b16 %v2434
    %v3082 = vunpack.c.h.b16 %v2434
    %v3083 = vunpack.c.l.b16 %v2435
    %v3084 = vunpack.c.h.b16 %v2435
    %v3085 = vunpack.c.l.b16 %v2436
    %v3086 = vunpack.c.h.b16 %v2436
    %v3087 = vunpack.c.l.b16 %v2437
    %v3088 = vunpack.c.h.b16 %v2437
    %v3089 = vunpack.c.l.b16 %v2438
    %v3090 = vunpack.c.h.b16 %v2438
    %v3091 = vunpack.c.l.b16 %v2439
    %v3092 = vunpack.c.h.b16 %v2439
    %v3093 = vunpack.c.l.b16 %v2440
    %v3094 = vunpack.c.h.b16 %v2440
    %v3095 = vunpack.c.l.b16 %v2441
    %v3096 = vunpack.c.h.b16 %v2441
    %v3097 = vunpack.c.l.b16 %v2442
    %v3098 = vunpack.c.h.b16 %v2442
    %v3099 = vunpack.c.l.b16 %v2443
    %v3100 = vunpack.c.h.b16 %v2443
    %v3101 = vunpack.c.l.b16 %v2444
    %v3102 = vunpack.c.h.b16 %v2444
    %v3103 = vunpack.c.l.b16 %v2445
    %v3104 = vunpack.c.h.b16 %v2445
    %v3105 = vunpack.c.l.b16 %v2446
    %v3106 = vunpack.c.h.b16 %v2446
    %v3107 = vunpack.c.l.b16 %v2447
    %v3108 = vunpack.c.h.b16 %v2447
    %v3109 = vunpack.c.l.b16 %v2448
    %v3110 = vunpack.c.h.b16 %v2448
    %v3111 = vunpack.c.l.b16 %v2449
    %v3112 = vunpack.c.h.b16 %v2449
    %v3113 = vunpack.c.l.b16 %v2450
    %v3114 = vunpack.c.h.b16 %v2450
    %v3115 = vunpack.c.l.b16 %v2451
    %v3116 = vunpack.c.h.b16 %v2451
    %v3117 = vunpack.c.l.b16 %v2452
    %v3118 = vunpack.c.h.b16 %v2452
    %v3119 = vunpack.c.l.b16 %v2453
    %v3120 = vunpack.c.h.b16 %v2453
    %v3121 = vunpack.c.l.b16 %v2454
    %v3122 = vunpack.c.h.b16 %v2454
    %v3123 = vunpack.c.l.b16 %v2455
    %v3124 = vunpack.c.h.b16 %v2455
    %v3125 = vunpack.c.l.b16 %v2456
    %v3126 = vunpack.c.h.b16 %v2456
    %v3127 = vunpack.c.l.b16 %v2457
    %v3128 = vunpack.c.h.b16 %v2457
    %v3129 = vunpack.c.l.b16 %v2458
    %v3130 = vunpack.c.h.b16 %v2458
    %v3131 = vunpack.c.l.b16 %v2459
    %v3132 = vunpack.c.h.b16 %v2459
    %v3133 = vunpack.c.l.b16 %v2460
    %v3134 = vunpack.c.h.b16 %v2460
    %v3135 = vunpack.c.l.b16 %v2461
    %v3136 = vunpack.c.h.b16 %v2461
    %v3137 = vunpack.c.l.b16 %v2462
    %v3138 = vunpack.c.h.b16 %v2462
    %v3139 = vunpack.c.l.b16 %v2463
    %v3140 = vunpack.c.h.b16 %v2463
    %v3141 = vunpack.c.l.b16 %v2464
    %v3142 = vunpack.c.h.b16 %v2464
    %v3143 = vunpack.c.l.b16 %v2465
    %v3144 = vunpack.c.h.b16 %v2465
    %v3145 = vunpack.c.l.b16 %v2466
    %v3146 = vunpack.c.h.b16 %v2466
    %v3147 = vunpack.c.l.b16 %v2467
    %v3148 = vunpack.c.h.b16 %v2467
    %v3149 = vunpack.c.l.b16 %v2468
    %v3150 = vunpack.c.h.b16 %v2468
    %v3151 = vunpack.c.l.b16 %v2469
    %v3152 = vunpack.c.h.b16 %v2469
    %v3153 = vunpack.c.l.b16 %v2470
    %v3154 = vunpack.c.h.b16 %v2470
    %v3155 = vunpack.c.l.b16 %v2471
    %v3156 = vunpack.c.h.b16 %v2471
    %v3157 = vunpack.c.l.b16 %v2472
    %v3158 = vunpack.c.h.b16 %v2472
    %v3159 = vunpack.c.l.b16 %v2473
    %v3160 = vunpack.c.h.b16 %v2473
    %v3161 = vunpack.c.l.b16 %v2474
    %v3162 = vunpack.c.h.b16 %v2474
    %v3163 = vunpack.c.l.b16 %v2475
    %v3164 = vunpack.c.h.b16 %v2475
    %v3165 = vunpack.c.l.b16 %v2476
    %v3166 = vunpack.c.h.b16 %v2476
    %v3167 = vunpack.c.l.b16 %v2477
    %v3168 = vunpack.c.h.b16 %v2477
    %v3169 = vunpack.c.l.b16 %v2478
    %v3170 = vunpack.c.h.b16 %v2478
    %v3171 = vunpack.c.l.b16 %v2479
    %v3172 = vunpack.c.h.b16 %v2479
    %v3173 = vunpack.c.l.b16 %v2480
    %v3174 = vunpack.c.h.b16 %v2480
    %v3175 = vunpack.c.l.b16 %v2481
    %v3176 = vunpack.c.h.b16 %v2481
    %v3177 = vunpack.c.l.b16 %v2482
    %v3178 = vunpack.c.h.b16 %v2482
    %v3179 = vunpack.c.l.b16 %v2483
    %v3180 = vunpack.c.h.b16 %v2483
    %v3181 = vunpack.c.l.b16 %v2484
    %v3182 = vunpack.c.h.b16 %v2484
    %v3183 = vunpack.c.l.b16 %v2485
    %v3184 = vunpack.c.h.b16 %v2485
    %v3185 = vunpack.c.l.b16 %v2486
    %v3186 = vunpack.c.h.b16 %v2486
    %v3187 = vunpack.c.l.b16 %v2487
    %v3188 = vunpack.c.h.b16 %v2487
    %v3189 = vunpack.c.l.b16 %v2488
    %v3190 = vunpack.c.h.b16 %v2488
    %v3191 = vunpack.c.l.b16 %v2489
    %v3192 = vunpack.c.h.b16 %v2489
    %v3193 = vunpack.c.l.b16 %v2490
    %v3194 = vunpack.c.h.b16 %v2490
    %v3195 = vunpack.c.l.b16 %v2491
    %v3196 = vunpack.c.h.b16 %v2491
    %v3197 = vunpack.c.l.b16 %v2492
    %v3198 = vunpack.c.h.b16 %v2492
    %v3199 = vunpack.c.l.b16 %v2493
    %v3200 = vunpack.c.h.b16 %v2493
    %v3201 = vunpack.c.l.b16 %v2494
    %v3202 = vunpack.c.h.b16 %v2494
    %v3203 = vunpack.c.l.b16 %v2495
    %v3204 = vunpack.c.h.b16 %v2495
    %v3205 = vunpack.c.l.b16 %v2496
    %v3206 = vunpack.c.h.b16 %v2496
    %v3207 = vunpack.c.l.b16 %v2497
    %v3208 = vunpack.c.h.b16 %v2497
    %v3209 = vunpack.c.l.b16 %v2498
    %v3210 = vunpack.c.h.b16 %v2498
    %v3211 = vunpack.c.l.b16 %v2499
    %v3212 = vunpack.c.h.b16 %v2499
    %v3213 = vunpack.c.l.b16 %v2500
    %v3214 = vunpack.c.h.b16 %v2500
    %v3215 = vunpack.c.l.b16 %v2501
    %v3216 = vunpack.c.h.b16 %v2501
    %v3217 = vunpack.c.l.b16 %v2502
    %v3218 = vunpack.c.h.b16 %v2502
    %v3219 = vunpack.c.l.b16 %v2503
    %v3220 = vunpack.c.h.b16 %v2503
    %v3221 = vunpack.c.l.b16 %v2504
    %v3222 = vunpack.c.h.b16 %v2504
    %v3223 = vunpack.c.l.b16 %v2505
    %v3224 = vunpack.c.h.b16 %v2505
    %v3225 = vunpack.c.l.b16 %v2506
    %v3226 = vunpack.c.h.b16 %v2506
    %v3227 = vunpack.c.l.b16 %v2507
    %v3228 = vunpack.c.h.b16 %v2507
    %v3229 = vunpack.c.l.b16 %v2508
    %v3230 = vunpack.c.h.b16 %v2508
    %v3231 = vunpack.c.l.b16 %v2509
    %v3232 = vunpack.c.h.b16 %v2509
    %v3233 = vunpack.c.l.b16 %v2510
    %v3234 = vunpack.c.h.b16 %v2510
    %v3235 = vunpack.c.l.b16 %v2511
    %v3236 = vunpack.c.h.b16 %v2511
    %v3237 = vunpack.c.l.b16 %v2512
    %v3238 = vunpack.c.h.b16 %v2512
    %v3239 = vunpack.c.l.b16 %v2513
    %v3240 = vunpack.c.h.b16 %v2513
    %v3241 = vunpack.c.l.b16 %v2514
    %v3242 = vunpack.c.h.b16 %v2514
    %v3243 = vunpack.c.l.b16 %v2515
    %v3244 = vunpack.c.h.b16 %v2515
    %v3245 = vunpack.c.l.b16 %v2516
    %v3246 = vunpack.c.h.b16 %v2516
    %v3247 = vunpack.c.l.b16 %v2517
    %v3248 = vunpack.c.h.b16 %v2517
    %v3249 = vunpack.c.l.b16 %v2518
    %v3250 = vunpack.c.h.b16 %v2518
    %v3251 = vunpack.c.l.b16 %v2519
    %v3252 = vunpack.c.h.b16 %v2519
    %v3253 = vunpack.c.l.b16 %v2520
    %v3254 = vunpack.c.h.b16 %v2520
    %v3255 = vunpack.c.l.b16 %v2521
    %v3256 = vunpack.c.h.b16 %v2521
    %v3257 = vunpack.c.l.b16 %v2522
    %v3258 = vunpack.c.h.b16 %v2522
    %v3259 = vunpack.c.l.b16 %v2523
    %v3260 = vunpack.c.h.b16 %v2523
    %v3261 = vunpack.c.l.b16 %v2524
    %v3262 = vunpack.c.h.b16 %v2524
    %v3263 = vunpack.c.l.b16 %v2525
    %v3264 = vunpack.c.h.b16 %v2525
    %v3265 = vunpack.c.l.b16 %v2526
    %v3266 = vunpack.c.h.b16 %v2526
    %v3267 = vunpack.c.l.b16 %v2527
    %v3268 = vunpack.c.h.b16 %v2527
    %v3269 = vunpack.c.l.b16 %v2528
    %v3270 = vunpack.c.h.b16 %v2528
    %v3271 = vunpack.c.l.b16 %v2529
    %v3272 = vunpack.c.h.b16 %v2529
    %v3273 = vunpack.c.l.b16 %v2530
    %v3274 = vunpack.c.h.b16 %v2530
    %v3275 = vunpack.c.l.b16 %v2531
    %v3276 = vunpack.c.h.b16 %v2531
    %v3277 = vunpack.c.l.b16 %v2532
    %v3278 = vunpack.c.h.b16 %v2532
    %v3279 = vunpack.c.l.b16 %v2533
    %v3280 = vunpack.c.h.b16 %v2533
    %v3281 = vunpack.c.l.b16 %v2534
    %v3282 = vunpack.c.h.b16 %v2534
    %v3283 = vunpack.c.l.b16 %v2535
    %v3284 = vunpack.c.h.b16 %v2535
    %v3285 = vunpack.c.l.b16 %v2536
    %v3286 = vunpack.c.h.b16 %v2536
    %v3287 = vunpack.c.l.b16 %v2537
    %v3288 = vunpack.c.h.b16 %v2537
    %v3289 = vunpack.c.l.b16 %v2538
    %v3290 = vunpack.c.h.b16 %v2538
    %v3291 = vunpack.c.l.b16 %v2539
    %v3292 = vunpack.c.h.b16 %v2539
    %v3293 = vunpack.c.l.b16 %v2540
    %v3294 = vunpack.c.h.b16 %v2540
    %v3295 = vunpack.c.l.b16 %v2541
    %v3296 = vunpack.c.h.b16 %v2541
    %v3297 = vunpack.c.l.b16 %v2542
    %v3298 = vunpack.c.h.b16 %v2542
    %v3299 = vunpack.c.l.b16 %v2543
    %v3300 = vunpack.c.h.b16 %v2543
    %v3301 = vunpack.c.l.b16 %v2544
    %v3302 = vunpack.c.h.b16 %v2544
    %v3303 = vunpack.c.l.b16 %v2545
    %v3304 = vunpack.c.h.b16 %v2545
    %v3305 = vunpack.c.l.b16 %v2546
    %v3306 = vunpack.c.h.b16 %v2546
    %v3307 = vunpack.c.l.b16 %v2547
    %v3308 = vunpack.c.h.b16 %v2547
    %v3309 = vunpack.c.l.b16 %v2548
    %v3310 = vunpack.c.h.b16 %v2548
    %v3311 = vunpack.c.l.b16 %v2549
    %v3312 = vunpack.c.h.b16 %v2549
    %v3313 = vunpack.c.l.b16 %v2550
    %v3314 = vunpack.c.h.b16 %v2550
    %v3315 = vunpack.c.l.b16 %v2551
    %v3316 = vunpack.c.h.b16 %v2551
    %v3317 = vunpack.c.l.b16 %v2552
    %v3318 = vunpack.c.h.b16 %v2552
    %v3319 = vunpack.c.l.b16 %v2553
    %v3320 = vunpack.c.h.b16 %v2553
    %v3321 = vunpack.c.l.b16 %v2554
    %v3322 = vunpack.c.h.b16 %v2554
    %v3323 = vunpack.c.l.b16 %v2555
    %v3324 = vunpack.c.h.b16 %v2555
    %v3325 = vunpack.c.l.b16 %v2556
    %v3326 = vunpack.c.h.b16 %v2556
    %v3327 = vunpack.c.l.b16 %v2557
    %v3328 = vunpack.c.h.b16 %v2557
    %v3329 = vunpack.c.l.b16 %v2558
    %v3330 = vunpack.c.h.b16 %v2558
    %v3331 = vunpack.c.l.b16 %v2559
    %v3332 = vunpack.c.h.b16 %v2559
    %v3333 = vunpack.c.l.b16 %v2560
    %v3334 = vunpack.c.h.b16 %v2560
    %v3335 = vunpack.c.l.b16 %v2561
    %v3336 = vunpack.c.h.b16 %v2561
    %v3337 = vunpack.c.l.b16 %v2562
    %v3338 = vunpack.c.h.b16 %v2562
    %v3339 = vunpack.c.l.b16 %v2563
    %v3340 = vunpack.c.h.b16 %v2563
    %v3341 = vunpack.c.l.b16 %v2564
    %v3342 = vunpack.c.h.b16 %v2564
    %v3343 = vunpack.c.l.b16 %v2565
    %v3344 = vunpack.c.h.b16 %v2565
    %v3345 = vunpack.c.l.b16 %v2566
    %v3346 = vunpack.c.h.b16 %v2566
    %v3347 = vunpack.c.l.b16 %v2567
    %v3348 = vunpack.c.h.b16 %v2567
    %v3349 = vunpack.c.l.b16 %v2568
    %v3350 = vunpack.c.h.b16 %v2568
    %v3351 = vunpack.c.l.b16 %v2569
    %v3352 = vunpack.c.h.b16 %v2569
    %v3353 = vunpack.c.l.b16 %v2570
    %v3354 = vunpack.c.h.b16 %v2570
    %v3355 = vunpack.c.l.b16 %v2571
    %v3356 = vunpack.c.h.b16 %v2571
    %v3357 = vunpack.c.l.b16 %v2572
    %v3358 = vunpack.c.h.b16 %v2572
    %v3359 = vunpack.c.l.b16 %v2573
    %v3360 = vunpack.c.h.b16 %v2573
    %v3361 = vunpack.c.l.b16 %v2574
    %v3362 = vunpack.c.h.b16 %v2574
    %v3363 = vunpack.c.l.b16 %v2575
    %v3364 = vunpack.c.h.b16 %v2575
    %v3365 = vunpack.c.l.b16 %v2576
    %v3366 = vunpack.c.h.b16 %v2576
    %v3367 = vunpack.c.l.b16 %v2577
    %v3368 = vunpack.c.h.b16 %v2577
    %v3369 = vunpack.c.l.b16 %v2578
    %v3370 = vunpack.c.h.b16 %v2578
    %v3371 = vunpack.c.l.b16 %v2579
    %v3372 = vunpack.c.h.b16 %v2579
    %v3373 = vunpack.c.l.b16 %v2580
    %v3374 = vunpack.c.h.b16 %v2580
    %v3375 = vunpack.c.l.b16 %v2581
    %v3376 = vunpack.c.h.b16 %v2581
    %v3377 = vunpack.c.l.b16 %v2582
    %v3378 = vunpack.c.h.b16 %v2582
    %v3379 = vunpack.c.l.b16 %v2583
    %v3380 = vunpack.c.h.b16 %v2583
    %v3381 = vunpack.c.l.b16 %v2584
    %v3382 = vunpack.c.h.b16 %v2584
    %v3383 = vunpack.c.l.b16 %v2585
    %v3384 = vunpack.c.h.b16 %v2585
    %v3385 = vunpack.c.l.b16 %v2586
    %v3386 = vunpack.c.h.b16 %v2586
    %v3387 = vunpack.c.l.b16 %v2587
    %v3388 = vunpack.c.h.b16 %v2587
    %v3389 = vunpack.c.l.b16 %v2588
    %v3390 = vunpack.c.h.b16 %v2588
    %v3391 = vunpack.c.l.b16 %v2589
    %v3392 = vunpack.c.h.b16 %v2589
    %v3393 = vunpack.c.l.b16 %v2590
    %v3394 = vunpack.c.h.b16 %v2590
    %v3395 = vunpack.c.l.b16 %v2591
    %v3396 = vunpack.c.h.b16 %v2591
    %v3397 = vunpack.c.l.b16 %v2592
    %v3398 = vunpack.c.h.b16 %v2592
    %v3399 = vunpack.c.l.b16 %v2593
    %v3400 = vunpack.c.h.b16 %v2593
    %v3401 = vunpack.c.l.b16 %v2594
    %v3402 = vunpack.c.h.b16 %v2594
    %v3403 = vunpack.c.l.b16 %v2595
    %v3404 = vunpack.c.h.b16 %v2595
    %v3405 = vunpack.c.l.b16 %v2596
    %v3406 = vunpack.c.h.b16 %v2596
    %v3407 = vunpack.c.l.b16 %v2597
    %v3408 = vunpack.c.h.b16 %v2597
    %v3409 = vunpack.c.l.b16 %v2598
    %v3410 = vunpack.c.h.b16 %v2598
    %v3411 = vunpack.c.l.b16 %v2599
    %v3412 = vunpack.c.h.b16 %v2599
    %v3413 = vunpack.c.l.b16 %v2600
    %v3414 = vunpack.c.h.b16 %v2600
    %v3415 = vunpack.c.l.b16 %v2601
    %v3416 = vunpack.c.h.b16 %v2601
    %v3417 = vunpack.c.l.b16 %v2602
    %v3418 = vunpack.c.h.b16 %v2602
    %v3419 = vunpack.c.l.b16 %v2603
    %v3420 = vunpack.c.h.b16 %v2603
    %v3421 = vunpack.c.l.b16 %v2604
    %v3422 = vunpack.c.h.b16 %v2604
    %v3423 = vunpack.c.l.b16 %v2605
    %v3424 = vunpack.c.h.b16 %v2605
    %v3425 = vunpack.c.l.b16 %v2606
    %v3426 = vunpack.c.h.b16 %v2606
    %v3427 = vunpack.c.l.b16 %v2607
    %v3428 = vunpack.c.h.b16 %v2607
    %v3429 = vunpack.c.l.b16 %v2608
    %v3430 = vunpack.c.h.b16 %v2608
    %v3431 = vunpack.c.l.b16 %v2609
    %v3432 = vunpack.c.h.b16 %v2609
    %v3433 = vunpack.c.l.b16 %v2610
    %v3434 = vunpack.c.h.b16 %v2610
    %v3435 = vunpack.c.l.b16 %v2611
    %v3436 = vunpack.c.h.b16 %v2611
    %v3437 = vunpack.c.l.b16 %v2612
    %v3438 = vunpack.c.h.b16 %v2612
    %v3439 = vunpack.c.l.b16 %v2613
    %v3440 = vunpack.c.h.b16 %v2613
    %v3441 = vunpack.c.l.b16 %v2614
    %v3442 = vunpack.c.h.b16 %v2614
    %v3443 = vunpack.c.l.b16 %v2615
    %v3444 = vunpack.c.h.b16 %v2615
    %v3445 = vunpack.c.l.b16 %v2616
    %v3446 = vunpack.c.h.b16 %v2616
    %v3447 = vunpack.c.l.b16 %v2617
    %v3448 = vunpack.c.h.b16 %v2617
    %v3449 = vunpack.c.l.b16 %v2618
    %v3450 = vunpack.c.h.b16 %v2618
    %v3451 = vunpack.c.l.b16 %v2619
    %v3452 = vunpack.c.h.b16 %v2619
    %v3453 = vunpack.c.l.b16 %v2620
    %v3454 = vunpack.c.h.b16 %v2620
    %v3455 = vunpack.c.l.b16 %v2621
    %v3456 = vunpack.c.h.b16 %v2621
    %v3457 = vunpack.c.l.b16 %v2622
    %v3458 = vunpack.c.h.b16 %v2622
    %v3459 = vunpack.c.l.b16 %v2623
    %v3460 = vunpack.c.h.b16 %v2623
    %v3461 = vunpack.c.l.b16 %v2624
    %v3462 = vunpack.c.h.b16 %v2624
    %v3463 = vunpack.c.l.b16 %v2625
    %v3464 = vunpack.c.h.b16 %v2625
    %v3465 = vunpack.c.l.b16 %v2626
    %v3466 = vunpack.c.h.b16 %v2626
    %v3467 = vunpack.c.l.b16 %v2627
    %v3468 = vunpack.c.h.b16 %v2627
    %v3469 = vunpack.c.l.b16 %v2628
    %v3470 = vunpack.c.h.b16 %v2628
    %v3471 = vunpack.c.l.b16 %v2629
    %v3472 = vunpack.c.h.b16 %v2629
    %v3473 = vunpack.c.l.b16 %v2630
    %v3474 = vunpack.c.h.b16 %v2630
    %v3475 = vunpack.c.l.b16 %v2631
    %v3476 = vunpack.c.h.b16 %v2631
    %v3477 = vunpack.c.l.b16 %v2632
    %v3478 = vunpack.c.h.b16 %v2632
    %v3479 = vunpack.c.l.b16 %v2633
    %v3480 = vunpack.c.h.b16 %v2633
    %v3481 = vunpack.c.l.b16 %v2634
    %v3482 = vunpack.c.h.b16 %v2634
    %v3483 = vunpack.c.l.b16 %v2635
    %v3484 = vunpack.c.h.b16 %v2635
    %v3485 = vunpack.c.l.b16 %v2636
    %v3486 = vunpack.c.h.b16 %v2636
    %v3487 = vunpack.c.l.b16 %v2637
    %v3488 = vunpack.c.h.b16 %v2637
    %v3489 = vunpack.c.l.b16 %v2638
    %v3490 = vunpack.c.h.b16 %v2638
    %v3491 = vunpack.c.l.b16 %v2639
    %v3492 = vunpack.c.h.b16 %v2639
    %v3493 = vunpack.c.l.b16 %v2640
    %v3494 = vunpack.c.h.b16 %v2640
    %v3495 = vunpack.c.l.b16 %v2641
    %v3496 = vunpack.c.h.b16 %v2641
    %v3497 = vunpack.c.l.b16 %v2642
    %v3498 = vunpack.c.h.b16 %v2642
    %v3499 = vunpack.c.l.b16 %v2643
    %v3500 = vunpack.c.h.b16 %v2643
    %v3501 = vunpack.c.l.b16 %v2644
    %v3502 = vunpack.c.h.b16 %v2644
    %v3503 = vunpack.c.l.b16 %v2645
    %v3504 = vunpack.c.h.b16 %v2645
    %v3505 = vunpack.c.l.b16 %v2646
    %v3506 = vunpack.c.h.b16 %v2646
    %v3507 = vunpack.c.l.b16 %v2647
    %v3508 = vunpack.c.h.b16 %v2647
    %v3509 = vunpack.c.l.b16 %v2648
    %v3510 = vunpack.c.h.b16 %v2648
    %v3511 = vunpack.c.l.b16 %v2649
    %v3512 = vunpack.c.h.b16 %v2649
    %v3513 = vunpack.c.l.b16 %v2650
    %v3514 = vunpack.c.h.b16 %v2650
    %v3515 = vunpack.c.l.b16 %v2651
    %v3516 = vunpack.c.h.b16 %v2651
    %v3517 = vunpack.c.l.b16 %v2652
    %v3518 = vunpack.c.h.b16 %v2652
    %v3519 = vunpack.c.l.b16 %v2653
    %v3520 = vunpack.c.h.b16 %v2653
    %v3521 = vunpack.c.l.b16 %v2654
    %v3522 = vunpack.c.h.b16 %v2654
    %v3523 = vunpack.c.l.b16 %v2655
    %v3524 = vunpack.c.h.b16 %v2655
    %v3525 = vunpack.c.l.b16 %v2656
    %v3526 = vunpack.c.h.b16 %v2656
    %v3527 = vunpack.c.l.b16 %v2657
    %v3528 = vunpack.c.h.b16 %v2657
    %v3529 = vunpack.c.l.b16 %v2658
    %v3530 = vunpack.c.h.b16 %v2658
    %v3531 = vunpack.c.l.b16 %v2659
    %v3532 = vunpack.c.h.b16 %v2659
    %v3533 = vunpack.c.l.b16 %v2660
    %v3534 = vunpack.c.h.b16 %v2660
    %v3535 = vunpack.c.l.b16 %v2661
    %v3536 = vunpack.c.h.b16 %v2661
    %v3537 = vunpack.c.l.b16 %v2662
    %v3538 = vunpack.c.h.b16 %v2662
    %v3539 = vunpack.c.l.b16 %v2663
    %v3540 = vunpack.c.h.b16 %v2663
    %v3541 = vunpack.c.l.b16 %v2664
    %v3542 = vunpack.c.h.b16 %v2664
    %v3543 = vpack.c.b16 %v2973, %v2967
    %v3544 = vpack.c.b16 %v2974, %v2968
    %v3545 = vpack.c.b16 %v2975, %v2969
    %v3546 = vpack.c.b16 %v2976, %v2970
    %v3547 = vpack.c.b16 %v2977, %v2971
    %v3548 = vpack.c.b16 %v2978, %v2972
    %v3549 = vpack.c.b16 %v2985, %v2979
    %v3550 = vpack.c.b16 %v2986, %v2980
    %v3551 = vpack.c.b16 %v2987, %v2981
    %v3552 = vpack.c.b16 %v2988, %v2982
    %v3553 = vpack.c.b16 %v2989, %v2983
    %v3554 = vpack.c.b16 %v2990, %v2984
    %v3555 = vpack.c.b16 %v2997, %v2991
    %v3556 = vpack.c.b16 %v2998, %v2992
    %v3557 = vpack.c.b16 %v2999, %v2993
    %v3558 = vpack.c.b16 %v3000, %v2994
    %v3559 = vpack.c.b16 %v3001, %v2995
    %v3560 = vpack.c.b16 %v3002, %v2996
    %v3561 = vpack.c.b16 %v3009, %v3003
    %v3562 = vpack.c.b16 %v3010, %v3004
    %v3563 = vpack.c.b16 %v3011, %v3005
    %v3564 = vpack.c.b16 %v3012, %v3006
    %v3565 = vpack.c.b16 %v3013, %v3007
    %v3566 = vpack.c.b16 %v3014, %v3008
    %v3567 = vpack.c.b16 %v3021, %v3015
    %v3568 = vpack.c.b16 %v3022, %v3016
    %v3569 = vpack.c.b16 %v3023, %v3017
    %v3570 = vpack.c.b16 %v3024, %v3018
    %v3571 = vpack.c.b16 %v3025, %v3019
    %v3572 = vpack.c.b16 %v3026, %v3020
    %v3573 = vpack.c.b16 %v3033, %v3027
    %v3574 = vpack.c.b16 %v3034, %v3028
    %v3575 = vpack.c.b16 %v3035, %v3029
    %v3576 = vpack.c.b16 %v3036, %v3030
    %v3577 = vpack.c.b16 %v3037, %v3031
    %v3578 = vpack.c.b16 %v3038, %v3032
    %v3579 = vpack.c.b16 %v3045, %v3039
    %v3580 = vpack.c.b16 %v3046, %v3040
    %v3581 = vpack.c.b16 %v3047, %v3041
    %v3582 = vpack.c.b16 %v3048, %v3042
    %v3583 = vpack.c.b16 %v3049, %v3043
    %v3584 = vpack.c.b16 %v3050, %v3044
    %v3585 = vpack.c.b16 %v3057, %v3051
    %v3586 = vpack.c.b16 %v3058, %v3052
    %v3587 = vpack.c.b16 %v3059, %v3053
    %v3588 = vpack.c.b16 %v3060, %v3054
    %v3589 = vpack.c.b16 %v3061, %v3055
    %v3590 = vpack.c.b16 %v3062, %v3056
    %v3591 = vpack.c.b16 %v3069, %v3063
    %v3592 = vpack.c.b16 %v3070, %v3064
    %v3593 = vpack.c.b16 %v3071, %v3065
    %v3594 = vpack.c.b16 %v3072, %v3066
    %v3595 = vpack.c.b16 %v3073, %v3067
    %v3596 = vpack.c.b16 %v3074, %v3068
    %v3597 = vpack.c.b16 %v3081, %v3075
    %v3598 = vpack.c.b16 %v3082, %v3076
    %v3599 = vpack.c.b16 %v3083, %v3077
    %v3600 = vpack.c.b16 %v3084, %v3078
    %v3601 = vpack.c.b16 %v3085, %v3079
    %v3602 = vpack.c.b16 %v3086, %v3080
    %v3603 = vpack.c.b16 %v3093, %v3087
    %v3604 = vpack.c.b16 %v3094, %v3088
    %v3605 = vpack.c.b16 %v3095, %v3089
    %v3606 = vpack.c.b16 %v3096, %v3090
    %v3607 = vpack.c.b16 %v3097, %v3091
    %v3608 = vpack.c.b16 %v3098, %v3092
    %v3609 = vpack.c.b16 %v3105, %v3099
    %v3610 = vpack.c.b16 %v3106, %v3100
    %v3611 = vpack.c.b16 %v3107, %v3101
    %v3612 = vpack.c.b16 %v3108, %v3102
    %v3613 = vpack.c.b16 %v3109, %v3103
    %v3614 = vpack.c.b16 %v3110, %v3104
    %v3615 = vpack.c.b16 %v3117, %v3111
    %v3616 = vpack.c.b16 %v3118, %v3112
    %v3617 = vpack.c.b16 %v3119, %v3113
    %v3618 = vpack.c.b16 %v3120, %v3114
    %v3619 = vpack.c.b16 %v3121, %v3115
    %v3620 = vpack.c.b16 %v3122, %v3116
    %v3621 = vpack.c.b16 %v3129, %v3123
    %v3622 = vpack.c.b16 %v3130, %v3124
    %v3623 = vpack.c.b16 %v3131, %v3125
    %v3624 = vpack.c.b16 %v3132, %v3126
    %v3625 = vpack.c.b16 %v3133, %v3127
    %v3626 = vpack.c.b16 %v3134, %v3128
    %v3627 = vpack.c.b16 %v3141, %v3135
    %v3628 = vpack.c.b16 %v3142, %v3136
    %v3629 = vpack.c.b16 %v3143, %v3137
    %v3630 = vpack.c.b16 %v3144, %v3138
    %v3631 = vpack.c.b16 %v3145, %v3139
    %v3632 = vpack.c.b16 %v3146, %v3140
    %v3633 = vpack.c.b16 %v3153, %v3147
    %v3634 = vpack.c.b16 %v3154, %v3148
    %v3635 = vpack.c.b16 %v3155, %v3149
    %v3636 = vpack.c.b16 %v3156, %v3150
    %v3637 = vpack.c.b16 %v3157, %v3151
    %v3638 = vpack.c.b16 %v3158, %v3152
    %v3639 = vpack.c.b16 %v3165, %v3159
    %v3640 = vpack.c.b16 %v3166, %v3160
    %v3641 = vpack.c.b16 %v3167, %v3161
    %v3642 = vpack.c.b16 %v3168, %v3162
    %v3643 = vpack.c.b16 %v3169, %v3163
    %v3644 = vpack.c.b16 %v3170, %v3164
    %v3645 = vpack.c.b16 %v3177, %v3171
    %v3646 = vpack.c.b16 %v3178, %v3172
    %v3647 = vpack.c.b16 %v3179, %v3173
    %v3648 = vpack.c.b16 %v3180, %v3174
    %v3649 = vpack.c.b16 %v3181, %v3175
    %v3650 = vpack.c.b16 %v3182, %v3176
    %v3651 = vpack.c.b16 %v3189, %v3183
    %v3652 = vpack.c.b16 %v3190, %v3184
    %v3653 = vpack.c.b16 %v3191, %v3185
    %v3654 = vpack.c.b16 %v3192, %v3186
    %v3655 = vpack.c.b16 %v3193, %v3187
    %v3656 = vpack.c.b16 %v3194, %v3188
    %v3657 = vpack.c.b16 %v3201, %v3195
    %v3658 = vpack.c.b16 %v3202, %v3196
    %v3659 = vpack.c.b16 %v3203, %v3197
    %v3660 = vpack.c.b16 %v3204, %v3198
    %v3661 = vpack.c.b16 %v3205, %v3199
    %v3662 = vpack.c.b16 %v3206, %v3200
    %v3663 = vpack.c.b16 %v3213, %v3207
    %v3664 = vpack.c.b16 %v3214, %v3208
    %v3665 = vpack.c.b16 %v3215, %v3209
    %v3666 = vpack.c.b16 %v3216, %v3210
    %v3667 = vpack.c.b16 %v3217, %v3211
    %v3668 = vpack.c.b16 %v3218, %v3212
    %v3669 = vpack.c.b16 %v3225, %v3219
    %v3670 = vpack.c.b16 %v3226, %v3220
    %v3671 = vpack.c.b16 %v3227, %v3221
    %v3672 = vpack.c.b16 %v3228, %v3222
    %v3673 = vpack.c.b16 %v3229, %v3223
    %v3674 = vpack.c.b16 %v3230, %v3224
    %v3675 = vpack.c.b16 %v3237, %v3231
    %v3676 = vpack.c.b16 %v3238, %v3232
    %v3677 = vpack.c.b16 %v3239, %v3233
    %v3678 = vpack.c.b16 %v3240, %v3234
    %v3679 = vpack.c.b16 %v3241, %v3235
    %v3680 = vpack.c.b16 %v3242, %v3236
    %v3681 = vpack.c.b16 %v3249, %v3243
    %v3682 = vpack.c.b16 %v3250, %v3244
    %v3683 = vpack.c.b16 %v3251, %v3245
    %v3684 = vpack.c.b16 %v3252, %v3246
    %v3685 = vpack.c.b16 %v3253, %v3247
    %v3686 = vpack.c.b16 %v3254, %v3248
    %v3687 = vpack.c.b16 %v3261, %v3255
    %v3688 = vpack.c.b16 %v3262, %v3256
    %v3689 = vpack.c.b16 %v3263, %v3257
    %v3690 = vpack.c.b16 %v3264, %v3258
    %v3691 = vpack.c.b16 %v3265, %v3259
    %v3692 = vpack.c.b16 %v3266, %v3260
    %v3693 = vpack.c.b16 %v3273, %v3267
    %v3694 = vpack.c.b16 %v3274, %v3268
    %v3695 = vpack.c.b16 %v3275, %v3269
    %v3696 = vpack.c.b16 %v3276, %v3270
    %v3697 = vpack.c.b16 %v3277, %v3271
    %v3698 = vpack.c.b16 %v3278, %v3272
    %v3699 = vpack.c.b16 %v3285, %v3279
    %v3700 = vpack.c.b16 %v3286, %v3280
    %v3701 = vpack.c.b16 %v3287, %v3281
    %v3702 = vpack.c.b16 %v3288, %v3282
    %v3703 = vpack.c.b16 %v3289, %v3283
    %v3704 = vpack.c.b16 %v3290, %v3284
    %v3705 = vpack.c.b16 %v3297, %v3291
    %v3706 = vpack.c.b16 %v3298, %v3292
    %v3707 = vpack.c.b16 %v3299, %v3293
    %v3708 = vpack.c.b16 %v3300, %v3294
    %v3709 = vpack.c.b16 %v3301, %v3295
    %v3710 = vpack.c.b16 %v3302, %v3296
    %v3711 = vpack.c.b16 %v3309, %v3303
    %v3712 = vpack.c.b16 %v3310, %v3304
    %v3713 = vpack.c.b16 %v3311, %v3305
    %v3714 = vpack.c.b16 %v3312, %v3306
    %v3715 = vpack.c.b16 %v3313, %v3307
    %v3716 = vpack.c.b16 %v3314, %v3308
    %v3717 = vpack.c.b16 %v3321, %v3315
    %v3718 = vpack.c.b16 %v3322, %v3316
    %v3719 = vpack.c.b16 %v3323, %v3317
    %v3720 = vpack.c.b16 %v3324, %v3318
    %v3721 = vpack.c.b16 %v3325, %v3319
    %v3722 = vpack.c.b16 %v3326, %v3320
    %v3723 = vpack.c.b16 %v3333, %v3327
    %v3724 = vpack.c.b16 %v3334, %v3328
    %v3725 = vpack.c.b16 %v3335, %v3329
    %v3726 = vpack.c.b16 %v3336, %v3330
    %v3727 = vpack.c.b16 %v3337, %v3331
    %v3728 = vpack.c.b16 %v3338, %v3332
    %v3729 = vpack.c.b16 %v3345, %v3339
    %v3730 = vpack.c.b16 %v3346, %v3340
    %v3731 = vpack.c.b16 %v3347, %v3341
    %v3732 = vpack.c.b16 %v3348, %v3342
    %v3733 = vpack.c.b16 %v3349, %v3343
    %v3734 = vpack.c.b16 %v3350, %v3344
    %v3735 = vpack.c.b16 %v3357, %v3351
    %v3736 = vpack.c.b16 %v3358, %v3352
    %v3737 = vpack.c.b16 %v3359, %v3353
    %v3738 = vpack.c.b16 %v3360, %v3354
    %v3739 = vpack.c.b16 %v3361, %v3355
    %v3740 = vpack.c.b16 %v3362, %v3356
    %v3741 = vpack.c.b16 %v3369, %v3363
    %v3742 = vpack.c.b16 %v3370, %v3364
    %v3743 = vpack.c.b16 %v3371, %v3365
    %v3744 = vpack.c.b16 %v3372, %v3366
    %v3745 = vpack.c.b16 %v3373, %v3367
    %v3746 = vpack.c.b16 %v3374, %v3368
    %v3747 = vpack.c.b16 %v3381, %v3375
    %v3748 = vpack.c.b16 %v3382, %v3376
    %v3749 = vpack.c.b16 %v3383, %v3377
    %v3750 = vpack.c.b16 %v3384, %v3378
    %v3751 = vpack.c.b16 %v3385, %v3379
    %v3752 = vpack.c.b16 %v3386, %v3380
    %v3753 = vpack.c.b16 %v3393, %v3387
    %v3754 = vpack.c.b16 %v3394, %v3388
    %v3755 = vpack.c.b16 %v3395, %v3389
    %v3756 = vpack.c.b16 %v3396, %v3390
    %v3757 = vpack.c.b16 %v3397, %v3391
    %v3758 = vpack.c.b16 %v3398, %v3392
    %v3759 = vpack.c.b16 %v3405, %v3399
    %v3760 = vpack.c.b16 %v3406, %v3400
    %v3761 = vpack.c.b16 %v3407, %v3401
    %v3762 = vpack.c.b16 %v3408, %v3402
    %v3763 = vpack.c.b16 %v3409, %v3403
    %v3764 = vpack.c.b16 %v3410, %v3404
    %v3765 = vpack.c.b16 %v3417, %v3411
    %v3766 = vpack.c.b16 %v3418, %v3412
    %v3767 = vpack.c.b16 %v3419, %v3413
    %v3768 = vpack.c.b16 %v3420, %v3414
    %v3769 = vpack.c.b16 %v3421, %v3415
    %v3770 = vpack.c.b16 %v3422, %v3416
    %v3771 = vpack.c.b16 %v3429, %v3423
    %v3772 = vpack.c.b16 %v3430, %v3424
    %v3773 = vpack.c.b16 %v3431, %v3425
    %v3774 = vpack.c.b16 %v3432, %v3426
    %v3775 = vpack.c.b16 %v3433, %v3427
    %v3776 = vpack.c.b16 %v3434, %v3428
    %v3777 = vpack.c.b16 %v3441, %v3435
    %v3778 = vpack.c.b16 %v3442, %v3436
    %v3779 = vpack.c.b16 %v3443, %v3437
    %v3780 = vpack.c.b16 %v3444, %v3438
    %v3781 = vpack.c.b16 %v3445, %v3439
    %v3782 = vpack.c.b16 %v3446, %v3440
    %v3783 = vpack.c.b16 %v3453, %v3447
    %v3784 = vpack.c.b16 %v3454, %v3448
    %v3785 = vpack.c.b16 %v3455, %v3449
    %v3786 = vpack.c.b16 %v3456, %v3450
    %v3787 = vpack.c.b16 %v3457, %v3451
    %v3788 = vpack.c.b16 %v3458, %v3452
    %v3789 = vpack.c.b16 %v3465, %v3459
    %v3790 = vpack.c.b16 %v3466, %v3460
    %v3791 = vpack.c.b16 %v3467, %v3461
    %v3792 = vpack.c.b16 %v3468, %v3462
    %v3793 = vpack.c.b16 %v3469, %v3463
    %v3794 = vpack.c.b16 %v3470, %v3464
    %v3795 = vpack.c.b16 %v3477, %v3471
    %v3796 = vpack.c.b16 %v3478, %v3472
    %v3797 = vpack.c.b16 %v3479, %v3473
    %v3798 = vpack.c.b16 %v3480, %v3474
    %v3799 = vpack.c.b16 %v3481, %v3475
    %v3800 = vpack.c.b16 %v3482, %v3476
    %v3801 = vpack.c.b16 %v3489, %v3483
    %v3802 = vpack.c.b16 %v3490, %v3484
    %v3803 = vpack.c.b16 %v3491, %v3485
    %v3804 = vpack.c.b16 %v3492, %v3486
    %v3805 = vpack.c.b16 %v3493, %v3487
    %v3806 = vpack.c.b16 %v3494, %v3488
    %v3807 = vpack.c.b16 %v3501, %v3495
    %v3808 = vpack.c.b16 %v3502, %v3496
    %v3809 = vpack.c.b16 %v3503, %v3497
    %v3810 = vpack.c.b16 %v3504, %v3498
    %v3811 = vpack.c.b16 %v3505, %v3499
    %v3812 = vpack.c.b16 %v3506, %v3500
    %v3813 = vpack.c.b16 %v3513, %v3507
    %v3814 = vpack.c.b16 %v3514, %v3508
    %v3815 = vpack.c.b16 %v3515, %v3509
    %v3816 = vpack.c.b16 %v3516, %v3510
    %v3817 = vpack.c.b16 %v3517, %v3511
    %v3818 = vpack.c.b16 %v3518, %v3512
    %v3819 = vpack.c.b16 %v3525, %v3519
    %v3820 = vpack.c.b16 %v3526, %v3520
    %v3821 = vpack.c.b16 %v3527, %v3521
    %v3822 = vpack.c.b16 %v3528, %v3522
    %v3823 = vpack.c.b16 %v3529, %v3523
    %v3824 = vpack.c.b16 %v3530, %v3524
    %v3825 = vpack.c.b16 %v3537, %v3531
    %v3826 = vpack.c.b16 %v3538, %v3532
    %v3827 = vpack.c.b16 %v3539, %v3533
    %v3828 = vpack.c.b16 %v3540, %v3534
    %v3829 = vpack.c.b16 %v3541, %v3535
    %v3830 = vpack.c.b16 %v3542, %v3536
    %4119 = vmatpush.bf16.msra.mxu0 %v3585
    %4120 = vmatpush.bf16.msra.mxu0 %v3579
    %4121 = vmatpush.bf16.msra.mxu0 %v3573
    %4122 = vmatpush.bf16.msra.mxu0 %v3567
    %4123 = vmatpush.bf16.msra.mxu0 %v3561
    %4124 = vmatpush.bf16.msra.mxu0 %v3555
    %4125 = vmatpush.bf16.msra.mxu0 %v3549
    %4126 = vmatpush.bf16.msra.mxu0 %v3543
    %4127 = vmatmul.bf16.gmra.mxu0 %v2371
    %v4128 = vpop.f32.mrf.mxu0
    %v4129 = vadd.f32 %v2667, %v4128
    %v4130 = vpop.f32.mrf.mxu0
    %v4131 = vadd.f32 %v2667, %v4130
    %4132 = vdwg.mxu0
    %4133 = vmatpush.bf16.msra.mxu0 %v3633
    %4134 = vmatpush.bf16.msra.mxu0 %v3627
    %4135 = vmatpush.bf16.msra.mxu0 %v3621
    %4136 = vmatpush.bf16.msra.mxu0 %v3615
    %4137 = vmatpush.bf16.msra.mxu0 %v3609
    %4138 = vmatpush.bf16.msra.mxu0 %v3603
    %4139 = vmatpush.bf16.msra.mxu0 %v3597
    %4140 = vmatpush.bf16.msra.mxu0 %v3591
    %4141 = vmatmul.bf16.gmra.mxu0 %v2372
    %v4142 = vpop.f32.mrf.mxu0
    %v4143 = vadd.f32 %v4129, %v4142
    %v4144 = vpop.f32.mrf.mxu0
    %v4145 = vadd.f32 %v4131, %v4144
    %4146 = vdwg.mxu0
    %4147 = vmatpush.bf16.msra.mxu0 %v3681
    %4148 = vmatpush.bf16.msra.mxu0 %v3675
    %4149 = vmatpush.bf16.msra.mxu0 %v3669
    %4150 = vmatpush.bf16.msra.mxu0 %v3663
    %4151 = vmatpush.bf16.msra.mxu0 %v3657
    %4152 = vmatpush.bf16.msra.mxu0 %v3651
    %4153 = vmatpush.bf16.msra.mxu0 %v3645
    %4154 = vmatpush.bf16.msra.mxu0 %v3639
    %4155 = vmatmul.bf16.gmra.mxu0 %v2373
    %v4156 = vpop.f32.mrf.mxu0
    %v4157 = vadd.f32 %v4143, %v4156
    %v4158 = vpop.f32.mrf.mxu0
    %v4159 = vadd.f32 %v4145, %v4158
    %4160 = vdwg.mxu0
    %4161 = vmatpush.bf16.msra.mxu0 %v3729
    %4162 = vmatpush.bf16.msra.mxu0 %v3723
    %4163 = vmatpush.bf16.msra.mxu0 %v3717
    %4164 = vmatpush.bf16.msra.mxu0 %v3711
    %4165 = vmatpush.bf16.msra.mxu0 %v3705
    %4166 = vmatpush.bf16.msra.mxu0 %v3699
    %4167 = vmatpush.bf16.msra.mxu0 %v3693
    %4168 = vmatpush.bf16.msra.mxu0 %v3687
    %4169 = vmatmul.bf16.gmra.mxu0 %v2374
    %v4170 = vpop.f32.mrf.mxu0
    %v4171 = vadd.f32 %v4157, %v4170
    %v4172 = vpop.f32.mrf.mxu0
    %v4173 = vadd.f32 %v4159, %v4172
    %4174 = vdwg.mxu0
    %4175 = vmatpush.bf16.msra.mxu0 %v3777
    %4176 = vmatpush.bf16.msra.mxu0 %v3771
    %4177 = vmatpush.bf16.msra.mxu0 %v3765
    %4178 = vmatpush.bf16.msra.mxu0 %v3759
    %4179 = vmatpush.bf16.msra.mxu0 %v3753
    %4180 = vmatpush.bf16.msra.mxu0 %v3747
    %4181 = vmatpush.bf16.msra.mxu0 %v3741
    %4182 = vmatpush.bf16.msra.mxu0 %v3735
    %4183 = vmatmul.bf16.gmra.mxu0 %v2375
    %v4184 = vpop.f32.mrf.mxu0
    %v4185 = vadd.f32 %v4171, %v4184
    %v4186 = vpop.f32.mrf.mxu0
    %v4187 = vadd.f32 %v4173, %v4186
    %4188 = vdwg.mxu0
    %4189 = vmatpush.bf16.msra.mxu0 %v3825
    %4190 = vmatpush.bf16.msra.mxu0 %v3819
    %4191 = vmatpush.bf16.msra.mxu0 %v3813
    %4192 = vmatpush.bf16.msra.mxu0 %v3807
    %4193 = vmatpush.bf16.msra.mxu0 %v3801
    %4194 = vmatpush.bf16.msra.mxu0 %v3795
    %4195 = vmatpush.bf16.msra.mxu0 %v3789
    %4196 = vmatpush.bf16.msra.mxu0 %v3783
    %4197 = vmatmul.bf16.gmra.mxu0 %v2376
    %v4198 = vpop.f32.mrf.mxu0
    %v4199 = vadd.f32 %v4185, %v4198
    %v4200 = vpop.f32.mrf.mxu0
    %v4201 = vadd.f32 %v4187, %v4200
    %4202 = vdwg.mxu0
    %4203 = vmatpush.bf16.msra.mxu0 %v3586
    %4204 = vmatpush.bf16.msra.mxu0 %v3580
    %4205 = vmatpush.bf16.msra.mxu0 %v3574
    %4206 = vmatpush.bf16.msra.mxu0 %v3568
    %4207 = vmatpush.bf16.msra.mxu0 %v3562
    %4208 = vmatpush.bf16.msra.mxu0 %v3556
    %4209 = vmatpush.bf16.msra.mxu0 %v3550
    %4210 = vmatpush.bf16.msra.mxu0 %v3544
    %4211 = vmatmul.bf16.gmra.mxu0 %v2371
    %v4212 = vpop.f32.mrf.mxu0
    %v4213 = vadd.f32 %v2668, %v4212
    %v4214 = vpop.f32.mrf.mxu0
    %v4215 = vadd.f32 %v2668, %v4214
    %4216 = vdwg.mxu0
    %4217 = vmatpush.bf16.msra.mxu0 %v3634
    %4218 = vmatpush.bf16.msra.mxu0 %v3628
    %4219 = vmatpush.bf16.msra.mxu0 %v3622
    %4220 = vmatpush.bf16.msra.mxu0 %v3616
    %4221 = vmatpush.bf16.msra.mxu0 %v3610
    %4222 = vmatpush.bf16.msra.mxu0 %v3604
    %4223 = vmatpush.bf16.msra.mxu0 %v3598
    %4224 = vmatpush.bf16.msra.mxu0 %v3592
    %4225 = vmatmul.bf16.gmra.mxu0 %v2372
    %v4226 = vpop.f32.mrf.mxu0
    %v4227 = vadd.f32 %v4213, %v4226
    %v4228 = vpop.f32.mrf.mxu0
    %v4229 = vadd.f32 %v4215, %v4228
    %4230 = vdwg.mxu0
    %4231 = vmatpush.bf16.msra.mxu0 %v3682
    %4232 = vmatpush.bf16.msra.mxu0 %v3676
    %4233 = vmatpush.bf16.msra.mxu0 %v3670
    %4234 = vmatpush.bf16.msra.mxu0 %v3664
    %4235 = vmatpush.bf16.msra.mxu0 %v3658
    %4236 = vmatpush.bf16.msra.mxu0 %v3652
    %4237 = vmatpush.bf16.msra.mxu0 %v3646
    %4238 = vmatpush.bf16.msra.mxu0 %v3640
    %4239 = vmatmul.bf16.gmra.mxu0 %v2373
    %v4240 = vpop.f32.mrf.mxu0
    %v4241 = vadd.f32 %v4227, %v4240
    %v4242 = vpop.f32.mrf.mxu0
    %v4243 = vadd.f32 %v4229, %v4242
    %4244 = vdwg.mxu0
    %4245 = vmatpush.bf16.msra.mxu0 %v3730
    %4246 = vmatpush.bf16.msra.mxu0 %v3724
    %4247 = vmatpush.bf16.msra.mxu0 %v3718
    %4248 = vmatpush.bf16.msra.mxu0 %v3712
    %4249 = vmatpush.bf16.msra.mxu0 %v3706
    %4250 = vmatpush.bf16.msra.mxu0 %v3700
    %4251 = vmatpush.bf16.msra.mxu0 %v3694
    %4252 = vmatpush.bf16.msra.mxu0 %v3688
    %4253 = vmatmul.bf16.gmra.mxu0 %v2374
    %v4254 = vpop.f32.mrf.mxu0
    %v4255 = vadd.f32 %v4241, %v4254
    %v4256 = vpop.f32.mrf.mxu0
    %v4257 = vadd.f32 %v4243, %v4256
    %4258 = vdwg.mxu0
    %4259 = vmatpush.bf16.msra.mxu0 %v3778
    %4260 = vmatpush.bf16.msra.mxu0 %v3772
    %4261 = vmatpush.bf16.msra.mxu0 %v3766
    %4262 = vmatpush.bf16.msra.mxu0 %v3760
    %4263 = vmatpush.bf16.msra.mxu0 %v3754
    %4264 = vmatpush.bf16.msra.mxu0 %v3748
    %4265 = vmatpush.bf16.msra.mxu0 %v3742
    %4266 = vmatpush.bf16.msra.mxu0 %v3736
    %4267 = vmatmul.bf16.gmra.mxu0 %v2375
    %v4268 = vpop.f32.mrf.mxu0
    %v4269 = vadd.f32 %v4255, %v4268
    %v4270 = vpop.f32.mrf.mxu0
    %v4271 = vadd.f32 %v4257, %v4270
    %4272 = vdwg.mxu0
    %4273 = vmatpush.bf16.msra.mxu0 %v3826
    %4274 = vmatpush.bf16.msra.mxu0 %v3820
    %4275 = vmatpush.bf16.msra.mxu0 %v3814
    %4276 = vmatpush.bf16.msra.mxu0 %v3808
    %4277 = vmatpush.bf16.msra.mxu0 %v3802
    %4278 = vmatpush.bf16.msra.mxu0 %v3796
    %4279 = vmatpush.bf16.msra.mxu0 %v3790
    %4280 = vmatpush.bf16.msra.mxu0 %v3784
    %4281 = vmatmul.bf16.gmra.mxu0 %v2376
    %v4282 = vpop.f32.mrf.mxu0
    %v4283 = vadd.f32 %v4269, %v4282
    %v4284 = vpop.f32.mrf.mxu0
    %v4285 = vadd.f32 %v4271, %v4284
    %4286 = vdwg.mxu0
    %4287 = vmatpush.bf16.msra.mxu0 %v3587
    %4288 = vmatpush.bf16.msra.mxu0 %v3581
    %4289 = vmatpush.bf16.msra.mxu0 %v3575
    %4290 = vmatpush.bf16.msra.mxu0 %v3569
    %4291 = vmatpush.bf16.msra.mxu0 %v3563
    %4292 = vmatpush.bf16.msra.mxu0 %v3557
    %4293 = vmatpush.bf16.msra.mxu0 %v3551
    %4294 = vmatpush.bf16.msra.mxu0 %v3545
    %4295 = vmatmul.bf16.gmra.mxu0 %v2371
    %v4296 = vpop.f32.mrf.mxu0
    %v4297 = vadd.f32 %v2669, %v4296
    %v4298 = vpop.f32.mrf.mxu0
    %v4299 = vadd.f32 %v2669, %v4298
    %4300 = vdwg.mxu0
    %4301 = vmatpush.bf16.msra.mxu0 %v3635
    %4302 = vmatpush.bf16.msra.mxu0 %v3629
    %4303 = vmatpush.bf16.msra.mxu0 %v3623
    %4304 = vmatpush.bf16.msra.mxu0 %v3617
    %4305 = vmatpush.bf16.msra.mxu0 %v3611
    %4306 = vmatpush.bf16.msra.mxu0 %v3605
    %4307 = vmatpush.bf16.msra.mxu0 %v3599
    %4308 = vmatpush.bf16.msra.mxu0 %v3593
    %4309 = vmatmul.bf16.gmra.mxu0 %v2372
    %v4310 = vpop.f32.mrf.mxu0
    %v4311 = vadd.f32 %v4297, %v4310
    %v4312 = vpop.f32.mrf.mxu0
    %v4313 = vadd.f32 %v4299, %v4312
    %4314 = vdwg.mxu0
    %4315 = vmatpush.bf16.msra.mxu0 %v3683
    %4316 = vmatpush.bf16.msra.mxu0 %v3677
    %4317 = vmatpush.bf16.msra.mxu0 %v3671
    %4318 = vmatpush.bf16.msra.mxu0 %v3665
    %4319 = vmatpush.bf16.msra.mxu0 %v3659
    %4320 = vmatpush.bf16.msra.mxu0 %v3653
    %4321 = vmatpush.bf16.msra.mxu0 %v3647
    %4322 = vmatpush.bf16.msra.mxu0 %v3641
    %4323 = vmatmul.bf16.gmra.mxu0 %v2373
    %v4324 = vpop.f32.mrf.mxu0
    %v4325 = vadd.f32 %v4311, %v4324
    %v4326 = vpop.f32.mrf.mxu0
    %v4327 = vadd.f32 %v4313, %v4326
    %4328 = vdwg.mxu0
    %4329 = vmatpush.bf16.msra.mxu0 %v3731
    %4330 = vmatpush.bf16.msra.mxu0 %v3725
    %4331 = vmatpush.bf16.msra.mxu0 %v3719
    %4332 = vmatpush.bf16.msra.mxu0 %v3713
    %4333 = vmatpush.bf16.msra.mxu0 %v3707
    %4334 = vmatpush.bf16.msra.mxu0 %v3701
    %4335 = vmatpush.bf16.msra.mxu0 %v3695
    %4336 = vmatpush.bf16.msra.mxu0 %v3689
    %4337 = vmatmul.bf16.gmra.mxu0 %v2374
    %v4338 = vpop.f32.mrf.mxu0
    %v4339 = vadd.f32 %v4325, %v4338
    %v4340 = vpop.f32.mrf.mxu0
    %v4341 = vadd.f32 %v4327, %v4340
    %4342 = vdwg.mxu0
    %4343 = vmatpush.bf16.msra.mxu0 %v3779
    %4344 = vmatpush.bf16.msra.mxu0 %v3773
    %4345 = vmatpush.bf16.msra.mxu0 %v3767
    %4346 = vmatpush.bf16.msra.mxu0 %v3761
    %4347 = vmatpush.bf16.msra.mxu0 %v3755
    %4348 = vmatpush.bf16.msra.mxu0 %v3749
    %4349 = vmatpush.bf16.msra.mxu0 %v3743
    %4350 = vmatpush.bf16.msra.mxu0 %v3737
    %4351 = vmatmul.bf16.gmra.mxu0 %v2375
    %v4352 = vpop.f32.mrf.mxu0
    %v4353 = vadd.f32 %v4339, %v4352
    %v4354 = vpop.f32.mrf.mxu0
    %v4355 = vadd.f32 %v4341, %v4354
    %4356 = vdwg.mxu0
    %4357 = vmatpush.bf16.msra.mxu0 %v3827
    %4358 = vmatpush.bf16.msra.mxu0 %v3821
    %4359 = vmatpush.bf16.msra.mxu0 %v3815
    %4360 = vmatpush.bf16.msra.mxu0 %v3809
    %4361 = vmatpush.bf16.msra.mxu0 %v3803
    %4362 = vmatpush.bf16.msra.mxu0 %v3797
    %4363 = vmatpush.bf16.msra.mxu0 %v3791
    %4364 = vmatpush.bf16.msra.mxu0 %v3785
    %4365 = vmatmul.bf16.gmra.mxu0 %v2376
    %v4366 = vpop.f32.mrf.mxu0
    %v4367 = vadd.f32 %v4353, %v4366
    %v4368 = vpop.f32.mrf.mxu0
    %v4369 = vadd.f32 %v4355, %v4368
    %4370 = vdwg.mxu0
    %4371 = vmatpush.bf16.msra.mxu0 %v3588
    %4372 = vmatpush.bf16.msra.mxu0 %v3582
    %4373 = vmatpush.bf16.msra.mxu0 %v3576
    %4374 = vmatpush.bf16.msra.mxu0 %v3570
    %4375 = vmatpush.bf16.msra.mxu0 %v3564
    %4376 = vmatpush.bf16.msra.mxu0 %v3558
    %4377 = vmatpush.bf16.msra.mxu0 %v3552
    %4378 = vmatpush.bf16.msra.mxu0 %v3546
    %4379 = vmatmul.bf16.gmra.mxu0 %v2371
    %v4380 = vpop.f32.mrf.mxu0
    %v4381 = vadd.f32 %v2670, %v4380
    %v4382 = vpop.f32.mrf.mxu0
    %v4383 = vadd.f32 %v2670, %v4382
    %4384 = vdwg.mxu0
    %4385 = vmatpush.bf16.msra.mxu0 %v3636
    %4386 = vmatpush.bf16.msra.mxu0 %v3630
    %4387 = vmatpush.bf16.msra.mxu0 %v3624
    %4388 = vmatpush.bf16.msra.mxu0 %v3618
    %4389 = vmatpush.bf16.msra.mxu0 %v3612
    %4390 = vmatpush.bf16.msra.mxu0 %v3606
    %4391 = vmatpush.bf16.msra.mxu0 %v3600
    %4392 = vmatpush.bf16.msra.mxu0 %v3594
    %4393 = vmatmul.bf16.gmra.mxu0 %v2372
    %v4394 = vpop.f32.mrf.mxu0
    %v4395 = vadd.f32 %v4381, %v4394
    %v4396 = vpop.f32.mrf.mxu0
    %v4397 = vadd.f32 %v4383, %v4396
    %4398 = vdwg.mxu0
    %4399 = vmatpush.bf16.msra.mxu0 %v3684
    %4400 = vmatpush.bf16.msra.mxu0 %v3678
    %4401 = vmatpush.bf16.msra.mxu0 %v3672
    %4402 = vmatpush.bf16.msra.mxu0 %v3666
    %4403 = vmatpush.bf16.msra.mxu0 %v3660
    %4404 = vmatpush.bf16.msra.mxu0 %v3654
    %4405 = vmatpush.bf16.msra.mxu0 %v3648
    %4406 = vmatpush.bf16.msra.mxu0 %v3642
    %4407 = vmatmul.bf16.gmra.mxu0 %v2373
    %v4408 = vpop.f32.mrf.mxu0
    %v4409 = vadd.f32 %v4395, %v4408
    %v4410 = vpop.f32.mrf.mxu0
    %v4411 = vadd.f32 %v4397, %v4410
    %4412 = vdwg.mxu0
    %4413 = vmatpush.bf16.msra.mxu0 %v3732
    %4414 = vmatpush.bf16.msra.mxu0 %v3726
    %4415 = vmatpush.bf16.msra.mxu0 %v3720
    %4416 = vmatpush.bf16.msra.mxu0 %v3714
    %4417 = vmatpush.bf16.msra.mxu0 %v3708
    %4418 = vmatpush.bf16.msra.mxu0 %v3702
    %4419 = vmatpush.bf16.msra.mxu0 %v3696
    %4420 = vmatpush.bf16.msra.mxu0 %v3690
    %4421 = vmatmul.bf16.gmra.mxu0 %v2374
    %v4422 = vpop.f32.mrf.mxu0
    %v4423 = vadd.f32 %v4409, %v4422
    %v4424 = vpop.f32.mrf.mxu0
    %v4425 = vadd.f32 %v4411, %v4424
    %4426 = vdwg.mxu0
    %4427 = vmatpush.bf16.msra.mxu0 %v3780
    %4428 = vmatpush.bf16.msra.mxu0 %v3774
    %4429 = vmatpush.bf16.msra.mxu0 %v3768
    %4430 = vmatpush.bf16.msra.mxu0 %v3762
    %4431 = vmatpush.bf16.msra.mxu0 %v3756
    %4432 = vmatpush.bf16.msra.mxu0 %v3750
    %4433 = vmatpush.bf16.msra.mxu0 %v3744
    %4434 = vmatpush.bf16.msra.mxu0 %v3738
    %4435 = vmatmul.bf16.gmra.mxu0 %v2375
    %v4436 = vpop.f32.mrf.mxu0
    %v4437 = vadd.f32 %v4423, %v4436
    %v4438 = vpop.f32.mrf.mxu0
    %v4439 = vadd.f32 %v4425, %v4438
    %4440 = vdwg.mxu0
    %4441 = vmatpush.bf16.msra.mxu0 %v3828
    %4442 = vmatpush.bf16.msra.mxu0 %v3822
    %4443 = vmatpush.bf16.msra.mxu0 %v3816
    %4444 = vmatpush.bf16.msra.mxu0 %v3810
    %4445 = vmatpush.bf16.msra.mxu0 %v3804
    %4446 = vmatpush.bf16.msra.mxu0 %v3798
    %4447 = vmatpush.bf16.msra.mxu0 %v3792
    %4448 = vmatpush.bf16.msra.mxu0 %v3786
    %4449 = vmatmul.bf16.gmra.mxu0 %v2376
    %v4450 = vpop.f32.mrf.mxu0
    %v4451 = vadd.f32 %v4437, %v4450
    %v4452 = vpop.f32.mrf.mxu0
    %v4453 = vadd.f32 %v4439, %v4452
    %4454 = vdwg.mxu0
    %4455 = vmatpush.bf16.msra.mxu0 %v3589
    %4456 = vmatpush.bf16.msra.mxu0 %v3583
    %4457 = vmatpush.bf16.msra.mxu0 %v3577
    %4458 = vmatpush.bf16.msra.mxu0 %v3571
    %4459 = vmatpush.bf16.msra.mxu0 %v3565
    %4460 = vmatpush.bf16.msra.mxu0 %v3559
    %4461 = vmatpush.bf16.msra.mxu0 %v3553
    %4462 = vmatpush.bf16.msra.mxu0 %v3547
    %4463 = vmatmul.bf16.gmra.mxu0 %v2371
    %v4464 = vpop.f32.mrf.mxu0
    %v4465 = vadd.f32 %v2671, %v4464
    %v4466 = vpop.f32.mrf.mxu0
    %v4467 = vadd.f32 %v2671, %v4466
    %4468 = vdwg.mxu0
    %4469 = vmatpush.bf16.msra.mxu0 %v3637
    %4470 = vmatpush.bf16.msra.mxu0 %v3631
    %4471 = vmatpush.bf16.msra.mxu0 %v3625
    %4472 = vmatpush.bf16.msra.mxu0 %v3619
    %4473 = vmatpush.bf16.msra.mxu0 %v3613
    %4474 = vmatpush.bf16.msra.mxu0 %v3607
    %4475 = vmatpush.bf16.msra.mxu0 %v3601
    %4476 = vmatpush.bf16.msra.mxu0 %v3595
    %4477 = vmatmul.bf16.gmra.mxu0 %v2372
    %v4478 = vpop.f32.mrf.mxu0
    %v4479 = vadd.f32 %v4465, %v4478
    %v4480 = vpop.f32.mrf.mxu0
    %v4481 = vadd.f32 %v4467, %v4480
    %4482 = vdwg.mxu0
    %4483 = vmatpush.bf16.msra.mxu0 %v3685
    %4484 = vmatpush.bf16.msra.mxu0 %v3679
    %4485 = vmatpush.bf16.msra.mxu0 %v3673
    %4486 = vmatpush.bf16.msra.mxu0 %v3667
    %4487 = vmatpush.bf16.msra.mxu0 %v3661
    %4488 = vmatpush.bf16.msra.mxu0 %v3655
    %4489 = vmatpush.bf16.msra.mxu0 %v3649
    %4490 = vmatpush.bf16.msra.mxu0 %v3643
    %4491 = vmatmul.bf16.gmra.mxu0 %v2373
    %v4492 = vpop.f32.mrf.mxu0
    %v4493 = vadd.f32 %v4479, %v4492
    %v4494 = vpop.f32.mrf.mxu0
    %v4495 = vadd.f32 %v4481, %v4494
    %4496 = vdwg.mxu0
    %4497 = vmatpush.bf16.msra.mxu0 %v3733
    %4498 = vmatpush.bf16.msra.mxu0 %v3727
    %4499 = vmatpush.bf16.msra.mxu0 %v3721
    %4500 = vmatpush.bf16.msra.mxu0 %v3715
    %4501 = vmatpush.bf16.msra.mxu0 %v3709
    %4502 = vmatpush.bf16.msra.mxu0 %v3703
    %4503 = vmatpush.bf16.msra.mxu0 %v3697
    %4504 = vmatpush.bf16.msra.mxu0 %v3691
    %4505 = vmatmul.bf16.gmra.mxu0 %v2374
    %v4506 = vpop.f32.mrf.mxu0
    %v4507 = vadd.f32 %v4493, %v4506
    %v4508 = vpop.f32.mrf.mxu0
    %v4509 = vadd.f32 %v4495, %v4508
    %4510 = vdwg.mxu0
    %4511 = vmatpush.bf16.msra.mxu0 %v3781
    %4512 = vmatpush.bf16.msra.mxu0 %v3775
    %4513 = vmatpush.bf16.msra.mxu0 %v3769
    %4514 = vmatpush.bf16.msra.mxu0 %v3763
    %4515 = vmatpush.bf16.msra.mxu0 %v3757
    %4516 = vmatpush.bf16.msra.mxu0 %v3751
    %4517 = vmatpush.bf16.msra.mxu0 %v3745
    %4518 = vmatpush.bf16.msra.mxu0 %v3739
    %4519 = vmatmul.bf16.gmra.mxu0 %v2375
    %v4520 = vpop.f32.mrf.mxu0
    %v4521 = vadd.f32 %v4507, %v4520
    %v4522 = vpop.f32.mrf.mxu0
    %v4523 = vadd.f32 %v4509, %v4522
    %4524 = vdwg.mxu0
    %4525 = vmatpush.bf16.msra.mxu0 %v3829
    %4526 = vmatpush.bf16.msra.mxu0 %v3823
    %4527 = vmatpush.bf16.msra.mxu0 %v3817
    %4528 = vmatpush.bf16.msra.mxu0 %v3811
    %4529 = vmatpush.bf16.msra.mxu0 %v3805
    %4530 = vmatpush.bf16.msra.mxu0 %v3799
    %4531 = vmatpush.bf16.msra.mxu0 %v3793
    %4532 = vmatpush.bf16.msra.mxu0 %v3787
    %4533 = vmatmul.bf16.gmra.mxu0 %v2376
    %v4534 = vpop.f32.mrf.mxu0
    %v4535 = vadd.f32 %v4521, %v4534
    %v4536 = vpop.f32.mrf.mxu0
    %v4537 = vadd.f32 %v4523, %v4536
    %4538 = vdwg.mxu0
    %4539 = vmatpush.bf16.msra.mxu0 %v3590
    %4540 = vmatpush.bf16.msra.mxu0 %v3584
    %4541 = vmatpush.bf16.msra.mxu0 %v3578
    %4542 = vmatpush.bf16.msra.mxu0 %v3572
    %4543 = vmatpush.bf16.msra.mxu0 %v3566
    %4544 = vmatpush.bf16.msra.mxu0 %v3560
    %4545 = vmatpush.bf16.msra.mxu0 %v3554
    %4546 = vmatpush.bf16.msra.mxu0 %v3548
    %4547 = vmatmul.bf16.gmra.mxu0 %v2371
    %v4548 = vpop.f32.mrf.mxu0
    %v4549 = vadd.f32 %v2672, %v4548
    %v4550 = vpop.f32.mrf.mxu0
    %v4551 = vadd.f32 %v2672, %v4550
    %4552 = vdwg.mxu0
    %4553 = vmatpush.bf16.msra.mxu0 %v3638
    %4554 = vmatpush.bf16.msra.mxu0 %v3632
    %4555 = vmatpush.bf16.msra.mxu0 %v3626
    %4556 = vmatpush.bf16.msra.mxu0 %v3620
    %4557 = vmatpush.bf16.msra.mxu0 %v3614
    %4558 = vmatpush.bf16.msra.mxu0 %v3608
    %4559 = vmatpush.bf16.msra.mxu0 %v3602
    %4560 = vmatpush.bf16.msra.mxu0 %v3596
    %4561 = vmatmul.bf16.gmra.mxu0 %v2372
    %v4562 = vpop.f32.mrf.mxu0
    %v4563 = vadd.f32 %v4549, %v4562
    %v4564 = vpop.f32.mrf.mxu0
    %v4565 = vadd.f32 %v4551, %v4564
    %4566 = vdwg.mxu0
    %4567 = vmatpush.bf16.msra.mxu0 %v3686
    %4568 = vmatpush.bf16.msra.mxu0 %v3680
    %4569 = vmatpush.bf16.msra.mxu0 %v3674
    %4570 = vmatpush.bf16.msra.mxu0 %v3668
    %4571 = vmatpush.bf16.msra.mxu0 %v3662
    %4572 = vmatpush.bf16.msra.mxu0 %v3656
    %4573 = vmatpush.bf16.msra.mxu0 %v3650
    %4574 = vmatpush.bf16.msra.mxu0 %v3644
    %4575 = vmatmul.bf16.gmra.mxu0 %v2373
    %v4576 = vpop.f32.mrf.mxu0
    %v4577 = vadd.f32 %v4563, %v4576
    %v4578 = vpop.f32.mrf.mxu0
    %v4579 = vadd.f32 %v4565, %v4578
    %4580 = vdwg.mxu0
    %4581 = vmatpush.bf16.msra.mxu0 %v3734
    %4582 = vmatpush.bf16.msra.mxu0 %v3728
    %4583 = vmatpush.bf16.msra.mxu0 %v3722
    %4584 = vmatpush.bf16.msra.mxu0 %v3716
    %4585 = vmatpush.bf16.msra.mxu0 %v3710
    %4586 = vmatpush.bf16.msra.mxu0 %v3704
    %4587 = vmatpush.bf16.msra.mxu0 %v3698
    %4588 = vmatpush.bf16.msra.mxu0 %v3692
    %4589 = vmatmul.bf16.gmra.mxu0 %v2374
    %v4590 = vpop.f32.mrf.mxu0
    %v4591 = vadd.f32 %v4577, %v4590
    %v4592 = vpop.f32.mrf.mxu0
    %v4593 = vadd.f32 %v4579, %v4592
    %4594 = vdwg.mxu0
    %4595 = vmatpush.bf16.msra.mxu0 %v3782
    %4596 = vmatpush.bf16.msra.mxu0 %v3776
    %4597 = vmatpush.bf16.msra.mxu0 %v3770
    %4598 = vmatpush.bf16.msra.mxu0 %v3764
    %4599 = vmatpush.bf16.msra.mxu0 %v3758
    %4600 = vmatpush.bf16.msra.mxu0 %v3752
    %4601 = vmatpush.bf16.msra.mxu0 %v3746
    %4602 = vmatpush.bf16.msra.mxu0 %v3740
    %4603 = vmatmul.bf16.gmra.mxu0 %v2375
    %v4604 = vpop.f32.mrf.mxu0
    %v4605 = vadd.f32 %v4591, %v4604
    %v4606 = vpop.f32.mrf.mxu0
    %v4607 = vadd.f32 %v4593, %v4606
    %4608 = vdwg.mxu0
    %4609 = vmatpush.bf16.msra.mxu0 %v3830
    %4610 = vmatpush.bf16.msra.mxu0 %v3824
    %4611 = vmatpush.bf16.msra.mxu0 %v3818
    %4612 = vmatpush.bf16.msra.mxu0 %v3812
    %4613 = vmatpush.bf16.msra.mxu0 %v3806
    %4614 = vmatpush.bf16.msra.mxu0 %v3800
    %4615 = vmatpush.bf16.msra.mxu0 %v3794
    %4616 = vmatpush.bf16.msra.mxu0 %v3788
    %4617 = vmatmul.bf16.gmra.mxu0 %v2376
    %v4618 = vpop.f32.mrf.mxu0
    %v4619 = vadd.f32 %v4605, %v4618
    %v4620 = vpop.f32.mrf.mxu0
    %v4621 = vadd.f32 %v4607, %v4620
    %4622 = vdwg.mxu0
    %v4623 = vpack.c.bf16 %v4283, %v4199
    %v4624 = vpack.c.bf16 %v4451, %v4367
    %v4625 = vpack.c.bf16 %v4619, %v4535
    %v4626 = vpack.c.bf16 %v4285, %v4201
    %v4627 = vpack.c.bf16 %v4453, %v4369
    %v4628 = vpack.c.bf16 %v4621, %v4537
    %4629 = vst [vmem:[#allocation11] sm:$0xff] %v4623
    %4630 = vst [vmem:[#allocation11 + $0x8] sm:$0xff] %v4624
    %4631 = vst [vmem:[#allocation11 + $0x10] sm:$0xff] %v4625
    %4632 = vst [vmem:[#allocation11 + $0x18] sm:$0xff] %v4626
    %4633 = vst [vmem:[#allocation11 + $0x20] sm:$0xff] %v4627
    %4634 = vst [vmem:[#allocation11 + $0x28] sm:$0xff] %v4628
    // Predicated region
    $region42: #{tpu_custom_call.1} parent=1 // pred_check
      _
    $region43: #{tpu_custom_call.1} parent=1 // pred_check_branch
      %4636 = sbr.rel (0) target = $region45
    $region44: #{tpu_custom_call.1} parent=1 // pred_region
      %4638 = vsyncadd [#allocation4], 0
      %s4639 = sshll.u32 [#allocation11], 4
      %s4640 = int_to_ptr.vmem [resolvable:$true] %s4639
      %s4641 = sshll.u32 %s5, 4
      %s4642 = int_to_ptr.hbm [resolvable:$true] %s4641
      %4647 = dma.vmem_to_hbm [thread:$0]  %s4640, 768, %s4642, [#allocation4], 384, 384, 24
    $region45: #{tpu_custom_call.1} parent=1 // pred_fallthru
      _
    // Predicated region
    $region46: #{tpu_custom_call.1} parent=1 // pred_check
      _
    $region47: #{tpu_custom_call.1} parent=1 // pred_check_branch
      %4649 = sbr.rel (0) target = $region49
    $region48: #{tpu_custom_call.1} parent=1 // pred_region
      %4651 = dma.done [#allocation4], 768
    $region49: #{tpu_custom_call.1} parent=1 // pred_fallthru
      _
    %4652 = vsyncpa [#allocation3], 1
    %4653 = vsyncpa [#allocation6], 1
    %4654 = vsyncpa [#allocation9], 1
    %4655 = vsyncpa [#allocation4], 1

</llo_original>
